<compile_context>
chip_gen: v7x
topology: tpu7x:2x2x1
jax: 0.10.0
libtpu: 0.0.40
codegen_flags: <defaults>
</compile_context>

<pallas_src>
import functools

import jax
import jax.numpy as jnp
from jax import lax
from jax.experimental import pallas as pl
from jax.experimental.pallas import tpu as pltpu

F32 = jnp.float32
LANE = 128  # TPU lane width; GLU / classifier column blocks are padded to this


def _round_up(x, m):
    return (x + m - 1) // m * m


# ----------------------------- fused SANet image branch -----------------------------

def _sanet_kernel(x_ref, cwt_ref, cb_ref, clswt_ref, clsb_ref,
                  prob_ref, emb_ref, acc_ref, *, n_sp, tile, inv_n, mask_tail):
    """1x1x1-conv (matmul) + ReLU + global-avg-pool + classifier + softmax.

    grid = (batch, spatial_tiles).  Axis 0 is "parallel" (per-sample), axis 1 is
    "arbitrary" and MUST stay innermost: acc_ref is a per-sample spatial-sum
    accumulator re-initialised at s == 0 and consumed at s == last; reordering the
    grid would carry it across samples.  Input arrives in native NCDHW layout
    flattened to (B, C, N): channels on sublanes, spatial on lanes -> lane-dense
    DMA and vregs, no wrapper-side transpose round trip through HBM.
    """
    s = pl.program_id(1)

    @pl.when(s == 0)
    def _init():
        acc_ref[...] = jnp.zeros_like(acc_ref)

    xb = x_ref[0]                                                     # (C, tile)
    y = jnp.dot(cwt_ref[...], xb, preferred_element_type=jnp.float32) + cb_ref[...]
    y = jnp.maximum(y, 0.0)                                           # (hidden, tile)
    if mask_tail:
        # partial last spatial tile: zero lanes past the valid extent
        lane = lax.broadcasted_iota(jnp.int32, y.shape, 1)
        y = jnp.where(lane < (n_sp - s * tile), y, 0.0)
    acc_ref[...] += jnp.sum(y, axis=1, keepdims=True)                 # (hidden, 1)

    @pl.when(s == pl.num_programs(1) - 1)
    def _finalize():
        emb = acc_ref[...] * inv_n                                    # (hidden, 1) mean pool
        logits = jnp.dot(clswt_ref[...], emb,
                         preferred_element_type=jnp.float32) + clsb_ref[...]   # (nc, 1)
        mx = jnp.max(logits, axis=0, keepdims=True)
        e = jnp.exp(logits - mx)
        prob = e / jnp.sum(e, axis=0, keepdims=True)   # exact: feeds the fusion TabNet
        prob_ref[0] = prob.astype(prob_ref.dtype)
        emb_ref[0] = emb.astype(emb_ref.dtype)


def sanet_forward(params, img, *, tile_sp=512):
    # img: (B, C, T, H, W) NCDHW; spatial dims are contiguous so (B, C, N) is a free
    # reshape and the kernel consumes that layout directly.
    b, c, t, h, w = img.shape
    n = t * h * w
    x = img.reshape(b, c, n)
    hidden = params["conv_Wt"].shape[0]
    nc = params["cls_Wt"].shape[0]

    tile = min(tile_sp, _round_up(n, LANE))          # lane-aligned spatial tile
    n_tiles = pl.cdiv(n, tile)
    mask_tail = (n % tile) != 0                      # partial last tile masked in-kernel

    kernel = functools.partial(_sanet_kernel, n_sp=n, tile=tile, inv_n=1.0 / n,
                               mask_tail=mask_tail)
    prob, emb = pl.pallas_call(
        kernel,
        out_shape=(jax.ShapeDtypeStruct((b, nc, 1), F32),
                   jax.ShapeDtypeStruct((b, hidden, 1), F32)),
        grid=(b, n_tiles),
        in_specs=[
            pl.BlockSpec((1, c, tile), lambda bi, s: (bi, 0, s)),
            pl.BlockSpec((hidden, c), lambda bi, s: (0, 0)),
            pl.BlockSpec((hidden, 1), lambda bi, s: (0, 0)),
            pl.BlockSpec((nc, hidden), lambda bi, s: (0, 0)),
            pl.BlockSpec((nc, 1), lambda bi, s: (0, 0)),
        ],
        out_specs=(pl.BlockSpec((1, nc, 1), lambda bi, s: (bi, 0, 0)),
                   pl.BlockSpec((1, hidden, 1), lambda bi, s: (bi, 0, 0))),
        scratch_shapes=[pltpu.VMEM((hidden, 1), F32)],
        compiler_params=pltpu.CompilerParams(
            dimension_semantics=("parallel", "arbitrary")),
    )(x, params["conv_Wt"], params["conv_b"], params["cls_Wt"], params["cls_b"])
    # trailing size-1 reshapes are metadata-only (no HBM traffic)
    return prob.reshape(b, nc), emb.reshape(b, hidden)


# ----------------------------- fused TabNet (all steps, one kernel) ------------------

def _tabnet_kernel(x_ref, wglu_ref, bglu_ref, attw_ref, attb_ref, finw_ref, finb_ref,
                   logits_ref, ent_ref, emb_ref,
                   *, gamma, n_steps, epsilon, softmax_out, out_dim):
    """Whole TabNet forward (all decision steps) in one grid invocation per batch tile.

    Step loop is an unrolled in-kernel fori_loop; GLU value/gate x d/a matmuls are
    fused into a single MXU push over a [vd|va|gd|ga] column-packed weight whose
    blocks are 128-lane padded (padded lanes stay exactly zero through the network).
    """
    P = wglu_ref.shape[-1] // 4                       # 128-lane padded block width
    x = x_ref[...]                                    # (bt, D)
    bt = x.shape[0]

    def glu(i, xm):
        h = jnp.dot(xm, wglu_ref[i], preferred_element_type=jnp.float32) + bglu_ref[i]
        zd, za = h[:, 0:P], h[:, P:2 * P]             # lane-aligned static splits
        gd, ga = h[:, 2 * P:3 * P], h[:, 3 * P:4 * P]
        return zd * jax.nn.sigmoid(gd), za * jax.nn.sigmoid(ga)   # (bt, P) d / a halves

    _, a0 = glu(0, x)                                 # initial splitter (mask == 1)
    carry0 = (jnp.ones_like(x),                       # prior             (bt, D)
              a0,                                     # attention feats   (bt, P)
              jnp.zeros((bt, P), jnp.float32),        # ReLU(d) accum     (bt, P)
              jnp.zeros((bt, 1), jnp.float32))        # per-row entropy   (bt, 1)

    def step(i, carry):
        prior, a_feat, dacc, ent = carry
        # attentive transformer (softmax stand-in for sparsemax/entmax)
        att = jnp.dot(a_feat, attw_ref[i],
                      preferred_element_type=jnp.float32) + attb_ref[i]   # (bt, D)
        att = att * prior
        mx = jnp.max(att, axis=-1, keepdims=True)
        e = jnp.exp(att - mx)
        mask = e * pl.reciprocal(jnp.sum(e, axis=-1, keepdims=True), approx=True)
        ent = ent + jnp.sum(-mask * jnp.log(mask + epsilon), axis=-1, keepdims=True)
        prior = prior * (gamma - mask)
        d_part, a_part = glu(i + 1, x * mask)
        dacc = dacc + jnp.maximum(d_part, 0.0)
        return prior, a_part, dacc, ent

    _, _, dacc, ent = lax.fori_loop(0, n_steps, step, carry0, unroll=True)

    logits = jnp.dot(dacc, finw_ref[...], preferred_element_type=jnp.float32) + finb_ref[...]
    if softmax_out:
        lane = lax.broadcasted_iota(jnp.int32, logits.shape, 1)
        valid = lane < out_dim
        mx = jnp.max(jnp.where(valid, logits, -1e30), axis=-1, keepdims=True)
        e = jnp.where(valid, jnp.exp(logits - mx), 0.0)
        logits = e / jnp.sum(e, axis=-1, keepdims=True)   # exact: probability path
    logits_ref[...] = logits.astype(logits_ref.dtype)
    ent_ref[...] = ent.astype(ent_ref.dtype)
    emb_ref[...] = dacc.astype(emb_ref.dtype)


def tabnet_forward(params, x, *, n_d, out_dim, n_steps, gamma, epsilon=1e-15,
                   softmax_out=False):
    # x: (B, input_dim) -> (logits_or_prob, M_loss, embedding); one fused kernel.
    b, d = x.shape
    P = params["Wglu"].shape[-1] // 4
    P_out = params["finW"].shape[-1]

    # Batch-tile grid axis, "parallel" => megacore-shardable on v7x (single tile at
    # toy sizes; 128-row tiles when the batch allows it).
    bt = 128 if (b % 128 == 0) else b
    n_bt = b // bt

    full = lambda arr: pl.BlockSpec(arr.shape, lambda bi, _n=arr.ndim: (0,) * _n)
    kernel = functools.partial(_tabnet_kernel, gamma=gamma, n_steps=n_steps,
                               epsilon=epsilon, softmax_out=softmax_out, out_dim=out_dim)
    logits_pad, ent, emb_pad = pl.pallas_call(
        kernel,
        out_shape=(jax.ShapeDtypeStruct((b, P_out), F32),
                   jax.ShapeDtypeStruct((b, 1), F32),
                   jax.ShapeDtypeStruct((b, P), F32)),
        grid=(n_bt,),
        in_specs=[
            pl.BlockSpec((bt, d), lambda bi: (bi, 0)),
            full(params["Wglu"]), full(params["bglu"]),
            full(params["attW"]), full(params["attb"]),
            full(params["finW"]), full(params["finb"]),
        ],
        out_specs=(pl.BlockSpec((bt, P_out), lambda bi: (bi, 0)),
                   pl.BlockSpec((bt, 1), lambda bi: (bi, 0)),
                   pl.BlockSpec((bt, P), lambda bi: (bi, 0))),
        compiler_params=pltpu.CompilerParams(dimension_semantics=("parallel",)),
    )(x, params["Wglu"], params["bglu"], params["attW"], params["attb"],
      params["finW"], params["finb"])

    m_loss = jnp.mean(ent) / n_steps                 # mean over batch, averaged over steps
    return logits_pad[:, :out_dim], m_loss, emb_pad[:, :n_d]


# ----------------------------- parameter init -----------------------------

def _glorot(key, shape):
    fan_in, fan_out = shape
    lim = (6.0 / (fan_in + fan_out)) ** 0.5
    return jax.random.uniform(key, shape, F32, -lim, lim)


def init_sanet(key, in_channels, hidden, num_classes):
    k1, k2 = jax.random.split(key)
    return {
        "conv_Wt": _glorot(k1, (in_channels, hidden)).T,   # stored (hidden, C)
        "conv_b": jnp.zeros((hidden, 1), F32),
        "cls_Wt": _glorot(k2, (hidden, num_classes)).T,    # stored (nc, hidden)
        "cls_b": jnp.zeros((num_classes, 1), F32),
    }


def init_tabnet(key, input_dim, output_dim, n_d, n_a, n_steps):
    assert max(n_d, n_a, output_dim) <= LANE
    h = n_d + n_a
    keys = jax.random.split(key, 2 * n_steps + 2)
    pad_c = lambda w: jnp.pad(w, ((0, 0), (0, LANE - w.shape[1])))
    wglu = []
    for i in range(n_steps + 1):
        w = _glorot(keys[i], (input_dim, 2 * h))       # same init as a fused GLU weight
        wvd, wva = w[:, :n_d], w[:, n_d:h]
        wgd, wga = w[:, h:h + n_d], w[:, h + n_d:]
        # pack [vd | va | gd | ga], each zero-padded to a 128-lane block
        wglu.append(jnp.concatenate([pad_c(wvd), pad_c(wva), pad_c(wgd), pad_c(wga)], 1))
    attw = [jnp.pad(_glorot(keys[n_steps + 1 + i], (n_a, input_dim)),
                    ((0, LANE - n_a), (0, 0)))
            for i in range(n_steps)]
    finw = jnp.pad(_glorot(keys[-1], (n_d, output_dim)),
                   ((0, LANE - n_d), (0, LANE - output_dim)))
    return {
        "Wglu": jnp.stack(wglu),                       # (n_steps+1, D, 4*128)
        "bglu": jnp.zeros((n_steps + 1, 1, 4 * LANE), F32),
        "attW": jnp.stack(attw),                       # (n_steps, 128, D)
        "attb": jnp.zeros((n_steps, 1, input_dim), F32),
        "finW": finw,                                  # (128, 128)
        "finb": jnp.zeros((1, LANE), F32),
    }


# ----------------------------- LateFusionModel -----------------------------

NUM_TAB_FEATURES = 16


def init_late_fusion(key, *, input_dim, output_dim, num_classes, img_channels,
                     img_hidden, n_d=8, n_a=8, n_steps=3):
    k1, k2, k3 = jax.random.split(key, 3)
    return {
        "img_prob": init_sanet(k1, img_channels, img_hidden, num_classes),
        "tab_prob": init_tabnet(k2, NUM_TAB_FEATURES, num_classes, n_d=64, n_a=2, n_steps=3),
        "tabnet_emb": init_tabnet(k3, input_dim, output_dim, n_d=n_d, n_a=n_a, n_steps=n_steps),
    }


def late_fusion_forward(params, img, ehr, *, num_classes=2, output_dim=2,
                        gamma=1.3, n_d=8, n_steps=3):
    # 1. per-modality prediction probabilities (softmax fused into each branch kernel)
    i_prob, _i_emb = sanet_forward(params["img_prob"], img)
    e_prob, _e_mloss, _e_emb = tabnet_forward(
        params["tab_prob"], ehr, n_d=64, out_dim=num_classes,
        n_steps=3, gamma=0.8, softmax_out=True)
    # 2. late fusion: reference does torch.cat((i_prob, e_prob), 0) -> batch-axis concat
    att = jnp.concatenate([i_prob, e_prob], axis=0)
    return tabnet_forward(params["tabnet_emb"], att, n_d=n_d, out_dim=output_dim,
                          n_steps=n_steps, gamma=gamma)


# ----------------------------- main -----------------------------

if __name__ == "__main__":
    key = jax.random.PRNGKey(0)
    k_params, k_img, k_ehr = jax.random.split(key, 3)

    # small, consistent shapes
    B = 2
    num_classes = 2
    input_dim = num_classes          # fusion TabNet consumes the concatenated probs
    output_dim = 2
    C, T, H, W = 4, 4, 8, 8          # image: (B, C, T, H, W), PyTorch NCDHW

    params = init_late_fusion(
        k_params, input_dim=input_dim, output_dim=output_dim,
        num_classes=num_classes, img_channels=C, img_hidden=16)

    img = jax.random.normal(k_img, (B, C, T, H, W), F32)
    ehr = jax.random.normal(k_ehr, (B, NUM_TAB_FEATURES), F32)

    fwd = jax.jit(lambda p, im, eh: late_fusion_forward(
        p, im, eh, num_classes=num_classes, output_dim=output_dim))
    logits, m_loss, emb = fwd(params, img, ehr)
    jax.block_until_ready((logits, m_loss, emb))

    assert logits.shape == (2 * B, output_dim)
    assert emb.shape == (2 * B, 8)
    assert m_loss.shape == ()
    print("KERNEL_OK")
</pallas_src>

<mosaic_0001>
module attributes {stable_mosaic.version = 11 : i64} {
  func.func @_sanet_kernel(%arg0: i32, %arg1: i32, %arg2: memref<1x4x256xf32, #tpu.memory_space<vmem>>, %arg3: memref<16x4xf32, #tpu.memory_space<vmem>>, %arg4: memref<16x1xf32, #tpu.memory_space<vmem>>, %arg5: memref<2x16xf32, #tpu.memory_space<vmem>>, %arg6: memref<2x1xf32, #tpu.memory_space<vmem>>, %arg7: memref<1x2x1xf32, #tpu.memory_space<vmem>>, %arg8: memref<1x16x1xf32, #tpu.memory_space<vmem>>, %arg9: memref<16x1xf32, #tpu.memory_space<vmem>>) attributes {dimension_semantics = [#tpu.dimension_semantics<parallel>, #tpu.dimension_semantics<arbitrary>], iteration_bounds = array<i64: 2, 1>, scalar_prefetch = 0 : i64, scratch_operands = 1 : i64, tpu.core_type = #tpu.core_type<tc>, window_params = [{transform_indices = @transform_0, window_bounds = array<i64: 1, 4, 256>}, {pipeline_mode = #tpu.pipeline_mode<synchronous>, transform_indices = @transform_1, window_bounds = array<i64: 16, 4>}, {pipeline_mode = #tpu.pipeline_mode<synchronous>, transform_indices = @transform_2, window_bounds = array<i64: 16, 1>}, {pipeline_mode = #tpu.pipeline_mode<synchronous>, transform_indices = @transform_3, window_bounds = array<i64: 2, 16>}, {pipeline_mode = #tpu.pipeline_mode<synchronous>, transform_indices = @transform_4, window_bounds = array<i64: 2, 1>}, {transform_indices = @transform_5, window_bounds = array<i64: 1, 2, 1>}, {transform_indices = @transform_6, window_bounds = array<i64: 1, 16, 1>}]} {
    %c0_i32 = arith.constant 0 : i32
    %0 = arith.cmpi eq, %arg1, %c0_i32 : i32
    %1 = arith.extui %0 : i1 to i32
    %c0_i32_0 = arith.constant 0 : i32
    %2 = arith.cmpi ne, %1, %c0_i32_0 : i32
    scf.if %2 {
      %cst_15 = arith.constant 0.000000e+00 : f32
      %20 = vector.broadcast %cst_15 : f32 to vector<16x1xf32>
      %c0_16 = arith.constant 0 : index
      %c0_17 = arith.constant 0 : index
      %21 = vector.load %arg9[%c0_16, %c0_17] : memref<16x1xf32, #tpu.memory_space<vmem>>, vector<16x1xf32>
      tpu.vector_store %arg9[%c0_16, %c0_17], %20 {strides = array<i32>} : memref<16x1xf32, #tpu.memory_space<vmem>>, vector<16x1xf32>,
    } else {
    }
    %c0 = arith.constant 0 : index
    %c0_1 = arith.constant 0 : index
    %c0_2 = arith.constant 0 : index
    %3 = vector.load %arg2[%c0, %c0_1, %c0_2] : memref<1x4x256xf32, #tpu.memory_space<vmem>>, vector<1x4x256xf32>
    %4 = vector.shape_cast %3 : vector<1x4x256xf32> to vector<4x256xf32>
    %c0_3 = arith.constant 0 : index
    %c0_4 = arith.constant 0 : index
    %5 = vector.load %arg3[%c0_3, %c0_4] : memref<16x4xf32, #tpu.memory_space<vmem>>, vector<16x4xf32>
    %cst = arith.constant dense<0.000000e+00> : vector<16x256xf32>
    %6 = tpu.matmul %5, %4, %cst {dimension_numbers = #tpu.dot_dimension_numbers<[1], [0], [0], [1], [0, 0, 1, 1], [], []>} : vector<16x4xf32>, vector<4x256xf32>, vector<16x256xf32> -> vector<16x256xf32>
    %c0_5 = arith.constant 0 : index
    %c0_6 = arith.constant 0 : index
    %7 = vector.load %arg4[%c0_5, %c0_6] : memref<16x1xf32, #tpu.memory_space<vmem>>, vector<16x1xf32>
    %8 = vector.broadcast %7 : vector<16x1xf32> to vector<16x256xf32>
    %9 = arith.addf %6, %8 : vector<16x256xf32>
    %cst_7 = arith.constant 0.000000e+00 : f32
    %10 = vector.broadcast %cst_7 : f32 to vector<16x256xf32>
    %11 = arith.maximumf %9, %10 : vector<16x256xf32>
    %c0_8 = arith.constant 0 : index
    %c0_9 = arith.constant 0 : index
    %12 = vector.load %arg9[%c0_8, %c0_9] : memref<16x1xf32, #tpu.memory_space<vmem>>, vector<16x1xf32>
    %cst_10 = arith.constant dense<0.000000e+00> : vector<16xf32>
    %13 = vector.multi_reduction <add>, %11, %cst_10 [1] : vector<16x256xf32> to vector<16xf32>
    %14 = vector.shape_cast %13 : vector<16xf32> to vector<16x1xf32>
    %15 = arith.addf %12, %14 : vector<16x1xf32>
    %c0_11 = arith.constant 0 : index
    %c0_12 = arith.constant 0 : index
    %16 = vector.load %arg9[%c0_11, %c0_12] : memref<16x1xf32, #tpu.memory_space<vmem>>, vector<16x1xf32>
    tpu.vector_store %arg9[%c0_11, %c0_12], %15 {strides = array<i32>} : memref<16x1xf32, #tpu.memory_space<vmem>>, vector<16x1xf32>,
    %c0_i32_13 = arith.constant 0 : i32
    %17 = arith.cmpi eq, %arg1, %c0_i32_13 : i32
    %18 = arith.extui %17 : i1 to i32
    %c0_i32_14 = arith.constant 0 : i32
    %19 = arith.cmpi ne, %18, %c0_i32_14 : i32
    scf.if %19 {
      %c0_15 = arith.constant 0 : index
      %c0_16 = arith.constant 0 : index
      %20 = vector.load %arg9[%c0_15, %c0_16] : memref<16x1xf32, #tpu.memory_space<vmem>>, vector<16x1xf32>
      %cst_17 = arith.constant 3.906250e-03 : f32
      %21 = vector.broadcast %cst_17 : f32 to vector<16x1xf32>
      %22 = arith.mulf %20, %21 : vector<16x1xf32>
      %c0_18 = arith.constant 0 : index
      %c0_19 = arith.constant 0 : index
      %23 = vector.load %arg5[%c0_18, %c0_19] : memref<2x16xf32, #tpu.memory_space<vmem>>, vector<2x16xf32>
      %cst_20 = arith.constant dense<0.000000e+00> : vector<2x1xf32>
      %24 = tpu.matmul %23, %22, %cst_20 {dimension_numbers = #tpu.dot_dimension_numbers<[1], [0], [0], [1], [0, 0, 1, 1], [], []>} : vector<2x16xf32>, vector<16x1xf32>, vector<2x1xf32> -> vector<2x1xf32>
      %c0_21 = arith.constant 0 : index
      %c0_22 = arith.constant 0 : index
      %25 = vector.load %arg6[%c0_21, %c0_22] : memref<2x1xf32, #tpu.memory_space<vmem>>, vector<2x1xf32>
      %26 = arith.addf %24, %25 : vector<2x1xf32>
      %cst_23 = arith.constant dense<0xFF800000> : vector<1xf32>
      %27 = vector.multi_reduction <maximumf>, %26, %cst_23 [0] : vector<2x1xf32> to vector<1xf32>
      %28 = vector.shape_cast %27 : vector<1xf32> to vector<1x1xf32>
      %29 = vector.broadcast %28 : vector<1x1xf32> to vector<2x1xf32>
      %30 = arith.subf %26, %29 : vector<2x1xf32>
      %31 = math.exp %30 : vector<2x1xf32>
      %cst_24 = arith.constant dense<0.000000e+00> : vector<1xf32>
      %32 = vector.multi_reduction <add>, %31, %cst_24 [0] : vector<2x1xf32> to vector<1xf32>
      %33 = vector.shape_cast %32 : vector<1xf32> to vector<1x1xf32>
      %34 = vector.broadcast %33 : vector<1x1xf32> to vector<2x1xf32>
      %35 = arith.divf %31, %34 : vector<2x1xf32>
      %c0_25 = arith.constant 0 : index
      %c0_26 = arith.constant 0 : index
      %c0_27 = arith.constant 0 : index
      %36 = vector.load %arg7[%c0_25, %c0_26, %c0_27] : memref<1x2x1xf32, #tpu.memory_space<vmem>>, vector<1x2x1xf32>
      %37 = vector.shape_cast %36 : vector<1x2x1xf32> to vector<2x1xf32>
      %38 = vector.shape_cast %35 : vector<2x1xf32> to vector<1x2x1xf32>
      tpu.vector_store %arg7[%c0_25, %c0_26, %c0_27], %38 {strides = array<i32>} : memref<1x2x1xf32, #tpu.memory_space<vmem>>, vector<1x2x1xf32>,
      %c0_28 = arith.constant 0 : index
      %c0_29 = arith.constant 0 : index
      %c0_30 = arith.constant 0 : index
      %39 = vector.load %arg8[%c0_28, %c0_29, %c0_30] : memref<1x16x1xf32, #tpu.memory_space<vmem>>, vector<1x16x1xf32>
      %40 = vector.shape_cast %39 : vector<1x16x1xf32> to vector<16x1xf32>
      %41 = vector.shape_cast %22 : vector<16x1xf32> to vector<1x16x1xf32>
      tpu.vector_store %arg8[%c0_28, %c0_29, %c0_30], %41 {strides = array<i32>} : memref<1x16x1xf32, #tpu.memory_space<vmem>>, vector<1x16x1xf32>,
    } else {
    }
    return
  }
  func.func @transform_0(%arg0: i32, %arg1: i32) -> (i32, i32, i32) {
    %c0_i32 = arith.constant 0 : i32
    %c0_i32_0 = arith.constant 0 : i32
    return %arg0, %c0_i32, %arg1 : i32, i32, i32
  }
  func.func @transform_1(%arg0: i32, %arg1: i32) -> (i32, i32) {
    %c0_i32 = arith.constant 0 : i32
    %c0_i32_0 = arith.constant 0 : i32
    %c0_i32_1 = arith.constant 0 : i32
    return %c0_i32, %c0_i32_0 : i32, i32
  }
  func.func @transform_2(%arg0: i32, %arg1: i32) -> (i32, i32) {
    %c0_i32 = arith.constant 0 : i32
    %c0_i32_0 = arith.constant 0 : i32
    %c0_i32_1 = arith.constant 0 : i32
    return %c0_i32, %c0_i32_0 : i32, i32
  }
  func.func @transform_3(%arg0: i32, %arg1: i32) -> (i32, i32) {
    %c0_i32 = arith.constant 0 : i32
    %c0_i32_0 = arith.constant 0 : i32
    %c0_i32_1 = arith.constant 0 : i32
    return %c0_i32, %c0_i32_0 : i32, i32
  }
  func.func @transform_4(%arg0: i32, %arg1: i32) -> (i32, i32) {
    %c0_i32 = arith.constant 0 : i32
    %c0_i32_0 = arith.constant 0 : i32
    %c0_i32_1 = arith.constant 0 : i32
    return %c0_i32, %c0_i32_0 : i32, i32
  }
  func.func @transform_5(%arg0: i32, %arg1: i32) -> (i32, i32, i32) {
    %c0_i32 = arith.constant 0 : i32
    %c0_i32_0 = arith.constant 0 : i32
    %c0_i32_1 = arith.constant 0 : i32
    return %arg0, %c0_i32, %c0_i32_0 : i32, i32, i32
  }
  func.func @transform_6(%arg0: i32, %arg1: i32) -> (i32, i32, i32) {
    %c0_i32 = arith.constant 0 : i32
    %c0_i32_0 = arith.constant 0 : i32
    %c0_i32_1 = arith.constant 0 : i32
    return %arg0, %c0_i32, %c0_i32_0 : i32, i32, i32
  }
}

module attributes {stable_mosaic.version = 11 : i64} {
  func.func @_tabnet_kernel(%arg0: i32, %arg1: memref<2x16xf32, #tpu.memory_space<vmem>>, %arg2: memref<4x16x512xf32, #tpu.memory_space<vmem>>, %arg3: memref<4x1x512xf32, #tpu.memory_space<vmem>>, %arg4: memref<3x128x16xf32, #tpu.memory_space<vmem>>, %arg5: memref<3x1x16xf32, #tpu.memory_space<vmem>>, %arg6: memref<128x128xf32, #tpu.memory_space<vmem>>, %arg7: memref<1x128xf32, #tpu.memory_space<vmem>>, %arg8: memref<2x128xf32, #tpu.memory_space<vmem>>, %arg9: memref<2x1xf32, #tpu.memory_space<vmem>>, %arg10: memref<2x128xf32, #tpu.memory_space<vmem>>) attributes {dimension_semantics = [#tpu.dimension_semantics<parallel>], iteration_bounds = array<i64: 1>, scalar_prefetch = 0 : i64, scratch_operands = 0 : i64, tpu.core_type = #tpu.core_type<tc>, window_params = [{transform_indices = @transform_0, window_bounds = array<i64: 2, 16>}, {pipeline_mode = #tpu.pipeline_mode<synchronous>, transform_indices = @transform_1, window_bounds = array<i64: 4, 16, 512>}, {pipeline_mode = #tpu.pipeline_mode<synchronous>, transform_indices = @transform_2, window_bounds = array<i64: 4, 1, 512>}, {pipeline_mode = #tpu.pipeline_mode<synchronous>, transform_indices = @transform_3, window_bounds = array<i64: 3, 128, 16>}, {pipeline_mode = #tpu.pipeline_mode<synchronous>, transform_indices = @transform_4, window_bounds = array<i64: 3, 1, 16>}, {pipeline_mode = #tpu.pipeline_mode<synchronous>, transform_indices = @transform_5, window_bounds = array<i64: 128, 128>}, {pipeline_mode = #tpu.pipeline_mode<synchronous>, transform_indices = @transform_6, window_bounds = array<i64: 1, 128>}, {transform_indices = @transform_7, window_bounds = array<i64: 2, 128>}, {transform_indices = @transform_8, window_bounds = array<i64: 2, 1>}, {transform_indices = @transform_9, window_bounds = array<i64: 2, 128>}]} {
    %c0 = arith.constant 0 : index
    %c0_0 = arith.constant 0 : index
    %0 = vector.load %arg1[%c0, %c0_0] : memref<2x16xf32, #tpu.memory_space<vmem>>, vector<2x16xf32>
    %c0_1 = arith.constant 0 : index
    %c0_2 = arith.constant 0 : index
    %c0_3 = arith.constant 0 : index
    %1 = vector.load %arg2[%c0_1, %c0_2, %c0_3] : memref<4x16x512xf32, #tpu.memory_space<vmem>>, vector<1x16x512xf32>
    %2 = vector.shape_cast %1 : vector<1x16x512xf32> to vector<16x512xf32>
    %cst = arith.constant dense<0.000000e+00> : vector<2x512xf32>
    %3 = tpu.matmul %0, %2, %cst {dimension_numbers = #tpu.dot_dimension_numbers<[1], [0], [0], [1], [0, 0, 1, 1], [], []>} : vector<2x16xf32>, vector<16x512xf32>, vector<2x512xf32> -> vector<2x512xf32>
    %c0_4 = arith.constant 0 : index
    %c0_5 = arith.constant 0 : index
    %c0_6 = arith.constant 0 : index
    %4 = vector.load %arg3[%c0_4, %c0_5, %c0_6] : memref<4x1x512xf32, #tpu.memory_space<vmem>>, vector<1x1x512xf32>
    %5 = vector.shape_cast %4 : vector<1x1x512xf32> to vector<1x512xf32>
    %6 = vector.broadcast %5 : vector<1x512xf32> to vector<2x512xf32>
    %7 = arith.addf %3, %6 : vector<2x512xf32>
    %8 = vector.extract_strided_slice %7 {offsets = [0, 128], sizes = [2, 128], strides = [1, 1]} : vector<2x512xf32> to vector<2x128xf32>
    %9 = vector.extract_strided_slice %7 {offsets = [0, 384], sizes = [2, 128], strides = [1, 1]} : vector<2x512xf32> to vector<2x128xf32>
    %10 = arith.negf %9 : vector<2x128xf32>
    %11 = math.exp %10 : vector<2x128xf32>
    %cst_7 = arith.constant 1.000000e+00 : f32
    %12 = vector.broadcast %cst_7 : f32 to vector<2x128xf32>
    %13 = arith.addf %12, %11 : vector<2x128xf32>
    %14 = arith.divf %12, %13 : vector<2x128xf32>
    %15 = arith.mulf %8, %14 : vector<2x128xf32>
    %cst_8 = arith.constant 1.000000e+00 : f32
    %16 = vector.broadcast %cst_8 : f32 to vector<2x16xf32>
    %cst_9 = arith.constant 0.000000e+00 : f32
    %17 = vector.broadcast %cst_9 : f32 to vector<2x128xf32>
    %cst_10 = arith.constant 0.000000e+00 : f32
    %18 = vector.broadcast %cst_10 : f32 to vector<2x1xf32>
    %c0_i32 = arith.constant 0 : i32
    %19 = arith.index_cast %c0_i32 : i32 to index
    %c0_11 = arith.constant 0 : index
    %c0_12 = arith.constant 0 : index
    %20 = vector.load %arg4[%19, %c0_11, %c0_12] : memref<3x128x16xf32, #tpu.memory_space<vmem>>, vector<1x128x16xf32>
    %21 = vector.shape_cast %20 : vector<1x128x16xf32> to vector<128x16xf32>
    %cst_13 = arith.constant dense<0.000000e+00> : vector<2x16xf32>
    %22 = tpu.matmul %15, %21, %cst_13 {dimension_numbers = #tpu.dot_dimension_numbers<[1], [0], [0], [1], [0, 0, 1, 1], [], []>} : vector<2x128xf32>, vector<128x16xf32>, vector<2x16xf32> -> vector<2x16xf32>
    %23 = arith.index_cast %c0_i32 : i32 to index
    %c0_14 = arith.constant 0 : index
    %c0_15 = arith.constant 0 : index
    %24 = vector.load %arg5[%23, %c0_14, %c0_15] : memref<3x1x16xf32, #tpu.memory_space<vmem>>, vector<1x1x16xf32>
    %25 = vector.shape_cast %24 : vector<1x1x16xf32> to vector<1x16xf32>
    %26 = vector.broadcast %25 : vector<1x16xf32> to vector<2x16xf32>
    %27 = arith.addf %22, %26 : vector<2x16xf32>
    %28 = arith.mulf %27, %16 : vector<2x16xf32>
    %cst_16 = arith.constant dense<0xFF800000> : vector<2xf32>
    %29 = vector.multi_reduction <maximumf>, %28, %cst_16 [1] : vector<2x16xf32> to vector<2xf32>
    %30 = vector.shape_cast %29 : vector<2xf32> to vector<2x1xf32>
    %31 = vector.broadcast %30 : vector<2x1xf32> to vector<2x16xf32>
    %32 = arith.subf %28, %31 : vector<2x16xf32>
    %33 = math.exp %32 : vector<2x16xf32>
    %cst_17 = arith.constant dense<0.000000e+00> : vector<2xf32>
    %34 = vector.multi_reduction <add>, %33, %cst_17 [1] : vector<2x16xf32> to vector<2xf32>
    %35 = vector.shape_cast %34 : vector<2xf32> to vector<2x1xf32>
    %36 = tpu.reciprocal %35 {approx = true} : vector<2x1xf32> -> vector<2x1xf32>
    %37 = vector.broadcast %36 : vector<2x1xf32> to vector<2x16xf32>
    %38 = arith.mulf %33, %37 : vector<2x16xf32>
    %cst_18 = arith.constant 0.000000e+00 : f32
    %39 = vector.broadcast %cst_18 : f32 to vector<2x16xf32>
    %40 = arith.subf %39, %38 : vector<2x16xf32>
    %cst_19 = arith.constant 1.000000e-15 : f32
    %41 = vector.broadcast %cst_19 : f32 to vector<2x16xf32>
    %42 = arith.addf %38, %41 : vector<2x16xf32>
    %43 = math.log %42 : vector<2x16xf32>
    %44 = arith.mulf %40, %43 : vector<2x16xf32>
    %cst_20 = arith.constant dense<0.000000e+00> : vector<2xf32>
    %45 = vector.multi_reduction <add>, %44, %cst_20 [1] : vector<2x16xf32> to vector<2xf32>
    %46 = vector.shape_cast %45 : vector<2xf32> to vector<2x1xf32>
    %47 = arith.addf %18, %46 : vector<2x1xf32>
    %cst_21 = arith.constant 8.000000e-01 : f32
    %48 = vector.broadcast %cst_21 : f32 to vector<2x16xf32>
    %49 = arith.subf %48, %38 : vector<2x16xf32>
    %50 = arith.mulf %16, %49 : vector<2x16xf32>
    %c1_i32 = arith.constant 1 : i32
    %51 = arith.addi %c0_i32, %c1_i32 : i32
    %52 = arith.mulf %0, %38 : vector<2x16xf32>
    %53 = arith.index_cast %51 : i32 to index
    %c0_22 = arith.constant 0 : index
    %c0_23 = arith.constant 0 : index
    %54 = vector.load %arg2[%53, %c0_22, %c0_23] : memref<4x16x512xf32, #tpu.memory_space<vmem>>, vector<1x16x512xf32>
    %55 = vector.shape_cast %54 : vector<1x16x512xf32> to vector<16x512xf32>
    %cst_24 = arith.constant dense<0.000000e+00> : vector<2x512xf32>
    %56 = tpu.matmul %52, %55, %cst_24 {dimension_numbers = #tpu.dot_dimension_numbers<[1], [0], [0], [1], [0, 0, 1, 1], [], []>} : vector<2x16xf32>, vector<16x512xf32>, vector<2x512xf32> -> vector<2x512xf32>
    %57 = arith.index_cast %51 : i32 to index
    %c0_25 = arith.constant 0 : index
    %c0_26 = arith.constant 0 : index
    %58 = vector.load %arg3[%57, %c0_25, %c0_26] : memref<4x1x512xf32, #tpu.memory_space<vmem>>, vector<1x1x512xf32>
    %59 = vector.shape_cast %58 : vector<1x1x512xf32> to vector<1x512xf32>
    %60 = vector.broadcast %59 : vector<1x512xf32> to vector<2x512xf32>
    %61 = arith.addf %56, %60 : vector<2x512xf32>
    %62 = vector.extract_strided_slice %61 {offsets = [0, 0], sizes = [2, 128], strides = [1, 1]} : vector<2x512xf32> to vector<2x128xf32>
    %63 = vector.extract_strided_slice %61 {offsets = [0, 128], sizes = [2, 128], strides = [1, 1]} : vector<2x512xf32> to vector<2x128xf32>
    %64 = vector.extract_strided_slice %61 {offsets = [0, 256], sizes = [2, 128], strides = [1, 1]} : vector<2x512xf32> to vector<2x128xf32>
    %65 = vector.extract_strided_slice %61 {offsets = [0, 384], sizes = [2, 128], strides = [1, 1]} : vector<2x512xf32> to vector<2x128xf32>
    %66 = arith.negf %64 : vector<2x128xf32>
    %67 = math.exp %66 : vector<2x128xf32>
    %cst_27 = arith.constant 1.000000e+00 : f32
    %68 = vector.broadcast %cst_27 : f32 to vector<2x128xf32>
    %69 = arith.addf %68, %67 : vector<2x128xf32>
    %70 = arith.divf %68, %69 : vector<2x128xf32>
    %71 = arith.mulf %62, %70 : vector<2x128xf32>
    %72 = arith.negf %65 : vector<2x128xf32>
    %73 = math.exp %72 : vector<2x128xf32>
    %cst_28 = arith.constant 1.000000e+00 : f32
    %74 = vector.broadcast %cst_28 : f32 to vector<2x128xf32>
    %75 = arith.addf %74, %73 : vector<2x128xf32>
    %76 = arith.divf %74, %75 : vector<2x128xf32>
    %77 = arith.mulf %63, %76 : vector<2x128xf32>
    %cst_29 = arith.constant 0.000000e+00 : f32
    %78 = vector.broadcast %cst_29 : f32 to vector<2x128xf32>
    %79 = arith.maximumf %71, %78 : vector<2x128xf32>
    %80 = arith.addf %17, %79 : vector<2x128xf32>
    %c1_i32_30 = arith.constant 1 : i32
    %81 = arith.index_cast %c1_i32_30 : i32 to index
    %c0_31 = arith.constant 0 : index
    %c0_32 = arith.constant 0 : index
    %82 = vector.load %arg4[%81, %c0_31, %c0_32] : memref<3x128x16xf32, #tpu.memory_space<vmem>>, vector<1x128x16xf32>
    %83 = vector.shape_cast %82 : vector<1x128x16xf32> to vector<128x16xf32>
    %cst_33 = arith.constant dense<0.000000e+00> : vector<2x16xf32>
    %84 = tpu.matmul %77, %83, %cst_33 {dimension_numbers = #tpu.dot_dimension_numbers<[1], [0], [0], [1], [0, 0, 1, 1], [], []>} : vector<2x128xf32>, vector<128x16xf32>, vector<2x16xf32> -> vector<2x16xf32>
    %85 = arith.index_cast %c1_i32_30 : i32 to index
    %c0_34 = arith.constant 0 : index
    %c0_35 = arith.constant 0 : index
    %86 = vector.load %arg5[%85, %c0_34, %c0_35] : memref<3x1x16xf32, #tpu.memory_space<vmem>>, vector<1x1x16xf32>
    %87 = vector.shape_cast %86 : vector<1x1x16xf32> to vector<1x16xf32>
    %88 = vector.broadcast %87 : vector<1x16xf32> to vector<2x16xf32>
    %89 = arith.addf %84, %88 : vector<2x16xf32>
    %90 = arith.mulf %89, %50 : vector<2x16xf32>
    %cst_36 = arith.constant dense<0xFF800000> : vector<2xf32>
    %91 = vector.multi_reduction <maximumf>, %90, %cst_36 [1] : vector<2x16xf32> to vector<2xf32>
    %92 = vector.shape_cast %91 : vector<2xf32> to vector<2x1xf32>
    %93 = vector.broadcast %92 : vector<2x1xf32> to vector<2x16xf32>
    %94 = arith.subf %90, %93 : vector<2x16xf32>
    %95 = math.exp %94 : vector<2x16xf32>
    %cst_37 = arith.constant dense<0.000000e+00> : vector<2xf32>
    %96 = vector.multi_reduction <add>, %95, %cst_37 [1] : vector<2x16xf32> to vector<2xf32>
    %97 = vector.shape_cast %96 : vector<2xf32> to vector<2x1xf32>
    %98 = tpu.reciprocal %97 {approx = true} : vector<2x1xf32> -> vector<2x1xf32>
    %99 = vector.broadcast %98 : vector<2x1xf32> to vector<2x16xf32>
    %100 = arith.mulf %95, %99 : vector<2x16xf32>
    %cst_38 = arith.constant 0.000000e+00 : f32
    %101 = vector.broadcast %cst_38 : f32 to vector<2x16xf32>
    %102 = arith.subf %101, %100 : vector<2x16xf32>
    %cst_39 = arith.constant 1.000000e-15 : f32
    %103 = vector.broadcast %cst_39 : f32 to vector<2x16xf32>
    %104 = arith.addf %100, %103 : vector<2x16xf32>
    %105 = math.log %104 : vector<2x16xf32>
    %106 = arith.mulf %102, %105 : vector<2x16xf32>
    %cst_40 = arith.constant dense<0.000000e+00> : vector<2xf32>
    %107 = vector.multi_reduction <add>, %106, %cst_40 [1] : vector<2x16xf32> to vector<2xf32>
    %108 = vector.shape_cast %107 : vector<2xf32> to vector<2x1xf32>
    %109 = arith.addf %47, %108 : vector<2x1xf32>
    %cst_41 = arith.constant 8.000000e-01 : f32
    %110 = vector.broadcast %cst_41 : f32 to vector<2x16xf32>
    %111 = arith.subf %110, %100 : vector<2x16xf32>
    %112 = arith.mulf %50, %111 : vector<2x16xf32>
    %c1_i32_42 = arith.constant 1 : i32
    %113 = arith.addi %c1_i32_30, %c1_i32_42 : i32
    %114 = arith.mulf %0, %100 : vector<2x16xf32>
    %115 = arith.index_cast %113 : i32 to index
    %c0_43 = arith.constant 0 : index
    %c0_44 = arith.constant 0 : index
    %116 = vector.load %arg2[%115, %c0_43, %c0_44] : memref<4x16x512xf32, #tpu.memory_space<vmem>>, vector<1x16x512xf32>
    %117 = vector.shape_cast %116 : vector<1x16x512xf32> to vector<16x512xf32>
    %cst_45 = arith.constant dense<0.000000e+00> : vector<2x512xf32>
    %118 = tpu.matmul %114, %117, %cst_45 {dimension_numbers = #tpu.dot_dimension_numbers<[1], [0], [0], [1], [0, 0, 1, 1], [], []>} : vector<2x16xf32>, vector<16x512xf32>, vector<2x512xf32> -> vector<2x512xf32>
    %119 = arith.index_cast %113 : i32 to index
    %c0_46 = arith.constant 0 : index
    %c0_47 = arith.constant 0 : index
    %120 = vector.load %arg3[%119, %c0_46, %c0_47] : memref<4x1x512xf32, #tpu.memory_space<vmem>>, vector<1x1x512xf32>
    %121 = vector.shape_cast %120 : vector<1x1x512xf32> to vector<1x512xf32>
    %122 = vector.broadcast %121 : vector<1x512xf32> to vector<2x512xf32>
    %123 = arith.addf %118, %122 : vector<2x512xf32>
    %124 = vector.extract_strided_slice %123 {offsets = [0, 0], sizes = [2, 128], strides = [1, 1]} : vector<2x512xf32> to vector<2x128xf32>
    %125 = vector.extract_strided_slice %123 {offsets = [0, 128], sizes = [2, 128], strides = [1, 1]} : vector<2x512xf32> to vector<2x128xf32>
    %126 = vector.extract_strided_slice %123 {offsets = [0, 256], sizes = [2, 128], strides = [1, 1]} : vector<2x512xf32> to vector<2x128xf32>
    %127 = vector.extract_strided_slice %123 {offsets = [0, 384], sizes = [2, 128], strides = [1, 1]} : vector<2x512xf32> to vector<2x128xf32>
    %128 = arith.negf %126 : vector<2x128xf32>
    %129 = math.exp %128 : vector<2x128xf32>
    %cst_48 = arith.constant 1.000000e+00 : f32
    %130 = vector.broadcast %cst_48 : f32 to vector<2x128xf32>
    %131 = arith.addf %130, %129 : vector<2x128xf32>
    %132 = arith.divf %130, %131 : vector<2x128xf32>
    %133 = arith.mulf %124, %132 : vector<2x128xf32>
    %134 = arith.negf %127 : vector<2x128xf32>
    %135 = math.exp %134 : vector<2x128xf32>
    %cst_49 = arith.constant 1.000000e+00 : f32
    %136 = vector.broadcast %cst_49 : f32 to vector<2x128xf32>
    %137 = arith.addf %136, %135 : vector<2x128xf32>
    %138 = arith.divf %136, %137 : vector<2x128xf32>
    %139 = arith.mulf %125, %138 : vector<2x128xf32>
    %cst_50 = arith.constant 0.000000e+00 : f32
    %140 = vector.broadcast %cst_50 : f32 to vector<2x128xf32>
    %141 = arith.maximumf %133, %140 : vector<2x128xf32>
    %142 = arith.addf %80, %141 : vector<2x128xf32>
    %c2_i32 = arith.constant 2 : i32
    %143 = arith.index_cast %c2_i32 : i32 to index
    %c0_51 = arith.constant 0 : index
    %c0_52 = arith.constant 0 : index
    %144 = vector.load %arg4[%143, %c0_51, %c0_52] : memref<3x128x16xf32, #tpu.memory_space<vmem>>, vector<1x128x16xf32>
    %145 = vector.shape_cast %144 : vector<1x128x16xf32> to vector<128x16xf32>
    %cst_53 = arith.constant dense<0.000000e+00> : vector<2x16xf32>
    %146 = tpu.matmul %139, %145, %cst_53 {dimension_numbers = #tpu.dot_dimension_numbers<[1], [0], [0], [1], [0, 0, 1, 1], [], []>} : vector<2x128xf32>, vector<128x16xf32>, vector<2x16xf32> -> vector<2x16xf32>
    %147 = arith.index_cast %c2_i32 : i32 to index
    %c0_54 = arith.constant 0 : index
    %c0_55 = arith.constant 0 : index
    %148 = vector.load %arg5[%147, %c0_54, %c0_55] : memref<3x1x16xf32, #tpu.memory_space<vmem>>, vector<1x1x16xf32>
    %149 = vector.shape_cast %148 : vector<1x1x16xf32> to vector<1x16xf32>
    %150 = vector.broadcast %149 : vector<1x16xf32> to vector<2x16xf32>
    %151 = arith.addf %146, %150 : vector<2x16xf32>
    %152 = arith.mulf %151, %112 : vector<2x16xf32>
    %cst_56 = arith.constant dense<0xFF800000> : vector<2xf32>
    %153 = vector.multi_reduction <maximumf>, %152, %cst_56 [1] : vector<2x16xf32> to vector<2xf32>
    %154 = vector.shape_cast %153 : vector<2xf32> to vector<2x1xf32>
    %155 = vector.broadcast %154 : vector<2x1xf32> to vector<2x16xf32>
    %156 = arith.subf %152, %155 : vector<2x16xf32>
    %157 = math.exp %156 : vector<2x16xf32>
    %cst_57 = arith.constant dense<0.000000e+00> : vector<2xf32>
    %158 = vector.multi_reduction <add>, %157, %cst_57 [1] : vector<2x16xf32> to vector<2xf32>
    %159 = vector.shape_cast %158 : vector<2xf32> to vector<2x1xf32>
    %160 = tpu.reciprocal %159 {approx = true} : vector<2x1xf32> -> vector<2x1xf32>
    %161 = vector.broadcast %160 : vector<2x1xf32> to vector<2x16xf32>
    %162 = arith.mulf %157, %161 : vector<2x16xf32>
    %cst_58 = arith.constant 0.000000e+00 : f32
    %163 = vector.broadcast %cst_58 : f32 to vector<2x16xf32>
    %164 = arith.subf %163, %162 : vector<2x16xf32>
    %cst_59 = arith.constant 1.000000e-15 : f32
    %165 = vector.broadcast %cst_59 : f32 to vector<2x16xf32>
    %166 = arith.addf %162, %165 : vector<2x16xf32>
    %167 = math.log %166 : vector<2x16xf32>
    %168 = arith.mulf %164, %167 : vector<2x16xf32>
    %cst_60 = arith.constant dense<0.000000e+00> : vector<2xf32>
    %169 = vector.multi_reduction <add>, %168, %cst_60 [1] : vector<2x16xf32> to vector<2xf32>
    %170 = vector.shape_cast %169 : vector<2xf32> to vector<2x1xf32>
    %171 = arith.addf %109, %170 : vector<2x1xf32>
    %cst_61 = arith.constant 8.000000e-01 : f32
    %172 = vector.broadcast %cst_61 : f32 to vector<2x16xf32>
    %173 = arith.subf %172, %162 : vector<2x16xf32>
    %174 = arith.mulf %112, %173 : vector<2x16xf32>
    %c1_i32_62 = arith.constant 1 : i32
    %175 = arith.addi %c2_i32, %c1_i32_62 : i32
    %176 = arith.mulf %0, %162 : vector<2x16xf32>
    %177 = arith.index_cast %175 : i32 to index
    %c0_63 = arith.constant 0 : index
    %c0_64 = arith.constant 0 : index
    %178 = vector.load %arg2[%177, %c0_63, %c0_64] : memref<4x16x512xf32, #tpu.memory_space<vmem>>, vector<1x16x512xf32>
    %179 = vector.shape_cast %178 : vector<1x16x512xf32> to vector<16x512xf32>
    %cst_65 = arith.constant dense<0.000000e+00> : vector<2x512xf32>
    %180 = tpu.matmul %176, %179, %cst_65 {dimension_numbers = #tpu.dot_dimension_numbers<[1], [0], [0], [1], [0, 0, 1, 1], [], []>} : vector<2x16xf32>, vector<16x512xf32>, vector<2x512xf32> -> vector<2x512xf32>
    %181 = arith.index_cast %175 : i32 to index
    %c0_66 = arith.constant 0 : index
    %c0_67 = arith.constant 0 : index
    %182 = vector.load %arg3[%181, %c0_66, %c0_67] : memref<4x1x512xf32, #tpu.memory_space<vmem>>, vector<1x1x512xf32>
    %183 = vector.shape_cast %182 : vector<1x1x512xf32> to vector<1x512xf32>
    %184 = vector.broadcast %183 : vector<1x512xf32> to vector<2x512xf32>
    %185 = arith.addf %180, %184 : vector<2x512xf32>
    %186 = vector.extract_strided_slice %185 {offsets = [0, 0], sizes = [2, 128], strides = [1, 1]} : vector<2x512xf32> to vector<2x128xf32>
    %187 = vector.extract_strided_slice %185 {offsets = [0, 128], sizes = [2, 128], strides = [1, 1]} : vector<2x512xf32> to vector<2x128xf32>
    %188 = vector.extract_strided_slice %185 {offsets = [0, 256], sizes = [2, 128], strides = [1, 1]} : vector<2x512xf32> to vector<2x128xf32>
    %189 = vector.extract_strided_slice %185 {offsets = [0, 384], sizes = [2, 128], strides = [1, 1]} : vector<2x512xf32> to vector<2x128xf32>
    %190 = arith.negf %188 : vector<2x128xf32>
    %191 = math.exp %190 : vector<2x128xf32>
    %cst_68 = arith.constant 1.000000e+00 : f32
    %192 = vector.broadcast %cst_68 : f32 to vector<2x128xf32>
    %193 = arith.addf %192, %191 : vector<2x128xf32>
    %194 = arith.divf %192, %193 : vector<2x128xf32>
    %195 = arith.mulf %186, %194 : vector<2x128xf32>
    %196 = arith.negf %189 : vector<2x128xf32>
    %197 = math.exp %196 : vector<2x128xf32>
    %cst_69 = arith.constant 1.000000e+00 : f32
    %198 = vector.broadcast %cst_69 : f32 to vector<2x128xf32>
    %199 = arith.addf %198, %197 : vector<2x128xf32>
    %200 = arith.divf %198, %199 : vector<2x128xf32>
    %201 = arith.mulf %187, %200 : vector<2x128xf32>
    %cst_70 = arith.constant 0.000000e+00 : f32
    %202 = vector.broadcast %cst_70 : f32 to vector<2x128xf32>
    %203 = arith.maximumf %195, %202 : vector<2x128xf32>
    %204 = arith.addf %142, %203 : vector<2x128xf32>
    %c3_i32 = arith.constant 3 : i32
    %c0_71 = arith.constant 0 : index
    %c0_72 = arith.constant 0 : index
    %205 = vector.load %arg6[%c0_71, %c0_72] : memref<128x128xf32, #tpu.memory_space<vmem>>, vector<128x128xf32>
    %cst_73 = arith.constant dense<0.000000e+00> : vector<2x128xf32>
    %206 = tpu.matmul %204, %205, %cst_73 {dimension_numbers = #tpu.dot_dimension_numbers<[1], [0], [0], [1], [0, 0, 1, 1], [], []>} : vector<2x128xf32>, vector<128x128xf32>, vector<2x128xf32> -> vector<2x128xf32>
    %c0_74 = arith.constant 0 : index
    %c0_75 = arith.constant 0 : index
    %207 = vector.load %arg7[%c0_74, %c0_75] : memref<1x128xf32, #tpu.memory_space<vmem>>, vector<1x128xf32>
    %208 = vector.broadcast %207 : vector<1x128xf32> to vector<2x128xf32>
    %209 = arith.addf %206, %208 : vector<2x128xf32>
    %210 = tpu.iota {dimensions = array<i32: 1>} : vector<2x128xi32>
    %c2_i32_76 = arith.constant 2 : i32
    %211 = vector.broadcast %c2_i32_76 : i32 to vector<2x128xi32>
    %212 = arith.cmpi slt, %210, %211 : vector<2x128xi32>
    %cst_77 = arith.constant -1.000000e+30 : f32
    %213 = vector.broadcast %cst_77 : f32 to vector<2x128xf32>
    %214 = arith.select %212, %209, %213 : vector<2x128xi1>, vector<2x128xf32>
    %cst_78 = arith.constant dense<0xFF800000> : vector<2xf32>
    %215 = vector.multi_reduction <maximumf>, %214, %cst_78 [1] : vector<2x128xf32> to vector<2xf32>
    %216 = vector.shape_cast %215 : vector<2xf32> to vector<2x1xf32>
    %217 = vector.broadcast %216 : vector<2x1xf32> to vector<2x128xf32>
    %218 = arith.subf %209, %217 : vector<2x128xf32>
    %219 = math.exp %218 : vector<2x128xf32>
    %cst_79 = arith.constant 0.000000e+00 : f32
    %220 = vector.broadcast %cst_79 : f32 to vector<2x128xf32>
    %221 = arith.select %212, %219, %220 : vector<2x128xi1>, vector<2x128xf32>
    %cst_80 = arith.constant dense<0.000000e+00> : vector<2xf32>
    %222 = vector.multi_reduction <add>, %221, %cst_80 [1] : vector<2x128xf32> to vector<2xf32>
    %223 = vector.shape_cast %222 : vector<2xf32> to vector<2x1xf32>
    %224 = vector.broadcast %223 : vector<2x1xf32> to vector<2x128xf32>
    %225 = arith.divf %221, %224 : vector<2x128xf32>
    %c0_81 = arith.constant 0 : index
    %c0_82 = arith.constant 0 : index
    %226 = vector.load %arg8[%c0_81, %c0_82] : memref<2x128xf32, #tpu.memory_space<vmem>>, vector<2x128xf32>
    tpu.vector_store %arg8[%c0_81, %c0_82], %225 {strides = array<i32>} : memref<2x128xf32, #tpu.memory_space<vmem>>, vector<2x128xf32>,
    %c0_83 = arith.constant 0 : index
    %c0_84 = arith.constant 0 : index
    %227 = vector.load %arg9[%c0_83, %c0_84] : memref<2x1xf32, #tpu.memory_space<vmem>>, vector<2x1xf32>
    tpu.vector_store %arg9[%c0_83, %c0_84], %171 {strides = array<i32>} : memref<2x1xf32, #tpu.memory_space<vmem>>, vector<2x1xf32>,
    %c0_85 = arith.constant 0 : index
    %c0_86 = arith.constant 0 : index
    %228 = vector.load %arg10[%c0_85, %c0_86] : memref<2x128xf32, #tpu.memory_space<vmem>>, vector<2x128xf32>
    tpu.vector_store %arg10[%c0_85, %c0_86], %204 {strides = array<i32>} : memref<2x128xf32, #tpu.memory_space<vmem>>, vector<2x128xf32>,
    return
  }
  func.func @transform_0(%arg0: i32) -> (i32, i32) {
    %c0_i32 = arith.constant 0 : i32
    %c0_i32_0 = arith.constant 0 : i32
    return %arg0, %c0_i32 : i32, i32
  }
  func.func @transform_1(%arg0: i32) -> (i32, i32, i32) {
    %c0_i32 = arith.constant 0 : i32
    %c0_i32_0 = arith.constant 0 : i32
    %c0_i32_1 = arith.constant 0 : i32
    %c0_i32_2 = arith.constant 0 : i32
    return %c0_i32, %c0_i32_0, %c0_i32_1 : i32, i32, i32
  }
  func.func @transform_2(%arg0: i32) -> (i32, i32, i32) {
    %c0_i32 = arith.constant 0 : i32
    %c0_i32_0 = arith.constant 0 : i32
    %c0_i32_1 = arith.constant 0 : i32
    %c0_i32_2 = arith.constant 0 : i32
    return %c0_i32, %c0_i32_0, %c0_i32_1 : i32, i32, i32
  }
  func.func @transform_3(%arg0: i32) -> (i32, i32, i32) {
    %c0_i32 = arith.constant 0 : i32
    %c0_i32_0 = arith.constant 0 : i32
    %c0_i32_1 = arith.constant 0 : i32
    %c0_i32_2 = arith.constant 0 : i32
    return %c0_i32, %c0_i32_0, %c0_i32_1 : i32, i32, i32
  }
  func.func @transform_4(%arg0: i32) -> (i32, i32, i32) {
    %c0_i32 = arith.constant 0 : i32
    %c0_i32_0 = arith.constant 0 : i32
    %c0_i32_1 = arith.constant 0 : i32
    %c0_i32_2 = arith.constant 0 : i32
    return %c0_i32, %c0_i32_0, %c0_i32_1 : i32, i32, i32
  }
  func.func @transform_5(%arg0: i32) -> (i32, i32) {
    %c0_i32 = arith.constant 0 : i32
    %c0_i32_0 = arith.constant 0 : i32
    %c0_i32_1 = arith.constant 0 : i32
    return %c0_i32, %c0_i32_0 : i32, i32
  }
  func.func @transform_6(%arg0: i32) -> (i32, i32) {
    %c0_i32 = arith.constant 0 : i32
    %c0_i32_0 = arith.constant 0 : i32
    %c0_i32_1 = arith.constant 0 : i32
    return %c0_i32, %c0_i32_0 : i32, i32
  }
  func.func @transform_7(%arg0: i32) -> (i32, i32) {
    %c0_i32 = arith.constant 0 : i32
    %c0_i32_0 = arith.constant 0 : i32
    return %arg0, %c0_i32 : i32, i32
  }
  func.func @transform_8(%arg0: i32) -> (i32, i32) {
    %c0_i32 = arith.constant 0 : i32
    %c0_i32_0 = arith.constant 0 : i32
    return %arg0, %c0_i32 : i32, i32
  }
  func.func @transform_9(%arg0: i32) -> (i32, i32) {
    %c0_i32 = arith.constant 0 : i32
    %c0_i32_0 = arith.constant 0 : i32
    return %arg0, %c0_i32 : i32, i32
  }
}

module attributes {stable_mosaic.version = 11 : i64} {
  func.func @_tabnet_kernel(%arg0: i32, %arg1: memref<4x2xf32, #tpu.memory_space<vmem>>, %arg2: memref<4x2x512xf32, #tpu.memory_space<vmem>>, %arg3: memref<4x1x512xf32, #tpu.memory_space<vmem>>, %arg4: memref<3x128x2xf32, #tpu.memory_space<vmem>>, %arg5: memref<3x1x2xf32, #tpu.memory_space<vmem>>, %arg6: memref<128x128xf32, #tpu.memory_space<vmem>>, %arg7: memref<1x128xf32, #tpu.memory_space<vmem>>, %arg8: memref<4x128xf32, #tpu.memory_space<vmem>>, %arg9: memref<4x1xf32, #tpu.memory_space<vmem>>, %arg10: memref<4x128xf32, #tpu.memory_space<vmem>>) attributes {dimension_semantics = [#tpu.dimension_semantics<parallel>], iteration_bounds = array<i64: 1>, scalar_prefetch = 0 : i64, scratch_operands = 0 : i64, tpu.core_type = #tpu.core_type<tc>, window_params = [{transform_indices = @transform_0, window_bounds = array<i64: 4, 2>}, {pipeline_mode = #tpu.pipeline_mode<synchronous>, transform_indices = @transform_1, window_bounds = array<i64: 4, 2, 512>}, {pipeline_mode = #tpu.pipeline_mode<synchronous>, transform_indices = @transform_2, window_bounds = array<i64: 4, 1, 512>}, {pipeline_mode = #tpu.pipeline_mode<synchronous>, transform_indices = @transform_3, window_bounds = array<i64: 3, 128, 2>}, {pipeline_mode = #tpu.pipeline_mode<synchronous>, transform_indices = @transform_4, window_bounds = array<i64: 3, 1, 2>}, {pipeline_mode = #tpu.pipeline_mode<synchronous>, transform_indices = @transform_5, window_bounds = array<i64: 128, 128>}, {pipeline_mode = #tpu.pipeline_mode<synchronous>, transform_indices = @transform_6, window_bounds = array<i64: 1, 128>}, {transform_indices = @transform_7, window_bounds = array<i64: 4, 128>}, {transform_indices = @transform_8, window_bounds = array<i64: 4, 1>}, {transform_indices = @transform_9, window_bounds = array<i64: 4, 128>}]} {
    %c0 = arith.constant 0 : index
    %c0_0 = arith.constant 0 : index
    %0 = vector.load %arg1[%c0, %c0_0] : memref<4x2xf32, #tpu.memory_space<vmem>>, vector<4x2xf32>
    %c0_1 = arith.constant 0 : index
    %c0_2 = arith.constant 0 : index
    %c0_3 = arith.constant 0 : index
    %1 = vector.load %arg2[%c0_1, %c0_2, %c0_3] : memref<4x2x512xf32, #tpu.memory_space<vmem>>, vector<1x2x512xf32>
    %2 = vector.shape_cast %1 : vector<1x2x512xf32> to vector<2x512xf32>
    %cst = arith.constant dense<0.000000e+00> : vector<4x512xf32>
    %3 = tpu.matmul %0, %2, %cst {dimension_numbers = #tpu.dot_dimension_numbers<[1], [0], [0], [1], [0, 0, 1, 1], [], []>} : vector<4x2xf32>, vector<2x512xf32>, vector<4x512xf32> -> vector<4x512xf32>
    %c0_4 = arith.constant 0 : index
    %c0_5 = arith.constant 0 : index
    %c0_6 = arith.constant 0 : index
    %4 = vector.load %arg3[%c0_4, %c0_5, %c0_6] : memref<4x1x512xf32, #tpu.memory_space<vmem>>, vector<1x1x512xf32>
    %5 = vector.shape_cast %4 : vector<1x1x512xf32> to vector<1x512xf32>
    %6 = vector.broadcast %5 : vector<1x512xf32> to vector<4x512xf32>
    %7 = arith.addf %3, %6 : vector<4x512xf32>
    %8 = vector.extract_strided_slice %7 {offsets = [0, 128], sizes = [4, 128], strides = [1, 1]} : vector<4x512xf32> to vector<4x128xf32>
    %9 = vector.extract_strided_slice %7 {offsets = [0, 384], sizes = [4, 128], strides = [1, 1]} : vector<4x512xf32> to vector<4x128xf32>
    %10 = arith.negf %9 : vector<4x128xf32>
    %11 = math.exp %10 : vector<4x128xf32>
    %cst_7 = arith.constant 1.000000e+00 : f32
    %12 = vector.broadcast %cst_7 : f32 to vector<4x128xf32>
    %13 = arith.addf %12, %11 : vector<4x128xf32>
    %14 = arith.divf %12, %13 : vector<4x128xf32>
    %15 = arith.mulf %8, %14 : vector<4x128xf32>
    %cst_8 = arith.constant 1.000000e+00 : f32
    %16 = vector.broadcast %cst_8 : f32 to vector<4x2xf32>
    %cst_9 = arith.constant 0.000000e+00 : f32
    %17 = vector.broadcast %cst_9 : f32 to vector<4x128xf32>
    %cst_10 = arith.constant 0.000000e+00 : f32
    %18 = vector.broadcast %cst_10 : f32 to vector<4x1xf32>
    %c0_i32 = arith.constant 0 : i32
    %19 = arith.index_cast %c0_i32 : i32 to index
    %c0_11 = arith.constant 0 : index
    %c0_12 = arith.constant 0 : index
    %20 = vector.load %arg4[%19, %c0_11, %c0_12] : memref<3x128x2xf32, #tpu.memory_space<vmem>>, vector<1x128x2xf32>
    %21 = vector.shape_cast %20 : vector<1x128x2xf32> to vector<128x2xf32>
    %cst_13 = arith.constant dense<0.000000e+00> : vector<4x2xf32>
    %22 = tpu.matmul %15, %21, %cst_13 {dimension_numbers = #tpu.dot_dimension_numbers<[1], [0], [0], [1], [0, 0, 1, 1], [], []>} : vector<4x128xf32>, vector<128x2xf32>, vector<4x2xf32> -> vector<4x2xf32>
    %23 = arith.index_cast %c0_i32 : i32 to index
    %c0_14 = arith.constant 0 : index
    %c0_15 = arith.constant 0 : index
    %24 = vector.load %arg5[%23, %c0_14, %c0_15] : memref<3x1x2xf32, #tpu.memory_space<vmem>>, vector<1x1x2xf32>
    %25 = vector.shape_cast %24 : vector<1x1x2xf32> to vector<1x2xf32>
    %26 = vector.broadcast %25 : vector<1x2xf32> to vector<4x2xf32>
    %27 = arith.addf %22, %26 : vector<4x2xf32>
    %28 = arith.mulf %27, %16 : vector<4x2xf32>
    %cst_16 = arith.constant dense<0xFF800000> : vector<4xf32>
    %29 = vector.multi_reduction <maximumf>, %28, %cst_16 [1] : vector<4x2xf32> to vector<4xf32>
    %30 = vector.shape_cast %29 : vector<4xf32> to vector<4x1xf32>
    %31 = vector.broadcast %30 : vector<4x1xf32> to vector<4x2xf32>
    %32 = arith.subf %28, %31 : vector<4x2xf32>
    %33 = math.exp %32 : vector<4x2xf32>
    %cst_17 = arith.constant dense<0.000000e+00> : vector<4xf32>
    %34 = vector.multi_reduction <add>, %33, %cst_17 [1] : vector<4x2xf32> to vector<4xf32>
    %35 = vector.shape_cast %34 : vector<4xf32> to vector<4x1xf32>
    %36 = tpu.reciprocal %35 {approx = true} : vector<4x1xf32> -> vector<4x1xf32>
    %37 = vector.broadcast %36 : vector<4x1xf32> to vector<4x2xf32>
    %38 = arith.mulf %33, %37 : vector<4x2xf32>
    %cst_18 = arith.constant 0.000000e+00 : f32
    %39 = vector.broadcast %cst_18 : f32 to vector<4x2xf32>
    %40 = arith.subf %39, %38 : vector<4x2xf32>
    %cst_19 = arith.constant 1.000000e-15 : f32
    %41 = vector.broadcast %cst_19 : f32 to vector<4x2xf32>
    %42 = arith.addf %38, %41 : vector<4x2xf32>
    %43 = math.log %42 : vector<4x2xf32>
    %44 = arith.mulf %40, %43 : vector<4x2xf32>
    %cst_20 = arith.constant dense<0.000000e+00> : vector<4xf32>
    %45 = vector.multi_reduction <add>, %44, %cst_20 [1] : vector<4x2xf32> to vector<4xf32>
    %46 = vector.shape_cast %45 : vector<4xf32> to vector<4x1xf32>
    %47 = arith.addf %18, %46 : vector<4x1xf32>
    %cst_21 = arith.constant 1.300000e+00 : f32
    %48 = vector.broadcast %cst_21 : f32 to vector<4x2xf32>
    %49 = arith.subf %48, %38 : vector<4x2xf32>
    %50 = arith.mulf %16, %49 : vector<4x2xf32>
    %c1_i32 = arith.constant 1 : i32
    %51 = arith.addi %c0_i32, %c1_i32 : i32
    %52 = arith.mulf %0, %38 : vector<4x2xf32>
    %53 = arith.index_cast %51 : i32 to index
    %c0_22 = arith.constant 0 : index
    %c0_23 = arith.constant 0 : index
    %54 = vector.load %arg2[%53, %c0_22, %c0_23] : memref<4x2x512xf32, #tpu.memory_space<vmem>>, vector<1x2x512xf32>
    %55 = vector.shape_cast %54 : vector<1x2x512xf32> to vector<2x512xf32>
    %cst_24 = arith.constant dense<0.000000e+00> : vector<4x512xf32>
    %56 = tpu.matmul %52, %55, %cst_24 {dimension_numbers = #tpu.dot_dimension_numbers<[1], [0], [0], [1], [0, 0, 1, 1], [], []>} : vector<4x2xf32>, vector<2x512xf32>, vector<4x512xf32> -> vector<4x512xf32>
    %57 = arith.index_cast %51 : i32 to index
    %c0_25 = arith.constant 0 : index
    %c0_26 = arith.constant 0 : index
    %58 = vector.load %arg3[%57, %c0_25, %c0_26] : memref<4x1x512xf32, #tpu.memory_space<vmem>>, vector<1x1x512xf32>
    %59 = vector.shape_cast %58 : vector<1x1x512xf32> to vector<1x512xf32>
    %60 = vector.broadcast %59 : vector<1x512xf32> to vector<4x512xf32>
    %61 = arith.addf %56, %60 : vector<4x512xf32>
    %62 = vector.extract_strided_slice %61 {offsets = [0, 0], sizes = [4, 128], strides = [1, 1]} : vector<4x512xf32> to vector<4x128xf32>
    %63 = vector.extract_strided_slice %61 {offsets = [0, 128], sizes = [4, 128], strides = [1, 1]} : vector<4x512xf32> to vector<4x128xf32>
    %64 = vector.extract_strided_slice %61 {offsets = [0, 256], sizes = [4, 128], strides = [1, 1]} : vector<4x512xf32> to vector<4x128xf32>
    %65 = vector.extract_strided_slice %61 {offsets = [0, 384], sizes = [4, 128], strides = [1, 1]} : vector<4x512xf32> to vector<4x128xf32>
    %66 = arith.negf %64 : vector<4x128xf32>
    %67 = math.exp %66 : vector<4x128xf32>
    %cst_27 = arith.constant 1.000000e+00 : f32
    %68 = vector.broadcast %cst_27 : f32 to vector<4x128xf32>
    %69 = arith.addf %68, %67 : vector<4x128xf32>
    %70 = arith.divf %68, %69 : vector<4x128xf32>
    %71 = arith.mulf %62, %70 : vector<4x128xf32>
    %72 = arith.negf %65 : vector<4x128xf32>
    %73 = math.exp %72 : vector<4x128xf32>
    %cst_28 = arith.constant 1.000000e+00 : f32
    %74 = vector.broadcast %cst_28 : f32 to vector<4x128xf32>
    %75 = arith.addf %74, %73 : vector<4x128xf32>
    %76 = arith.divf %74, %75 : vector<4x128xf32>
    %77 = arith.mulf %63, %76 : vector<4x128xf32>
    %cst_29 = arith.constant 0.000000e+00 : f32
    %78 = vector.broadcast %cst_29 : f32 to vector<4x128xf32>
    %79 = arith.maximumf %71, %78 : vector<4x128xf32>
    %80 = arith.addf %17, %79 : vector<4x128xf32>
    %c1_i32_30 = arith.constant 1 : i32
    %81 = arith.index_cast %c1_i32_30 : i32 to index
    %c0_31 = arith.constant 0 : index
    %c0_32 = arith.constant 0 : index
    %82 = vector.load %arg4[%81, %c0_31, %c0_32] : memref<3x128x2xf32, #tpu.memory_space<vmem>>, vector<1x128x2xf32>
    %83 = vector.shape_cast %82 : vector<1x128x2xf32> to vector<128x2xf32>
    %cst_33 = arith.constant dense<0.000000e+00> : vector<4x2xf32>
    %84 = tpu.matmul %77, %83, %cst_33 {dimension_numbers = #tpu.dot_dimension_numbers<[1], [0], [0], [1], [0, 0, 1, 1], [], []>} : vector<4x128xf32>, vector<128x2xf32>, vector<4x2xf32> -> vector<4x2xf32>
    %85 = arith.index_cast %c1_i32_30 : i32 to index
    %c0_34 = arith.constant 0 : index
    %c0_35 = arith.constant 0 : index
    %86 = vector.load %arg5[%85, %c0_34, %c0_35] : memref<3x1x2xf32, #tpu.memory_space<vmem>>, vector<1x1x2xf32>
    %87 = vector.shape_cast %86 : vector<1x1x2xf32> to vector<1x2xf32>
    %88 = vector.broadcast %87 : vector<1x2xf32> to vector<4x2xf32>
    %89 = arith.addf %84, %88 : vector<4x2xf32>
    %90 = arith.mulf %89, %50 : vector<4x2xf32>
    %cst_36 = arith.constant dense<0xFF800000> : vector<4xf32>
    %91 = vector.multi_reduction <maximumf>, %90, %cst_36 [1] : vector<4x2xf32> to vector<4xf32>
    %92 = vector.shape_cast %91 : vector<4xf32> to vector<4x1xf32>
    %93 = vector.broadcast %92 : vector<4x1xf32> to vector<4x2xf32>
    %94 = arith.subf %90, %93 : vector<4x2xf32>
    %95 = math.exp %94 : vector<4x2xf32>
    %cst_37 = arith.constant dense<0.000000e+00> : vector<4xf32>
    %96 = vector.multi_reduction <add>, %95, %cst_37 [1] : vector<4x2xf32> to vector<4xf32>
    %97 = vector.shape_cast %96 : vector<4xf32> to vector<4x1xf32>
    %98 = tpu.reciprocal %97 {approx = true} : vector<4x1xf32> -> vector<4x1xf32>
    %99 = vector.broadcast %98 : vector<4x1xf32> to vector<4x2xf32>
    %100 = arith.mulf %95, %99 : vector<4x2xf32>
    %cst_38 = arith.constant 0.000000e+00 : f32
    %101 = vector.broadcast %cst_38 : f32 to vector<4x2xf32>
    %102 = arith.subf %101, %100 : vector<4x2xf32>
    %cst_39 = arith.constant 1.000000e-15 : f32
    %103 = vector.broadcast %cst_39 : f32 to vector<4x2xf32>
    %104 = arith.addf %100, %103 : vector<4x2xf32>
    %105 = math.log %104 : vector<4x2xf32>
    %106 = arith.mulf %102, %105 : vector<4x2xf32>
    %cst_40 = arith.constant dense<0.000000e+00> : vector<4xf32>
    %107 = vector.multi_reduction <add>, %106, %cst_40 [1] : vector<4x2xf32> to vector<4xf32>
    %108 = vector.shape_cast %107 : vector<4xf32> to vector<4x1xf32>
    %109 = arith.addf %47, %108 : vector<4x1xf32>
    %cst_41 = arith.constant 1.300000e+00 : f32
    %110 = vector.broadcast %cst_41 : f32 to vector<4x2xf32>
    %111 = arith.subf %110, %100 : vector<4x2xf32>
    %112 = arith.mulf %50, %111 : vector<4x2xf32>
    %c1_i32_42 = arith.constant 1 : i32
    %113 = arith.addi %c1_i32_30, %c1_i32_42 : i32
    %114 = arith.mulf %0, %100 : vector<4x2xf32>
    %115 = arith.index_cast %113 : i32 to index
    %c0_43 = arith.constant 0 : index
    %c0_44 = arith.constant 0 : index
    %116 = vector.load %arg2[%115, %c0_43, %c0_44] : memref<4x2x512xf32, #tpu.memory_space<vmem>>, vector<1x2x512xf32>
    %117 = vector.shape_cast %116 : vector<1x2x512xf32> to vector<2x512xf32>
    %cst_45 = arith.constant dense<0.000000e+00> : vector<4x512xf32>
    %118 = tpu.matmul %114, %117, %cst_45 {dimension_numbers = #tpu.dot_dimension_numbers<[1], [0], [0], [1], [0, 0, 1, 1], [], []>} : vector<4x2xf32>, vector<2x512xf32>, vector<4x512xf32> -> vector<4x512xf32>
    %119 = arith.index_cast %113 : i32 to index
    %c0_46 = arith.constant 0 : index
    %c0_47 = arith.constant 0 : index
    %120 = vector.load %arg3[%119, %c0_46, %c0_47] : memref<4x1x512xf32, #tpu.memory_space<vmem>>, vector<1x1x512xf32>
    %121 = vector.shape_cast %120 : vector<1x1x512xf32> to vector<1x512xf32>
    %122 = vector.broadcast %121 : vector<1x512xf32> to vector<4x512xf32>
    %123 = arith.addf %118, %122 : vector<4x512xf32>
    %124 = vector.extract_strided_slice %123 {offsets = [0, 0], sizes = [4, 128], strides = [1, 1]} : vector<4x512xf32> to vector<4x128xf32>
    %125 = vector.extract_strided_slice %123 {offsets = [0, 128], sizes = [4, 128], strides = [1, 1]} : vector<4x512xf32> to vector<4x128xf32>
    %126 = vector.extract_strided_slice %123 {offsets = [0, 256], sizes = [4, 128], strides = [1, 1]} : vector<4x512xf32> to vector<4x128xf32>
    %127 = vector.extract_strided_slice %123 {offsets = [0, 384], sizes = [4, 128], strides = [1, 1]} : vector<4x512xf32> to vector<4x128xf32>
    %128 = arith.negf %126 : vector<4x128xf32>
    %129 = math.exp %128 : vector<4x128xf32>
    %cst_48 = arith.constant 1.000000e+00 : f32
    %130 = vector.broadcast %cst_48 : f32 to vector<4x128xf32>
    %131 = arith.addf %130, %129 : vector<4x128xf32>
    %132 = arith.divf %130, %131 : vector<4x128xf32>
    %133 = arith.mulf %124, %132 : vector<4x128xf32>
    %134 = arith.negf %127 : vector<4x128xf32>
    %135 = math.exp %134 : vector<4x128xf32>
    %cst_49 = arith.constant 1.000000e+00 : f32
    %136 = vector.broadcast %cst_49 : f32 to vector<4x128xf32>
    %137 = arith.addf %136, %135 : vector<4x128xf32>
    %138 = arith.divf %136, %137 : vector<4x128xf32>
    %139 = arith.mulf %125, %138 : vector<4x128xf32>
    %cst_50 = arith.constant 0.000000e+00 : f32
    %140 = vector.broadcast %cst_50 : f32 to vector<4x128xf32>
    %141 = arith.maximumf %133, %140 : vector<4x128xf32>
    %142 = arith.addf %80, %141 : vector<4x128xf32>
    %c2_i32 = arith.constant 2 : i32
    %143 = arith.index_cast %c2_i32 : i32 to index
    %c0_51 = arith.constant 0 : index
    %c0_52 = arith.constant 0 : index
    %144 = vector.load %arg4[%143, %c0_51, %c0_52] : memref<3x128x2xf32, #tpu.memory_space<vmem>>, vector<1x128x2xf32>
    %145 = vector.shape_cast %144 : vector<1x128x2xf32> to vector<128x2xf32>
    %cst_53 = arith.constant dense<0.000000e+00> : vector<4x2xf32>
    %146 = tpu.matmul %139, %145, %cst_53 {dimension_numbers = #tpu.dot_dimension_numbers<[1], [0], [0], [1], [0, 0, 1, 1], [], []>} : vector<4x128xf32>, vector<128x2xf32>, vector<4x2xf32> -> vector<4x2xf32>
    %147 = arith.index_cast %c2_i32 : i32 to index
    %c0_54 = arith.constant 0 : index
    %c0_55 = arith.constant 0 : index
    %148 = vector.load %arg5[%147, %c0_54, %c0_55] : memref<3x1x2xf32, #tpu.memory_space<vmem>>, vector<1x1x2xf32>
    %149 = vector.shape_cast %148 : vector<1x1x2xf32> to vector<1x2xf32>
    %150 = vector.broadcast %149 : vector<1x2xf32> to vector<4x2xf32>
    %151 = arith.addf %146, %150 : vector<4x2xf32>
    %152 = arith.mulf %151, %112 : vector<4x2xf32>
    %cst_56 = arith.constant dense<0xFF800000> : vector<4xf32>
    %153 = vector.multi_reduction <maximumf>, %152, %cst_56 [1] : vector<4x2xf32> to vector<4xf32>
    %154 = vector.shape_cast %153 : vector<4xf32> to vector<4x1xf32>
    %155 = vector.broadcast %154 : vector<4x1xf32> to vector<4x2xf32>
    %156 = arith.subf %152, %155 : vector<4x2xf32>
    %157 = math.exp %156 : vector<4x2xf32>
    %cst_57 = arith.constant dense<0.000000e+00> : vector<4xf32>
    %158 = vector.multi_reduction <add>, %157, %cst_57 [1] : vector<4x2xf32> to vector<4xf32>
    %159 = vector.shape_cast %158 : vector<4xf32> to vector<4x1xf32>
    %160 = tpu.reciprocal %159 {approx = true} : vector<4x1xf32> -> vector<4x1xf32>
    %161 = vector.broadcast %160 : vector<4x1xf32> to vector<4x2xf32>
    %162 = arith.mulf %157, %161 : vector<4x2xf32>
    %cst_58 = arith.constant 0.000000e+00 : f32
    %163 = vector.broadcast %cst_58 : f32 to vector<4x2xf32>
    %164 = arith.subf %163, %162 : vector<4x2xf32>
    %cst_59 = arith.constant 1.000000e-15 : f32
    %165 = vector.broadcast %cst_59 : f32 to vector<4x2xf32>
    %166 = arith.addf %162, %165 : vector<4x2xf32>
    %167 = math.log %166 : vector<4x2xf32>
    %168 = arith.mulf %164, %167 : vector<4x2xf32>
    %cst_60 = arith.constant dense<0.000000e+00> : vector<4xf32>
    %169 = vector.multi_reduction <add>, %168, %cst_60 [1] : vector<4x2xf32> to vector<4xf32>
    %170 = vector.shape_cast %169 : vector<4xf32> to vector<4x1xf32>
    %171 = arith.addf %109, %170 : vector<4x1xf32>
    %cst_61 = arith.constant 1.300000e+00 : f32
    %172 = vector.broadcast %cst_61 : f32 to vector<4x2xf32>
    %173 = arith.subf %172, %162 : vector<4x2xf32>
    %174 = arith.mulf %112, %173 : vector<4x2xf32>
    %c1_i32_62 = arith.constant 1 : i32
    %175 = arith.addi %c2_i32, %c1_i32_62 : i32
    %176 = arith.mulf %0, %162 : vector<4x2xf32>
    %177 = arith.index_cast %175 : i32 to index
    %c0_63 = arith.constant 0 : index
    %c0_64 = arith.constant 0 : index
    %178 = vector.load %arg2[%177, %c0_63, %c0_64] : memref<4x2x512xf32, #tpu.memory_space<vmem>>, vector<1x2x512xf32>
    %179 = vector.shape_cast %178 : vector<1x2x512xf32> to vector<2x512xf32>
    %cst_65 = arith.constant dense<0.000000e+00> : vector<4x512xf32>
    %180 = tpu.matmul %176, %179, %cst_65 {dimension_numbers = #tpu.dot_dimension_numbers<[1], [0], [0], [1], [0, 0, 1, 1], [], []>} : vector<4x2xf32>, vector<2x512xf32>, vector<4x512xf32> -> vector<4x512xf32>
    %181 = arith.index_cast %175 : i32 to index
    %c0_66 = arith.constant 0 : index
    %c0_67 = arith.constant 0 : index
    %182 = vector.load %arg3[%181, %c0_66, %c0_67] : memref<4x1x512xf32, #tpu.memory_space<vmem>>, vector<1x1x512xf32>
    %183 = vector.shape_cast %182 : vector<1x1x512xf32> to vector<1x512xf32>
    %184 = vector.broadcast %183 : vector<1x512xf32> to vector<4x512xf32>
    %185 = arith.addf %180, %184 : vector<4x512xf32>
    %186 = vector.extract_strided_slice %185 {offsets = [0, 0], sizes = [4, 128], strides = [1, 1]} : vector<4x512xf32> to vector<4x128xf32>
    %187 = vector.extract_strided_slice %185 {offsets = [0, 128], sizes = [4, 128], strides = [1, 1]} : vector<4x512xf32> to vector<4x128xf32>
    %188 = vector.extract_strided_slice %185 {offsets = [0, 256], sizes = [4, 128], strides = [1, 1]} : vector<4x512xf32> to vector<4x128xf32>
    %189 = vector.extract_strided_slice %185 {offsets = [0, 384], sizes = [4, 128], strides = [1, 1]} : vector<4x512xf32> to vector<4x128xf32>
    %190 = arith.negf %188 : vector<4x128xf32>
    %191 = math.exp %190 : vector<4x128xf32>
    %cst_68 = arith.constant 1.000000e+00 : f32
    %192 = vector.broadcast %cst_68 : f32 to vector<4x128xf32>
    %193 = arith.addf %192, %191 : vector<4x128xf32>
    %194 = arith.divf %192, %193 : vector<4x128xf32>
    %195 = arith.mulf %186, %194 : vector<4x128xf32>
    %196 = arith.negf %189 : vector<4x128xf32>
    %197 = math.exp %196 : vector<4x128xf32>
    %cst_69 = arith.constant 1.000000e+00 : f32
    %198 = vector.broadcast %cst_69 : f32 to vector<4x128xf32>
    %199 = arith.addf %198, %197 : vector<4x128xf32>
    %200 = arith.divf %198, %199 : vector<4x128xf32>
    %201 = arith.mulf %187, %200 : vector<4x128xf32>
    %cst_70 = arith.constant 0.000000e+00 : f32
    %202 = vector.broadcast %cst_70 : f32 to vector<4x128xf32>
    %203 = arith.maximumf %195, %202 : vector<4x128xf32>
    %204 = arith.addf %142, %203 : vector<4x128xf32>
    %c3_i32 = arith.constant 3 : i32
    %c0_71 = arith.constant 0 : index
    %c0_72 = arith.constant 0 : index
    %205 = vector.load %arg6[%c0_71, %c0_72] : memref<128x128xf32, #tpu.memory_space<vmem>>, vector<128x128xf32>
    %cst_73 = arith.constant dense<0.000000e+00> : vector<4x128xf32>
    %206 = tpu.matmul %204, %205, %cst_73 {dimension_numbers = #tpu.dot_dimension_numbers<[1], [0], [0], [1], [0, 0, 1, 1], [], []>} : vector<4x128xf32>, vector<128x128xf32>, vector<4x128xf32> -> vector<4x128xf32>
    %c0_74 = arith.constant 0 : index
    %c0_75 = arith.constant 0 : index
    %207 = vector.load %arg7[%c0_74, %c0_75] : memref<1x128xf32, #tpu.memory_space<vmem>>, vector<1x128xf32>
    %208 = vector.broadcast %207 : vector<1x128xf32> to vector<4x128xf32>
    %209 = arith.addf %206, %208 : vector<4x128xf32>
    %c0_76 = arith.constant 0 : index
    %c0_77 = arith.constant 0 : index
    %210 = vector.load %arg8[%c0_76, %c0_77] : memref<4x128xf32, #tpu.memory_space<vmem>>, vector<4x128xf32>
    tpu.vector_store %arg8[%c0_76, %c0_77], %209 {strides = array<i32>} : memref<4x128xf32, #tpu.memory_space<vmem>>, vector<4x128xf32>,
    %c0_78 = arith.constant 0 : index
    %c0_79 = arith.constant 0 : index
    %211 = vector.load %arg9[%c0_78, %c0_79] : memref<4x1xf32, #tpu.memory_space<vmem>>, vector<4x1xf32>
    tpu.vector_store %arg9[%c0_78, %c0_79], %171 {strides = array<i32>} : memref<4x1xf32, #tpu.memory_space<vmem>>, vector<4x1xf32>,
    %c0_80 = arith.constant 0 : index
    %c0_81 = arith.constant 0 : index
    %212 = vector.load %arg10[%c0_80, %c0_81] : memref<4x128xf32, #tpu.memory_space<vmem>>, vector<4x128xf32>
    tpu.vector_store %arg10[%c0_80, %c0_81], %204 {strides = array<i32>} : memref<4x128xf32, #tpu.memory_space<vmem>>, vector<4x128xf32>,
    return
  }
  func.func @transform_0(%arg0: i32) -> (i32, i32) {
    %c0_i32 = arith.constant 0 : i32
    %c0_i32_0 = arith.constant 0 : i32
    return %arg0, %c0_i32 : i32, i32
  }
  func.func @transform_1(%arg0: i32) -> (i32, i32, i32) {
    %c0_i32 = arith.constant 0 : i32
    %c0_i32_0 = arith.constant 0 : i32
    %c0_i32_1 = arith.constant 0 : i32
    %c0_i32_2 = arith.constant 0 : i32
    return %c0_i32, %c0_i32_0, %c0_i32_1 : i32, i32, i32
  }
  func.func @transform_2(%arg0: i32) -> (i32, i32, i32) {
    %c0_i32 = arith.constant 0 : i32
    %c0_i32_0 = arith.constant 0 : i32
    %c0_i32_1 = arith.constant 0 : i32
    %c0_i32_2 = arith.constant 0 : i32
    return %c0_i32, %c0_i32_0, %c0_i32_1 : i32, i32, i32
  }
  func.func @transform_3(%arg0: i32) -> (i32, i32, i32) {
    %c0_i32 = arith.constant 0 : i32
    %c0_i32_0 = arith.constant 0 : i32
    %c0_i32_1 = arith.constant 0 : i32
    %c0_i32_2 = arith.constant 0 : i32
    return %c0_i32, %c0_i32_0, %c0_i32_1 : i32, i32, i32
  }
  func.func @transform_4(%arg0: i32) -> (i32, i32, i32) {
    %c0_i32 = arith.constant 0 : i32
    %c0_i32_0 = arith.constant 0 : i32
    %c0_i32_1 = arith.constant 0 : i32
    %c0_i32_2 = arith.constant 0 : i32
    return %c0_i32, %c0_i32_0, %c0_i32_1 : i32, i32, i32
  }
  func.func @transform_5(%arg0: i32) -> (i32, i32) {
    %c0_i32 = arith.constant 0 : i32
    %c0_i32_0 = arith.constant 0 : i32
    %c0_i32_1 = arith.constant 0 : i32
    return %c0_i32, %c0_i32_0 : i32, i32
  }
  func.func @transform_6(%arg0: i32) -> (i32, i32) {
    %c0_i32 = arith.constant 0 : i32
    %c0_i32_0 = arith.constant 0 : i32
    %c0_i32_1 = arith.constant 0 : i32
    return %c0_i32, %c0_i32_0 : i32, i32
  }
  func.func @transform_7(%arg0: i32) -> (i32, i32) {
    %c0_i32 = arith.constant 0 : i32
    %c0_i32_0 = arith.constant 0 : i32
    return %arg0, %c0_i32 : i32, i32
  }
  func.func @transform_8(%arg0: i32) -> (i32, i32) {
    %c0_i32 = arith.constant 0 : i32
    %c0_i32_0 = arith.constant 0 : i32
    return %arg0, %c0_i32 : i32, i32
  }
  func.func @transform_9(%arg0: i32) -> (i32, i32) {
    %c0_i32 = arith.constant 0 : i32
    %c0_i32_0 = arith.constant 0 : i32
    return %arg0, %c0_i32 : i32, i32
  }
}

</mosaic_0001>

<llo_original>
// kernel: _lambda_.3
$region0: #{_lambda_.3}
  #allocation0 [shape = 'u32[]', space=smem, size = 0x4, offset = 0x4, fixed_abs, tag = 'smem constant byte address 0x4 - core index']
  #allocation1 [shape = 'u32[144,128]{1,0:T(1,128)}', space=vmem, size = 0x12000, scoped, tag = 'internal scratch']
  #allocation2 [shape = 'f32[16,1]{1,0:T(8,128)}', space=vmem, size = 0x2000, scoped, tag = 'scratch operand']
  %s0 = inlined_call_operand.vmem [shape: f32[2,4,256], index: 0, kind: input, shape index: {}]
  %s1 = inlined_call_operand.vmem [shape: f32[16,4], index: 1, kind: input, shape index: {}]
  %s2 = inlined_call_operand.vmem [shape: f32[16,1], index: 2, kind: input, shape index: {}]
  %s3 = inlined_call_operand.vmem [shape: f32[2,16], index: 3, kind: input, shape index: {}]
  %s4 = inlined_call_operand.vmem [shape: f32[2,1], index: 4, kind: input, shape index: {}]
  %s5 = inlined_call_operand.vmem [shape: f32[2,2,1], index: 5, kind: output, shape index: {0}]
  %s6 = inlined_call_operand.hbm [shape: f32[2,16,1], index: 6, kind: output, shape index: {1}]
  %7 = xla_tuple %s5, %s6
  %s8 = sld [smem:[#allocation0]]
  $region69: #{_lambda_.3} parent=0
    _
  %s10 = ssub.s32 1, %s8
  %s11 = scalar_select 0, %s10, %s8
  $region1: #{_lambda_.3} parent=0
    #allocation3 [shape = 'u8[16384]{0}', space=vmem, size = 0x4000, scoped, tag = 'output window, operand 1']
    #allocation4 [shape = 's32[2]{0}', space=sflag, size = 0x8, scoped, tag = 'scoped memory for _lambda_.3']
    %12 = vsyncpa [#allocation4], 0
    %s13 = scalar_lea.sflag [#allocation4], 1
    %14 = vsyncpa %s13, 0
    loop: start=0, step=1, limit=4
    $region2: #{_lambda_.3} parent=1 // loop_pre_header
      _
    $region3: #{_lambda_.3} parent=1 // loop_header
      %s16 = sphi 0, %s20
      %p17 = scmp.ge.s32.totalorder %s16, 4
      %s23 = sphi 0, %s35
      %s24 = sphi 0, %s31
      %s25 = sphi 0, %s23
      %s26 = sphi 0, %s24
      %s27 = sphi 0, %s25
      %s28 = sphi 0, %s26
      %s40 = sphi 0, %s42
      %s43 = sphi 0, %s40
      %s44 = sphi 0, %s43
      %s60 = sphi 0, %s44
      %s64 = sphi 0, %s64
      %s66 = sphi 0, %s64
      %s67 = sphi 0, %s66
      %s81 = sphi 0, %s67
      %s85 = sphi 0, %s85
      %s87 = sphi 0, %s85
      %s88 = sphi 0, %s87
      %s102 = sphi 0, %s88
      %s106 = sphi 0, %s106
      %s108 = sphi 0, %s106
      %s109 = sphi 0, %s108
      %s123 = sphi 0, %s109
      %s127 = sphi 0, %s127
      %s129 = sphi 0, %s127
      %s130 = sphi 0, %s129
      %s144 = sphi 0, %s130
      %s150 = sphi 0, %s152
      %s153 = sphi 0, %s150
      %s154 = sphi 0, %s153
      %s170 = sphi 0, %s154
      %s176 = sphi 0, %s178
      %s179 = sphi 0, %s176
      %s180 = sphi 0, %s179
      %s196 = sphi 0, %s180
    $region4: #{_lambda_.3} parent=1 // loop_header_branch
      %19 = sbr.rel (%p17) target = $region8
    $region5: #{_lambda_.3} parent=1 // loop_body
      %s21 = ssub.s32 %s16, 1
      %s22 = ssub.s32 %s16, 2
      %s29 = sadd.s32 1, %s24
      %p30 = scmp.ge.s32.totalorder %s29, 1
      %s31 = scalar_select %p30, 0, %s29
      %s32 = sadd.s32 1, %s23
      %s33 = scalar_select %p30, %s32, %s23
      %p34 = scmp.ge.s32.totalorder %s33, 2
      %s35 = scalar_select %p34, 0, %s33
      %s36 = ssub.s32 %s23, %s35
      %s37 = ssub.s32 %s24, %s31
      %s38 = sor.u32 %s36, %s37
      %p39 = scmp.eq.s32.totalorder %s38, 0
      %s41 = sadd.s32 %s40, 1
      %s42 = scalar_select %p39, %s40, %s41
      %p45 = pneg %p39
      %p46 = scmp.eq.s32.totalorder %s16, 1
      %p47 = por %p45, %p46
      %p48 = scmp.ne.s32.totalorder %s40, %s43
      %p49 = scmp.eq.s32.totalorder %s16, 0
      %p50 = por %p48, %p49
      %p51 = scmp.ne.s32.totalorder %s40, %s43
      %p52 = scmp.eq.s32.totalorder %s21, 1
      %p53 = por %p51, %p52
      %p54 = scmp.ne.s32.totalorder %s43, %s44
      %p55 = scmp.eq.s32.totalorder %s21, 0
      %p56 = por %p54, %p55
      %p57 = scmp.ne.s32.totalorder %s43, %s44
      %p58 = scmp.eq.s32.totalorder %s22, 1
      %p59 = por %p57, %p58
      %p61 = scmp.ne.s32.totalorder %s44, %s60
      %p62 = scmp.eq.s32.totalorder %s22, 0
      %p63 = por %p61, %p62
      %s65 = sadd.s32 %s64, 1
      %p68 = scmp.eq.s32.totalorder %s16, 1
      %p69 = scmp.ne.s32.totalorder %s64, %s66
      %p70 = scmp.eq.s32.totalorder %s16, 0
      %p71 = por %p69, %p70
      %p72 = scmp.ne.s32.totalorder %s64, %s66
      %p73 = scmp.eq.s32.totalorder %s21, 1
      %p74 = por %p72, %p73
      %p75 = scmp.ne.s32.totalorder %s66, %s67
      %p76 = scmp.eq.s32.totalorder %s21, 0
      %p77 = por %p75, %p76
      %p78 = scmp.ne.s32.totalorder %s66, %s67
      %p79 = scmp.eq.s32.totalorder %s22, 1
      %p80 = por %p78, %p79
      %p82 = scmp.ne.s32.totalorder %s67, %s81
      %p83 = scmp.eq.s32.totalorder %s22, 0
      %p84 = por %p82, %p83
      %s86 = sadd.s32 %s85, 1
      %p89 = scmp.eq.s32.totalorder %s16, 1
      %p90 = scmp.ne.s32.totalorder %s85, %s87
      %p91 = scmp.eq.s32.totalorder %s16, 0
      %p92 = por %p90, %p91
      %p93 = scmp.ne.s32.totalorder %s85, %s87
      %p94 = scmp.eq.s32.totalorder %s21, 1
      %p95 = por %p93, %p94
      %p96 = scmp.ne.s32.totalorder %s87, %s88
      %p97 = scmp.eq.s32.totalorder %s21, 0
      %p98 = por %p96, %p97
      %p99 = scmp.ne.s32.totalorder %s87, %s88
      %p100 = scmp.eq.s32.totalorder %s22, 1
      %p101 = por %p99, %p100
      %p103 = scmp.ne.s32.totalorder %s88, %s102
      %p104 = scmp.eq.s32.totalorder %s22, 0
      %p105 = por %p103, %p104
      %s107 = sadd.s32 %s106, 1
      %p110 = scmp.eq.s32.totalorder %s16, 1
      %p111 = scmp.ne.s32.totalorder %s106, %s108
      %p112 = scmp.eq.s32.totalorder %s16, 0
      %p113 = por %p111, %p112
      %p114 = scmp.ne.s32.totalorder %s106, %s108
      %p115 = scmp.eq.s32.totalorder %s21, 1
      %p116 = por %p114, %p115
      %p117 = scmp.ne.s32.totalorder %s108, %s109
      %p118 = scmp.eq.s32.totalorder %s21, 0
      %p119 = por %p117, %p118
      %p120 = scmp.ne.s32.totalorder %s108, %s109
      %p121 = scmp.eq.s32.totalorder %s22, 1
      %p122 = por %p120, %p121
      %p124 = scmp.ne.s32.totalorder %s109, %s123
      %p125 = scmp.eq.s32.totalorder %s22, 0
      %p126 = por %p124, %p125
      %s128 = sadd.s32 %s127, 1
      %p131 = scmp.eq.s32.totalorder %s16, 1
      %p132 = scmp.ne.s32.totalorder %s127, %s129
      %p133 = scmp.eq.s32.totalorder %s16, 0
      %p134 = por %p132, %p133
      %p135 = scmp.ne.s32.totalorder %s127, %s129
      %p136 = scmp.eq.s32.totalorder %s21, 1
      %p137 = por %p135, %p136
      %p138 = scmp.ne.s32.totalorder %s129, %s130
      %p139 = scmp.eq.s32.totalorder %s21, 0
      %p140 = por %p138, %p139
      %p141 = scmp.ne.s32.totalorder %s129, %s130
      %p142 = scmp.eq.s32.totalorder %s22, 1
      %p143 = por %p141, %p142
      %p145 = scmp.ne.s32.totalorder %s130, %s144
      %p146 = scmp.eq.s32.totalorder %s22, 0
      %p147 = por %p145, %p146
      %s148 = ssub.s32 %s23, %s35
      %p149 = scmp.eq.s32.totalorder %s148, 0
      %s151 = sadd.s32 %s150, 1
      %s152 = scalar_select %p149, %s150, %s151
      %p155 = pneg %p149
      %p156 = scmp.eq.s32.totalorder %s16, 1
      %p157 = por %p155, %p156
      %p158 = scmp.ne.s32.totalorder %s150, %s153
      %p159 = scmp.eq.s32.totalorder %s16, 0
      %p160 = por %p158, %p159
      %p161 = scmp.ne.s32.totalorder %s150, %s153
      %p162 = scmp.eq.s32.totalorder %s21, 1
      %p163 = por %p161, %p162
      %p164 = scmp.ne.s32.totalorder %s153, %s154
      %p165 = scmp.eq.s32.totalorder %s21, 0
      %p166 = por %p164, %p165
      %p167 = scmp.ne.s32.totalorder %s153, %s154
      %p168 = scmp.eq.s32.totalorder %s22, 1
      %p169 = por %p167, %p168
      %p171 = scmp.ne.s32.totalorder %s154, %s170
      %p172 = scmp.eq.s32.totalorder %s22, 0
      %p173 = por %p171, %p172
      %s174 = ssub.s32 %s23, %s35
      %p175 = scmp.eq.s32.totalorder %s174, 0
      %s177 = sadd.s32 %s176, 1
      %s178 = scalar_select %p175, %s176, %s177
      %p181 = pneg %p175
      %p182 = scmp.eq.s32.totalorder %s16, 1
      %p183 = por %p181, %p182
      %p184 = scmp.ne.s32.totalorder %s176, %s179
      %p185 = scmp.eq.s32.totalorder %s16, 0
      %p186 = por %p184, %p185
      %p187 = scmp.ne.s32.totalorder %s176, %s179
      %p188 = scmp.eq.s32.totalorder %s21, 1
      %p189 = por %p187, %p188
      %p190 = scmp.ne.s32.totalorder %s179, %s180
      %p191 = scmp.eq.s32.totalorder %s21, 0
      %p192 = por %p190, %p191
      %p193 = scmp.ne.s32.totalorder %s179, %s180
      %p194 = scmp.eq.s32.totalorder %s22, 1
      %p195 = por %p193, %p194
      %p197 = scmp.ne.s32.totalorder %s180, %s196
      %p198 = scmp.eq.s32.totalorder %s22, 0
      %p199 = por %p197, %p198
      %p200 = scmp.le.s32.totalorder 1, %s16
      %p201 = scmp.lt.s32.totalorder %s16, 3
      %p202 = pnand %p200, %p201
      %p203 = pneg %p202
      // Predicated region
      $region9: #{_lambda_.3} parent=5 // pred_check
        _
      $region10: #{_lambda_.3} parent=5 // pred_check_branch
        %205 = sbr.rel (%p202) target = $region12
      $region11: #{_lambda_.3} parent=5 // pred_region
        %s206 = ssub.s32 %s16, 1
        // Predicated region
        $region13: #{_lambda_.3} parent=11 // pred_check
          %p207 = pneg %p77
        $region14: #{_lambda_.3} parent=11 // pred_check_branch
          %209 = sbr.rel (%p207) target = $region16
        $region15: #{_lambda_.3} parent=11 // pred_region
          _
        $region16: #{_lambda_.3} parent=11 // pred_fallthru
          _
        // Predicated region
        $region17: #{_lambda_.3} parent=11 // pred_check
          %p210 = pneg %p98
        $region18: #{_lambda_.3} parent=11 // pred_check_branch
          %212 = sbr.rel (%p210) target = $region20
        $region19: #{_lambda_.3} parent=11 // pred_region
          _
        $region20: #{_lambda_.3} parent=11 // pred_fallthru
          _
        // Predicated region
        $region21: #{_lambda_.3} parent=11 // pred_check
          %p213 = pneg %p119
        $region22: #{_lambda_.3} parent=11 // pred_check_branch
          %215 = sbr.rel (%p213) target = $region24
        $region23: #{_lambda_.3} parent=11 // pred_region
          _
        $region24: #{_lambda_.3} parent=11 // pred_fallthru
          _
        // Predicated region
        $region25: #{_lambda_.3} parent=11 // pred_check
          %p216 = pneg %p140
        $region26: #{_lambda_.3} parent=11 // pred_check_branch
          %218 = sbr.rel (%p216) target = $region28
        $region27: #{_lambda_.3} parent=11 // pred_region
          _
        $region28: #{_lambda_.3} parent=11 // pred_fallthru
          _
      $region12: #{_lambda_.3} parent=5 // pred_fallthru
        _
      %p219 = scmp.lt.s32.totalorder %s16, 2
      // Predicated region
      $region29: #{_lambda_.3} parent=5 // pred_check
        %p220 = pneg %p219
      $region30: #{_lambda_.3} parent=5 // pred_check_branch
        %222 = sbr.rel (%p220) target = $region32
      $region31: #{_lambda_.3} parent=5 // pred_region
        // Predicated region
        $region33: #{_lambda_.3} parent=31 // pred_check
          %p223 = pneg %p50
        $region34: #{_lambda_.3} parent=31 // pred_check_branch
          %225 = sbr.rel (%p223) target = $region36
        $region35: #{_lambda_.3} parent=31 // pred_region
          %s226 = smul.u32 2, %s24
          %p227 = scmp.lt.s32.totalorder %s23, 1
          %s228 = scalar_select %p227, %s23, 1
          %p229 = scmp.lt.s32.totalorder %s226, 1
          %s230 = scalar_select %p229, %s226, 1
          %s231 = smul.addr %s228, 2
          %s232 = sadd.s32 %s230, %s231
          %s233 = smul.addr %s232, 4
          %s234 = scalar_lea.vmem %s0, %s233
          %s235 = smul.u32 2, %s24
        $region36: #{_lambda_.3} parent=31 // pred_fallthru
          _
      $region32: #{_lambda_.3} parent=5 // pred_fallthru
        _
      %p236 = scmp.le.s32.totalorder 1, %s16
      %p237 = scmp.lt.s32.totalorder %s16, 3
      %p238 = pnand %p236, %p237
      %p239 = pneg %p238
      // Predicated region
      $region37: #{_lambda_.3} parent=5 // pred_check
        _
      $region38: #{_lambda_.3} parent=5 // pred_check_branch
        %241 = sbr.rel (%p238) target = $region40
      $region39: #{_lambda_.3} parent=5 // pred_region
        %s242 = ssub.s32 %s16, 1
        %s243 = smul.u32 2, %s26
        %p244 = scmp.lt.s32.totalorder %s25, 1
        %s245 = scalar_select %p244, %s25, 1
        %p246 = scmp.lt.s32.totalorder %s243, 1
        %s247 = scalar_select %p246, %s243, 1
        %s248 = smul.addr %s245, 2
        %s249 = sadd.s32 %s247, %s248
        %s250 = smul.addr %s249, 4
        %s251 = scalar_lea.vmem %s0, %s250
        %p252 = pneg %p56
        %p253 = pneg %p53
        %p254 = pneg %p77
        %p255 = pneg %p74
        %p256 = pneg %p98
        %p257 = pneg %p95
        %p258 = pneg %p119
        %p259 = pneg %p116
        %p260 = pneg %p140
        %p261 = pneg %p137
        %p262 = pneg %p166
        %p263 = pneg %p163
        %p264 = scmp.lt.s32.totalorder %s25, 1
        %s265 = scalar_select %p264, %s25, 1
        %s266 = smul.addr %s265, 2
        %s267 = scalar_lea.vmem %s5, %s266
        %p268 = pneg %p192
        %p269 = pneg %p189
        %s270 = sand.u32 %s179, 1
        %s271 = scalar_lea.sflag [#allocation4], %s270
        %s272 = sand.u32 %s179, 1
        %s273 = smul.addr %s272, 16
        %s274 = scalar_lea.vmem [#allocation3], %s273
        %s275 = smul.u32 2, %s26
        %p276 = scmp.lt.s32.totalorder %s25, 1
        %s277 = scalar_select %p276, %s25, 1
        %p278 = scmp.lt.s32.totalorder %s275, 1
        %s279 = scalar_select %p278, %s275, 1
        %s280 = smul.addr %s277, 2
        %s281 = sadd.s32 %s279, %s280
        %s282 = smul.addr %s281, 4
        %s283 = scalar_lea.vmem %s0, %s282
        %s284 = smul.u32 2, %s26
        %p285 = scmp.lt.s32.totalorder %s25, 1
        %s286 = scalar_select %p285, %s25, 1
        %s287 = smul.addr %s286, 2
        %s288 = scalar_lea.vmem %s5, %s287
        %p289 = scmp.eq.s32.totalorder %s26, 0
        // Predicated region
        $region41: #{_lambda_.3} parent=39 // pred_check
          %p290 = pneg %p289
        $region42: #{_lambda_.3} parent=39 // pred_check_branch
          %292 = sbr.rel (%p290) target = $region44
        $region43: #{_lambda_.3} parent=39 // pred_region
          %vm293 = vcmask 7168
          %294 = vst.msk [vmem:[#allocation2] sm:$0xff] %vm293, 0.0
          %295 = vst.msk [vmem:[#allocation2 + $0x8] sm:$0xff] %vm293, 0.0
        $region44: #{_lambda_.3} parent=39 // pred_fallthru
          _
        %v296 = vld [vmem:[%s283] sm:$0xff]
        %v297 = vld [vmem:[%s1] sm:$0xff]
        %v298 = vld [vmem:[%s1 + $0x8] sm:$0xff]
        %v299 = vld [vmem:[%s2] sm:$0xff]
        %v300 = vld [vmem:[%s2 + $0x8] sm:$0xff]
        %302 = vset.pattern.permute.xlu0 0
        %303 = vperm.xlu0 %302, %v299
        %v304 = vpop.permute.xlu0 %303
        %307 = vset.pattern.permute.xlu0 0
        %308 = vperm.xlu0 %307, %v300
        %v309 = vpop.permute.xlu0 %308
        %v312 = vcombine.high %v296, %v296
        %vm313 = vcmask 31744
        %v315 = vsel %vm313, %v297, 0
        %v318 = vsel %vm313, %v298, 0
        %vm320 = vcmask 1043456
        %v321 = vsel %vm320, %v296, 0
        %v323 = vsel %vm320, %v312, 0
        %325 = vmatprep.subr.mxu0 %v323
        %326 = vmatpush1.msra.mxu0 %v321
        %327 = vmatprep.subr.mxu0 0.0
        %328 = vmatpush1.msra.mxu0 0.0
        %329 = vmatprep.subr.mxu0 0.0
        %330 = vmatpush1.msra.mxu0 0.0
        %331 = vmatprep.subr.mxu0 0.0
        %332 = vmatpush1.msra.mxu0 0.0
        %333 = vmatprep.subr.mxu0 0.0
        %334 = vmatpush1.msra.mxu0 0.0
        %335 = vmatprep.subr.mxu0 0.0
        %336 = vmatpush1.msra.mxu0 0.0
        %337 = vmatprep.subr.mxu0 0.0
        %338 = vmatpush1.msra.mxu0 0.0
        %339 = vmatprep.subr.mxu0 0.0
        %340 = vmatpush1.msra.mxu0 0.0
        %341 = vmatprep.subr.mxu0 0.0
        %342 = vmatpush1.msra.mxu0 0.0
        %343 = vmatprep.subr.mxu0 0.0
        %344 = vmatpush1.msra.mxu0 0.0
        %345 = vmatprep.subr.mxu0 0.0
        %346 = vmatpush1.msra.mxu0 0.0
        %347 = vmatprep.subr.mxu0 0.0
        %348 = vmatpush1.msra.mxu0 0.0
        %349 = vmatprep.subr.mxu0 0.0
        %350 = vmatpush1.msra.mxu0 0.0
        %351 = vmatprep.subr.mxu0 0.0
        %352 = vmatpush1.msra.mxu0 0.0
        %353 = vmatprep.subr.mxu0 0.0
        %354 = vmatpush1.msra.mxu0 0.0
        %355 = vmatprep.subr.mxu0 0.0
        %356 = vmatpush1.msra.mxu0 0.0
        %357 = vmatprep.subr.mxu0 0.0
        %358 = vmatpush1.msra.mxu0 0.0
        %359 = vmatprep.subr.mxu0 0.0
        %360 = vmatpush1.msra.mxu0 0.0
        %361 = vmatprep.subr.mxu0 0.0
        %362 = vmatpush1.msra.mxu0 0.0
        %363 = vmatprep.subr.mxu0 0.0
        %364 = vmatpush1.msra.mxu0 0.0
        %365 = vmatprep.subr.mxu0 0.0
        %366 = vmatpush1.msra.mxu0 0.0
        %367 = vmatprep.subr.mxu0 0.0
        %368 = vmatpush1.msra.mxu0 0.0
        %369 = vmatprep.subr.mxu0 0.0
        %370 = vmatpush1.msra.mxu0 0.0
        %371 = vmatprep.subr.mxu0 0.0
        %372 = vmatpush1.msra.mxu0 0.0
        %373 = vmatprep.subr.mxu0 0.0
        %374 = vmatpush1.msra.mxu0 0.0
        %375 = vmatprep.subr.mxu0 0.0
        %376 = vmatpush1.msra.mxu0 0.0
        %377 = vmatprep.subr.mxu0 0.0
        %378 = vmatpush1.msra.mxu0 0.0
        %379 = vmatprep.subr.mxu0 0.0
        %380 = vmatpush1.msra.mxu0 0.0
        %381 = vmatprep.subr.mxu0 0.0
        %382 = vmatpush1.msra.mxu0 0.0
        %383 = vmatprep.subr.mxu0 0.0
        %384 = vmatpush1.msra.mxu0 0.0
        %385 = vmatprep.subr.mxu0 0.0
        %386 = vmatpush1.msra.mxu0 0.0
        %387 = vmatprep.subr.mxu0 0.0
        %388 = vmatpush1.msra.mxu0 0.0
        %389 = vmatprep.mubr.f32.mxu0 0.0
        %390 = vmatmul.mubr.f32.gmra.mrb[0].mxu0 %v315
        %v391 = vpop.f32.mrb[0].mxu0
        %v392 = vadd.f32 %v304, %v391
        %v393 = vpop.f32.mrb[0].mxu0
        %v394 = vadd.f32 %v304, %v393
        %395 = vmatprep.mubr.f32.mxu0 0.0
        %396 = vmatmul.mubr.f32.gmra.mrb[0].mxu0 %v318
        %v397 = vpop.f32.mrb[0].mxu0
        %v398 = vadd.f32 %v309, %v397
        %v399 = vpop.f32.mrb[0].mxu0
        %v400 = vadd.f32 %v309, %v399
        %401 = vdwg.mxu0
        %v402 = vmax.f32 %v392, 0.0
        %v403 = vmax.f32 %v394, 0.0
        %v404 = vmax.f32 %v398, 0.0
        %v405 = vmax.f32 %v400, 0.0
        %v406 = vld [vmem:[#allocation2] sm:$0xff]
        %v407 = vld [vmem:[#allocation2 + $0x8] sm:$0xff]
        %v408 = vadd.f32 %v402, %v403
        %409 = vadd.xlane.f32.xlu0 %v408
        %v410 = vpop.xlane.xlu0 %409
        %v411 = vadd.f32 %v404, %v405
        %412 = vadd.xlane.f32.xlu0 %v411
        %v413 = vpop.xlane.xlu0 %412
        %v414 = vadd.f32 %v406, %v410
        %v415 = vadd.f32 %v407, %v413
        %vm416 = vcmask 7168
        %417 = vst.msk [vmem:[#allocation2] sm:$0xff] %vm416, %v414
        %418 = vst.msk [vmem:[#allocation2 + $0x8] sm:$0xff] %vm416, %v415
        // Predicated region
        $region45: #{_lambda_.3} parent=39 // pred_check
          %p419 = pneg %p289
        $region46: #{_lambda_.3} parent=39 // pred_check_branch
          %421 = sbr.rel (%p419) target = $region48
        $region47: #{_lambda_.3} parent=39 // pred_region
          %v422 = vld [vmem:[#allocation2] sm:$0xff]
          %v423 = vld [vmem:[#allocation2 + $0x8] sm:$0xff]
          %v424 = vmul.f32 %v422, 0.00390625
          %v425 = vmul.f32 %v423, 0.00390625
          %v426 = vld [vmem:[%s3] sm:$0x3]
          %v427 = vld [vmem:[%s4] sm:$0x3]
          %vm428 = vcmask 130048
          %v430 = vsel %vm428, %v426, 0
          %432 = vmatprep.subr.mxu0 0.0
          %433 = vmatpush1.msra.mxu0 %v424
          %434 = vmatprep.subr.mxu0 0.0
          %435 = vmatpush1.msra.mxu0 %v425
          %436 = vmatprep.subr.mxu0 0.0
          %437 = vmatpush1.msra.mxu0 0.0
          %438 = vmatprep.subr.mxu0 0.0
          %439 = vmatpush1.msra.mxu0 0.0
          %440 = vmatprep.subr.mxu0 0.0
          %441 = vmatpush1.msra.mxu0 0.0
          %442 = vmatprep.subr.mxu0 0.0
          %443 = vmatpush1.msra.mxu0 0.0
          %444 = vmatprep.subr.mxu0 0.0
          %445 = vmatpush1.msra.mxu0 0.0
          %446 = vmatprep.subr.mxu0 0.0
          %447 = vmatpush1.msra.mxu0 0.0
          %448 = vmatprep.subr.mxu0 0.0
          %449 = vmatpush1.msra.mxu0 0.0
          %450 = vmatprep.subr.mxu0 0.0
          %451 = vmatpush1.msra.mxu0 0.0
          %452 = vmatprep.subr.mxu0 0.0
          %453 = vmatpush1.msra.mxu0 0.0
          %454 = vmatprep.subr.mxu0 0.0
          %455 = vmatpush1.msra.mxu0 0.0
          %456 = vmatprep.subr.mxu0 0.0
          %457 = vmatpush1.msra.mxu0 0.0
          %458 = vmatprep.subr.mxu0 0.0
          %459 = vmatpush1.msra.mxu0 0.0
          %460 = vmatprep.subr.mxu0 0.0
          %461 = vmatpush1.msra.mxu0 0.0
          %462 = vmatprep.subr.mxu0 0.0
          %463 = vmatpush1.msra.mxu0 0.0
          %464 = vmatprep.subr.mxu0 0.0
          %465 = vmatpush1.msra.mxu0 0.0
          %466 = vmatprep.subr.mxu0 0.0
          %467 = vmatpush1.msra.mxu0 0.0
          %468 = vmatprep.subr.mxu0 0.0
          %469 = vmatpush1.msra.mxu0 0.0
          %470 = vmatprep.subr.mxu0 0.0
          %471 = vmatpush1.msra.mxu0 0.0
          %472 = vmatprep.subr.mxu0 0.0
          %473 = vmatpush1.msra.mxu0 0.0
          %474 = vmatprep.subr.mxu0 0.0
          %475 = vmatpush1.msra.mxu0 0.0
          %476 = vmatprep.subr.mxu0 0.0
          %477 = vmatpush1.msra.mxu0 0.0
          %478 = vmatprep.subr.mxu0 0.0
          %479 = vmatpush1.msra.mxu0 0.0
          %480 = vmatprep.subr.mxu0 0.0
          %481 = vmatpush1.msra.mxu0 0.0
          %482 = vmatprep.subr.mxu0 0.0
          %483 = vmatpush1.msra.mxu0 0.0
          %484 = vmatprep.subr.mxu0 0.0
          %485 = vmatpush1.msra.mxu0 0.0
          %486 = vmatprep.subr.mxu0 0.0
          %487 = vmatpush1.msra.mxu0 0.0
          %488 = vmatprep.subr.mxu0 0.0
          %489 = vmatpush1.msra.mxu0 0.0
          %490 = vmatprep.subr.mxu0 0.0
          %491 = vmatpush1.msra.mxu0 0.0
          %492 = vmatprep.subr.mxu0 0.0
          %493 = vmatpush1.msra.mxu0 0.0
          %494 = vmatprep.subr.mxu0 0.0
          %495 = vmatpush1.msra.mxu0 0.0
          %496 = vmatprep.mubr.f32.mxu0 0.0
          %497 = vmatmul.mubr.f32.gmra.mrb[0].mxu0 %v430
          %v498 = vpop.f32.mrb[0].mxu0
          %v499 = vadd.f32 %v427, %v498
          %v500 = vpop.f32.mrb[0].mxu0
          %501 = vdwg.mxu0
          %vm502 = vcmask 1024
          %v503 = vsel %vm502, %v499, -inf
          %v504 = vrot.slane %v503, 4
          %v505 = vmax.f32 %v503, %v504
          %v506 = vrot.slane %v505, 2
          %v507 = vmax.f32 %v505, %v506
          %v508 = vrot.slane %v507, 1
          %v509 = vmax.f32 %v507, %v508
          %v510 = vsub.f32 %v499, %v509
          %v511 = vmul.f32 %v510, 1.442695
          %v512 = vpow.pop %v511
          %v513 = vsel %vm502, %v512, 0.0
          %v514 = vrot.slane %v513, 4
          %v515 = vadd.f32 %v513, %v514
          %v516 = vrot.slane %v515, 2
          %v517 = vadd.f32 %v515, %v516
          %v518 = vrot.slane %v517, 1
          %v519 = vadd.f32 %v517, %v518
          %v520 = vrcp.pop %v519
          %v521 = vmul.f32 %v512, %v520
          %522 = vst.msk [vmem:[%s288] sm:$0x3] %vm502, %v521
          %523 = vst.msk [vmem:[%s274] sm:$0xff] %vm416, %v424
          %524 = vst.msk [vmem:[%s274 + $0x8] sm:$0xff] %vm416, %v425
        $region48: #{_lambda_.3} parent=39 // pred_fallthru
          _
        %p525 = scmp.lt.s32.totalorder %s25, 1
        %s526 = scalar_select %p525, %s25, 1
        %s527 = smul.addr %s526, 2
        %s528 = scalar_lea.vmem %s5, %s527
        %s529 = sand.u32 %s179, 1
        %s530 = scalar_lea.sflag [#allocation4], %s529
        %s531 = sand.u32 %s179, 1
        %s532 = smul.addr %s531, 16
        %s533 = scalar_lea.vmem [#allocation3], %s532
        // Predicated region
        $region49: #{_lambda_.3} parent=39 // pred_check
          %p534 = pneg %p163
        $region50: #{_lambda_.3} parent=39 // pred_check_branch
          %536 = sbr.rel (%p534) target = $region52
        $region51: #{_lambda_.3} parent=39 // pred_region
          _
        $region52: #{_lambda_.3} parent=39 // pred_fallthru
          _
        // Predicated region
        $region53: #{_lambda_.3} parent=39 // pred_check
          %p537 = pneg %p189
        $region54: #{_lambda_.3} parent=39 // pred_check_branch
          %539 = sbr.rel (%p537) target = $region56
        $region55: #{_lambda_.3} parent=39 // pred_region
          %s541 = ssub.s32 256, 256
          %542 = vsyncadd %s530, %s541
          %s543 = smul.addr %s25, 2
          %s544 = smul.addr %s543, 128
          %s545 = scalar_lea.hbm %s6, %s544
          %s546 = sshll.u32 %s533, 4
          %s547 = int_to_ptr.vmem [resolvable:$true] %s546
          %552 = dma.vmem_to_hbm [thread:$0]  %s547, 256, %s545, %s530, 128, 128, 8
        $region56: #{_lambda_.3} parent=39 // pred_fallthru
          _
      $region40: #{_lambda_.3} parent=5 // pred_fallthru
        _
      %p553 = scmp.le.s32.totalorder 2, %s16
      // Predicated region
      $region57: #{_lambda_.3} parent=5 // pred_check
        %p554 = pneg %p553
      $region58: #{_lambda_.3} parent=5 // pred_check_branch
        %556 = sbr.rel (%p554) target = $region60
      $region59: #{_lambda_.3} parent=5 // pred_region
        %s557 = ssub.s32 %s16, 2
        // Predicated region
        $region61: #{_lambda_.3} parent=59 // pred_check
          %p558 = pneg %p169
        $region62: #{_lambda_.3} parent=59 // pred_check_branch
          %560 = sbr.rel (%p558) target = $region64
        $region63: #{_lambda_.3} parent=59 // pred_region
          %p561 = scmp.lt.s32.totalorder %s27, 1
          %s562 = scalar_select %p561, %s27, 1
          %s563 = smul.addr %s562, 2
          %s564 = scalar_lea.vmem %s5, %s563
        $region64: #{_lambda_.3} parent=59 // pred_fallthru
          _
        // Predicated region
        $region65: #{_lambda_.3} parent=59 // pred_check
          %p565 = pneg %p195
        $region66: #{_lambda_.3} parent=59 // pred_check_branch
          %567 = sbr.rel (%p565) target = $region68
        $region67: #{_lambda_.3} parent=59 // pred_region
          %s568 = sand.u32 %s180, 1
          %s569 = scalar_lea.sflag [#allocation4], %s568
          %s570 = sand.u32 %s180, 1
          %s571 = smul.addr %s570, 16
          %s572 = scalar_lea.vmem [#allocation3], %s571
          %573 = dma.done %s569, 256
        $region68: #{_lambda_.3} parent=59 // pred_fallthru
          _
      $region60: #{_lambda_.3} parent=5 // pred_fallthru
        _
    $region6: #{_lambda_.3} parent=1 // loop_footer
      %s20 = sadd.s32 1, %s16
    $region7: #{_lambda_.3} parent=1 // loop_footer_branch
      %15 = sbr.rel target = $region3
    $region8: #{_lambda_.3} parent=1 // loop_exit
      _
    %574 = vsyncpa [#allocation4], 1
    %s575 = scalar_lea.sflag [#allocation4], 1
    %576 = vsyncpa %s575, 1

// kernel: _lambda_.4
$region0: #{_lambda_.4}
  #allocation0 [shape = 'u32[]', space=smem, size = 0x4, offset = 0x4, fixed_abs, tag = 'smem constant byte address 0x4 - core index']
  #allocation1 [shape = 'u32[144,128]{1,0:T(1,128)}', space=vmem, size = 0x12000, scoped, tag = 'internal scratch']
  %s0 = inlined_call_operand.vmem [shape: f32[2,16], index: 0, kind: input, shape index: {}]
  %s1 = inlined_call_operand.vmem [shape: f32[4,16,512], index: 1, kind: input, shape index: {}]
  %s2 = inlined_call_operand.vmem [shape: f32[4,1,512], index: 2, kind: input, shape index: {}]
  %s3 = inlined_call_operand.vmem [shape: f32[3,128,16], index: 3, kind: input, shape index: {}]
  %s4 = inlined_call_operand.vmem [shape: f32[3,1,16], index: 4, kind: input, shape index: {}]
  %s5 = inlined_call_operand.vmem [shape: f32[128,128], index: 5, kind: input, shape index: {}]
  %s6 = inlined_call_operand.vmem [shape: f32[1,128], index: 6, kind: input, shape index: {}]
  %s7 = inlined_call_operand.vmem [shape: f32[2,128], index: 7, kind: output, shape index: {0}]
  %s8 = inlined_call_operand.hbm [shape: f32[2,1], index: 8, kind: output, shape index: {1}]
  %s9 = inlined_call_operand.hbm [shape: f32[2,128], index: 9, kind: output, shape index: {2}]
  %10 = xla_tuple %s7, %s8, %s9
  %s11 = sld [smem:[#allocation0]]
  $region54: #{_lambda_.4} parent=0
    _
  %s13 = ssub.s32 1, %s11
  %s14 = scalar_select 0, %s13, %s11
  $region1: #{_lambda_.4} parent=0
    #allocation2 [shape = 'u8[1024]{0}', space=vmem, size = 0x400, scoped, tag = 'output window, operand 1, single buffered']
    #allocation3 [shape = 's32[1]{0}', space=sflag, size = 0x4, scoped, tag = 'scoped memory for _lambda_.4']
    #allocation4 [shape = 'u8[1024]{0}', space=vmem, size = 0x400, scoped, tag = 'output window, operand 2, single buffered']
    #allocation5 [shape = 's32[1]{0}', space=sflag, size = 0x4, scoped, tag = 'scoped memory for _lambda_.4']
    %15 = vsyncpa [#allocation3], 0
    %16 = vsyncpa [#allocation5], 0
    // Predicated region
    $region2: #{_lambda_.4} parent=1 // pred_check
      _
    $region3: #{_lambda_.4} parent=1 // pred_check_branch
      %18 = sbr.rel (0) target = $region5
    $region4: #{_lambda_.4} parent=1 // pred_region
      _
    $region5: #{_lambda_.4} parent=1 // pred_fallthru
      _
    // Predicated region
    $region6: #{_lambda_.4} parent=1 // pred_check
      _
    $region7: #{_lambda_.4} parent=1 // pred_check_branch
      %20 = sbr.rel (0) target = $region9
    $region8: #{_lambda_.4} parent=1 // pred_region
      _
    $region9: #{_lambda_.4} parent=1 // pred_fallthru
      _
    // Predicated region
    $region10: #{_lambda_.4} parent=1 // pred_check
      _
    $region11: #{_lambda_.4} parent=1 // pred_check_branch
      %22 = sbr.rel (0) target = $region13
    $region12: #{_lambda_.4} parent=1 // pred_region
      _
    $region13: #{_lambda_.4} parent=1 // pred_fallthru
      _
    // Predicated region
    $region14: #{_lambda_.4} parent=1 // pred_check
      _
    $region15: #{_lambda_.4} parent=1 // pred_check_branch
      %24 = sbr.rel (0) target = $region17
    $region16: #{_lambda_.4} parent=1 // pred_region
      _
    $region17: #{_lambda_.4} parent=1 // pred_fallthru
      _
    // Predicated region
    $region18: #{_lambda_.4} parent=1 // pred_check
      _
    $region19: #{_lambda_.4} parent=1 // pred_check_branch
      %26 = sbr.rel (0) target = $region21
    $region20: #{_lambda_.4} parent=1 // pred_region
      _
    $region21: #{_lambda_.4} parent=1 // pred_fallthru
      _
    // Predicated region
    $region22: #{_lambda_.4} parent=1 // pred_check
      _
    $region23: #{_lambda_.4} parent=1 // pred_check_branch
      %28 = sbr.rel (0) target = $region25
    $region24: #{_lambda_.4} parent=1 // pred_region
      _
    $region25: #{_lambda_.4} parent=1 // pred_fallthru
      _
    // Predicated region
    $region26: #{_lambda_.4} parent=1 // pred_check
      _
    $region27: #{_lambda_.4} parent=1 // pred_check_branch
      %30 = sbr.rel (0) target = $region29
    $region28: #{_lambda_.4} parent=1 // pred_region
      _
    $region29: #{_lambda_.4} parent=1 // pred_fallthru
      _
    %v31 = vld [vmem:[%s0] sm:$0x3]
    %v32 = vld [vmem:[%s1] sm:$0xff]
    %v33 = vld [vmem:[%s1 + $0x8] sm:$0xff]
    %v34 = vld [vmem:[%s1 + $0x10] sm:$0xff]
    %v35 = vld [vmem:[%s1 + $0x18] sm:$0xff]
    %v36 = vld [vmem:[%s1 + $0x20] sm:$0xff]
    %v37 = vld [vmem:[%s1 + $0x28] sm:$0xff]
    %v38 = vld [vmem:[%s1 + $0x30] sm:$0xff]
    %v39 = vld [vmem:[%s1 + $0x38] sm:$0xff]
    %v40 = vld [vmem:[%s2] sm:$0xf]
    %v42 = vlaneseq
    %v43 = vshrl.u32 %v42, 7
    %v44 = vsub.s32 1, %v43
    %v45 = vrot.slane %v40, %v44
    %v46 = vlaneseq
    %v47 = vshrl.u32 %v46, 7
    %v48 = vsub.s32 3, %v47
    %v49 = vrot.slane %v40, %v48
    %vm52 = vcmask 130048
    %v54 = vsel %vm52, %v31, 0
    %56 = vmatprep.subr.mxu0 %v33
    %57 = vmatpush1.msra.mxu0 %v32
    %58 = vmatprep.subr.mxu0 %v37
    %59 = vmatpush1.msra.mxu0 %v36
    %60 = vmatprep.subr.mxu0 0.0
    %61 = vmatpush1.msra.mxu0 0.0
    %62 = vmatprep.subr.mxu0 0.0
    %63 = vmatpush1.msra.mxu0 0.0
    %64 = vmatprep.subr.mxu0 0.0
    %65 = vmatpush1.msra.mxu0 0.0
    %66 = vmatprep.subr.mxu0 0.0
    %67 = vmatpush1.msra.mxu0 0.0
    %68 = vmatprep.subr.mxu0 0.0
    %69 = vmatpush1.msra.mxu0 0.0
    %70 = vmatprep.subr.mxu0 0.0
    %71 = vmatpush1.msra.mxu0 0.0
    %72 = vmatprep.subr.mxu0 0.0
    %73 = vmatpush1.msra.mxu0 0.0
    %74 = vmatprep.subr.mxu0 0.0
    %75 = vmatpush1.msra.mxu0 0.0
    %76 = vmatprep.subr.mxu0 0.0
    %77 = vmatpush1.msra.mxu0 0.0
    %78 = vmatprep.subr.mxu0 0.0
    %79 = vmatpush1.msra.mxu0 0.0
    %80 = vmatprep.subr.mxu0 0.0
    %81 = vmatpush1.msra.mxu0 0.0
    %82 = vmatprep.subr.mxu0 0.0
    %83 = vmatpush1.msra.mxu0 0.0
    %84 = vmatprep.subr.mxu0 0.0
    %85 = vmatpush1.msra.mxu0 0.0
    %86 = vmatprep.subr.mxu0 0.0
    %87 = vmatpush1.msra.mxu0 0.0
    %88 = vmatprep.subr.mxu0 0.0
    %89 = vmatpush1.msra.mxu0 0.0
    %90 = vmatprep.subr.mxu0 0.0
    %91 = vmatpush1.msra.mxu0 0.0
    %92 = vmatprep.subr.mxu0 0.0
    %93 = vmatpush1.msra.mxu0 0.0
    %94 = vmatprep.subr.mxu0 0.0
    %95 = vmatpush1.msra.mxu0 0.0
    %96 = vmatprep.subr.mxu0 0.0
    %97 = vmatpush1.msra.mxu0 0.0
    %98 = vmatprep.subr.mxu0 0.0
    %99 = vmatpush1.msra.mxu0 0.0
    %100 = vmatprep.subr.mxu0 0.0
    %101 = vmatpush1.msra.mxu0 0.0
    %102 = vmatprep.subr.mxu0 0.0
    %103 = vmatpush1.msra.mxu0 0.0
    %104 = vmatprep.subr.mxu0 0.0
    %105 = vmatpush1.msra.mxu0 0.0
    %106 = vmatprep.subr.mxu0 0.0
    %107 = vmatpush1.msra.mxu0 0.0
    %108 = vmatprep.subr.mxu0 0.0
    %109 = vmatpush1.msra.mxu0 0.0
    %110 = vmatprep.subr.mxu0 0.0
    %111 = vmatpush1.msra.mxu0 0.0
    %112 = vmatprep.subr.mxu0 0.0
    %113 = vmatpush1.msra.mxu0 0.0
    %114 = vmatprep.subr.mxu0 0.0
    %115 = vmatpush1.msra.mxu0 0.0
    %116 = vmatprep.subr.mxu0 0.0
    %117 = vmatpush1.msra.mxu0 0.0
    %118 = vmatprep.subr.mxu0 0.0
    %119 = vmatpush1.msra.mxu0 0.0
    %120 = vmatprep.mubr.f32.mxu0 0.0
    %121 = vmatmul.mubr.f32.gmra.mrb[0].mxu0 %v54
    %v122 = vpop.f32.mrb[0].mxu0
    %v123 = vpop.f32.mrb[0].mxu0
    %v124 = vadd.f32 %v45, %v123
    %125 = vdwg.mxu0
    %126 = vmatprep.subr.mxu0 %v35
    %127 = vmatpush1.msra.mxu0 %v34
    %128 = vmatprep.subr.mxu0 %v39
    %129 = vmatpush1.msra.mxu0 %v38
    %130 = vmatprep.subr.mxu0 0.0
    %131 = vmatpush1.msra.mxu0 0.0
    %132 = vmatprep.subr.mxu0 0.0
    %133 = vmatpush1.msra.mxu0 0.0
    %134 = vmatprep.subr.mxu0 0.0
    %135 = vmatpush1.msra.mxu0 0.0
    %136 = vmatprep.subr.mxu0 0.0
    %137 = vmatpush1.msra.mxu0 0.0
    %138 = vmatprep.subr.mxu0 0.0
    %139 = vmatpush1.msra.mxu0 0.0
    %140 = vmatprep.subr.mxu0 0.0
    %141 = vmatpush1.msra.mxu0 0.0
    %142 = vmatprep.subr.mxu0 0.0
    %143 = vmatpush1.msra.mxu0 0.0
    %144 = vmatprep.subr.mxu0 0.0
    %145 = vmatpush1.msra.mxu0 0.0
    %146 = vmatprep.subr.mxu0 0.0
    %147 = vmatpush1.msra.mxu0 0.0
    %148 = vmatprep.subr.mxu0 0.0
    %149 = vmatpush1.msra.mxu0 0.0
    %150 = vmatprep.subr.mxu0 0.0
    %151 = vmatpush1.msra.mxu0 0.0
    %152 = vmatprep.subr.mxu0 0.0
    %153 = vmatpush1.msra.mxu0 0.0
    %154 = vmatprep.subr.mxu0 0.0
    %155 = vmatpush1.msra.mxu0 0.0
    %156 = vmatprep.subr.mxu0 0.0
    %157 = vmatpush1.msra.mxu0 0.0
    %158 = vmatprep.subr.mxu0 0.0
    %159 = vmatpush1.msra.mxu0 0.0
    %160 = vmatprep.subr.mxu0 0.0
    %161 = vmatpush1.msra.mxu0 0.0
    %162 = vmatprep.subr.mxu0 0.0
    %163 = vmatpush1.msra.mxu0 0.0
    %164 = vmatprep.subr.mxu0 0.0
    %165 = vmatpush1.msra.mxu0 0.0
    %166 = vmatprep.subr.mxu0 0.0
    %167 = vmatpush1.msra.mxu0 0.0
    %168 = vmatprep.subr.mxu0 0.0
    %169 = vmatpush1.msra.mxu0 0.0
    %170 = vmatprep.subr.mxu0 0.0
    %171 = vmatpush1.msra.mxu0 0.0
    %172 = vmatprep.subr.mxu0 0.0
    %173 = vmatpush1.msra.mxu0 0.0
    %174 = vmatprep.subr.mxu0 0.0
    %175 = vmatpush1.msra.mxu0 0.0
    %176 = vmatprep.subr.mxu0 0.0
    %177 = vmatpush1.msra.mxu0 0.0
    %178 = vmatprep.subr.mxu0 0.0
    %179 = vmatpush1.msra.mxu0 0.0
    %180 = vmatprep.subr.mxu0 0.0
    %181 = vmatpush1.msra.mxu0 0.0
    %182 = vmatprep.subr.mxu0 0.0
    %183 = vmatpush1.msra.mxu0 0.0
    %184 = vmatprep.subr.mxu0 0.0
    %185 = vmatpush1.msra.mxu0 0.0
    %186 = vmatprep.subr.mxu0 0.0
    %187 = vmatpush1.msra.mxu0 0.0
    %188 = vmatprep.subr.mxu0 0.0
    %189 = vmatpush1.msra.mxu0 0.0
    %190 = vmatprep.mubr.f32.mxu0 0.0
    %191 = vmatmul.mubr.f32.gmra.mrb[0].mxu0 %v54
    %v192 = vpop.f32.mrb[0].mxu0
    %v193 = vpop.f32.mrb[0].mxu0
    %v194 = vadd.f32 %v49, %v193
    %195 = vdwg.mxu0
    %v196 = vxor.u32 %v194, 2147483648
    %v197 = vmul.f32 %v196, 1.442695
    %v198 = vpow.pop %v197
    %v199 = vadd.f32 %v198, 1.0
    %v200 = vrcp.pop %v199
    %v201 = vmul.f32 1.0, %v200
    %v202 = vmul.f32 %v124, %v201
    %v203 = vld [vmem:[%s3] sm:$0xff]
    %v204 = vld [vmem:[%s3 + $0x8] sm:$0xff]
    %v205 = vld [vmem:[%s3 + $0x10] sm:$0xff]
    %v206 = vld [vmem:[%s3 + $0x18] sm:$0xff]
    %v207 = vld [vmem:[%s3 + $0x20] sm:$0xff]
    %v208 = vld [vmem:[%s3 + $0x28] sm:$0xff]
    %v209 = vld [vmem:[%s3 + $0x30] sm:$0xff]
    %v210 = vld [vmem:[%s3 + $0x38] sm:$0xff]
    %v211 = vld [vmem:[%s3 + $0x40] sm:$0xff]
    %v212 = vld [vmem:[%s3 + $0x48] sm:$0xff]
    %v213 = vld [vmem:[%s3 + $0x50] sm:$0xff]
    %v214 = vld [vmem:[%s3 + $0x58] sm:$0xff]
    %v215 = vld [vmem:[%s3 + $0x60] sm:$0xff]
    %v216 = vld [vmem:[%s3 + $0x68] sm:$0xff]
    %v217 = vld [vmem:[%s3 + $0x70] sm:$0xff]
    %v218 = vld [vmem:[%s3 + $0x78] sm:$0xff]
    %v219 = vld [vmem:[%s4] sm:$0x1]
    %v221 = vlaneseq
    %v222 = vshrl.u32 %v221, 7
    %v223 = vsub.s32 0, %v222
    %v224 = vrot.slane %v219, %v223
    %226 = vmatprep.subr.mxu0 0.0
    %227 = vmatpush1.msra.mxu0 %v203
    %228 = vmatprep.subr.mxu0 0.0
    %229 = vmatpush1.msra.mxu0 %v204
    %230 = vmatprep.subr.mxu0 0.0
    %231 = vmatpush1.msra.mxu0 %v205
    %232 = vmatprep.subr.mxu0 0.0
    %233 = vmatpush1.msra.mxu0 %v206
    %234 = vmatprep.subr.mxu0 0.0
    %235 = vmatpush1.msra.mxu0 %v207
    %236 = vmatprep.subr.mxu0 0.0
    %237 = vmatpush1.msra.mxu0 %v208
    %238 = vmatprep.subr.mxu0 0.0
    %239 = vmatpush1.msra.mxu0 %v209
    %240 = vmatprep.subr.mxu0 0.0
    %241 = vmatpush1.msra.mxu0 %v210
    %242 = vmatprep.subr.mxu0 0.0
    %243 = vmatpush1.msra.mxu0 %v211
    %244 = vmatprep.subr.mxu0 0.0
    %245 = vmatpush1.msra.mxu0 %v212
    %246 = vmatprep.subr.mxu0 0.0
    %247 = vmatpush1.msra.mxu0 %v213
    %248 = vmatprep.subr.mxu0 0.0
    %249 = vmatpush1.msra.mxu0 %v214
    %250 = vmatprep.subr.mxu0 0.0
    %251 = vmatpush1.msra.mxu0 %v215
    %252 = vmatprep.subr.mxu0 0.0
    %253 = vmatpush1.msra.mxu0 %v216
    %254 = vmatprep.subr.mxu0 0.0
    %255 = vmatpush1.msra.mxu0 %v217
    %256 = vmatprep.subr.mxu0 0.0
    %257 = vmatpush1.msra.mxu0 %v218
    %258 = vmatprep.subr.mxu0 0.0
    %259 = vmatpush1.msra.mxu0 0.0
    %260 = vmatprep.subr.mxu0 0.0
    %261 = vmatpush1.msra.mxu0 0.0
    %262 = vmatprep.subr.mxu0 0.0
    %263 = vmatpush1.msra.mxu0 0.0
    %264 = vmatprep.subr.mxu0 0.0
    %265 = vmatpush1.msra.mxu0 0.0
    %266 = vmatprep.subr.mxu0 0.0
    %267 = vmatpush1.msra.mxu0 0.0
    %268 = vmatprep.subr.mxu0 0.0
    %269 = vmatpush1.msra.mxu0 0.0
    %270 = vmatprep.subr.mxu0 0.0
    %271 = vmatpush1.msra.mxu0 0.0
    %272 = vmatprep.subr.mxu0 0.0
    %273 = vmatpush1.msra.mxu0 0.0
    %274 = vmatprep.subr.mxu0 0.0
    %275 = vmatpush1.msra.mxu0 0.0
    %276 = vmatprep.subr.mxu0 0.0
    %277 = vmatpush1.msra.mxu0 0.0
    %278 = vmatprep.subr.mxu0 0.0
    %279 = vmatpush1.msra.mxu0 0.0
    %280 = vmatprep.subr.mxu0 0.0
    %281 = vmatpush1.msra.mxu0 0.0
    %282 = vmatprep.subr.mxu0 0.0
    %283 = vmatpush1.msra.mxu0 0.0
    %284 = vmatprep.subr.mxu0 0.0
    %285 = vmatpush1.msra.mxu0 0.0
    %286 = vmatprep.subr.mxu0 0.0
    %287 = vmatpush1.msra.mxu0 0.0
    %288 = vmatprep.subr.mxu0 0.0
    %289 = vmatpush1.msra.mxu0 0.0
    %290 = vmatprep.mubr.f32.mxu0 0.0
    %291 = vmatmul.mubr.f32.gmra.mrb[0].mxu0 %v202
    %v292 = vpop.f32.mrb[0].mxu0
    %v293 = vadd.f32 %v224, %v292
    %v294 = vpop.f32.mrb[0].mxu0
    %295 = vdwg.mxu0
    %vm296 = vcmask 123904
    %v297 = vsel %vm296, %v293, -inf
    %298 = vmax.xlane.f32.xlu0 %v297
    %v299 = vpop.xlane.xlu0 %298
    %v300 = vsub.f32 %v293, %v299
    %v301 = vmul.f32 %v300, 1.442695
    %v302 = vpow.pop %v301
    %v303 = vsel %vm296, %v302, 0.0
    %304 = vadd.xlane.f32.xlu0 %v303
    %v305 = vpop.xlane.xlu0 %304
    %v306 = vrcp.pop %v305
    %v307 = vmul.f32 %v302, %v306
    %v308 = vsub.f32 0.0, %v307
    %v309 = vadd.f32 %v307, 1e-15
    %v310 = vlog2.pop %v309
    %v311 = vmul.f32 %v310, 0.6931472
    %v312 = vmul.f32 %v308, %v311
    %v313 = vsel %vm296, %v312, 0.0
    %314 = vadd.xlane.f32.xlu0 %v313
    %v315 = vpop.xlane.xlu0 %314
    %v316 = vadd.f32 %v315, 0.0
    %v317 = vsub.f32 0.8, %v307
    %v318 = vmul.f32 %v31, %v307
    %s319 = scalar_lea.vmem %s1, 64
    %v320 = vld [vmem:[%s319] sm:$0xff]
    %v321 = vld [vmem:[%s319 + $0x8] sm:$0xff]
    %v322 = vld [vmem:[%s319 + $0x10] sm:$0xff]
    %v323 = vld [vmem:[%s319 + $0x18] sm:$0xff]
    %v324 = vld [vmem:[%s319 + $0x20] sm:$0xff]
    %v325 = vld [vmem:[%s319 + $0x28] sm:$0xff]
    %v326 = vld [vmem:[%s319 + $0x30] sm:$0xff]
    %v327 = vld [vmem:[%s319 + $0x38] sm:$0xff]
    %s328 = scalar_lea.vmem %s2, 4
    %v329 = vld [vmem:[%s328] sm:$0xf]
    %v331 = vlaneseq
    %v332 = vshrl.u32 %v331, 7
    %v333 = vsub.s32 0, %v332
    %v334 = vrot.slane %v329, %v333
    %v335 = vlaneseq
    %v336 = vshrl.u32 %v335, 7
    %v337 = vsub.s32 1, %v336
    %v338 = vrot.slane %v329, %v337
    %v339 = vlaneseq
    %v340 = vshrl.u32 %v339, 7
    %v341 = vsub.s32 2, %v340
    %v342 = vrot.slane %v329, %v341
    %v343 = vlaneseq
    %v344 = vshrl.u32 %v343, 7
    %v345 = vsub.s32 3, %v344
    %v346 = vrot.slane %v329, %v345
    %v352 = vsel %vm52, %v318, 0
    %354 = vmatprep.subr.mxu0 %v321
    %355 = vmatpush1.msra.mxu0 %v320
    %356 = vmatprep.subr.mxu0 %v325
    %357 = vmatpush1.msra.mxu0 %v324
    %358 = vmatprep.subr.mxu0 0.0
    %359 = vmatpush1.msra.mxu0 0.0
    %360 = vmatprep.subr.mxu0 0.0
    %361 = vmatpush1.msra.mxu0 0.0
    %362 = vmatprep.subr.mxu0 0.0
    %363 = vmatpush1.msra.mxu0 0.0
    %364 = vmatprep.subr.mxu0 0.0
    %365 = vmatpush1.msra.mxu0 0.0
    %366 = vmatprep.subr.mxu0 0.0
    %367 = vmatpush1.msra.mxu0 0.0
    %368 = vmatprep.subr.mxu0 0.0
    %369 = vmatpush1.msra.mxu0 0.0
    %370 = vmatprep.subr.mxu0 0.0
    %371 = vmatpush1.msra.mxu0 0.0
    %372 = vmatprep.subr.mxu0 0.0
    %373 = vmatpush1.msra.mxu0 0.0
    %374 = vmatprep.subr.mxu0 0.0
    %375 = vmatpush1.msra.mxu0 0.0
    %376 = vmatprep.subr.mxu0 0.0
    %377 = vmatpush1.msra.mxu0 0.0
    %378 = vmatprep.subr.mxu0 0.0
    %379 = vmatpush1.msra.mxu0 0.0
    %380 = vmatprep.subr.mxu0 0.0
    %381 = vmatpush1.msra.mxu0 0.0
    %382 = vmatprep.subr.mxu0 0.0
    %383 = vmatpush1.msra.mxu0 0.0
    %384 = vmatprep.subr.mxu0 0.0
    %385 = vmatpush1.msra.mxu0 0.0
    %386 = vmatprep.subr.mxu0 0.0
    %387 = vmatpush1.msra.mxu0 0.0
    %388 = vmatprep.subr.mxu0 0.0
    %389 = vmatpush1.msra.mxu0 0.0
    %390 = vmatprep.subr.mxu0 0.0
    %391 = vmatpush1.msra.mxu0 0.0
    %392 = vmatprep.subr.mxu0 0.0
    %393 = vmatpush1.msra.mxu0 0.0
    %394 = vmatprep.subr.mxu0 0.0
    %395 = vmatpush1.msra.mxu0 0.0
    %396 = vmatprep.subr.mxu0 0.0
    %397 = vmatpush1.msra.mxu0 0.0
    %398 = vmatprep.subr.mxu0 0.0
    %399 = vmatpush1.msra.mxu0 0.0
    %400 = vmatprep.subr.mxu0 0.0
    %401 = vmatpush1.msra.mxu0 0.0
    %402 = vmatprep.subr.mxu0 0.0
    %403 = vmatpush1.msra.mxu0 0.0
    %404 = vmatprep.subr.mxu0 0.0
    %405 = vmatpush1.msra.mxu0 0.0
    %406 = vmatprep.subr.mxu0 0.0
    %407 = vmatpush1.msra.mxu0 0.0
    %408 = vmatprep.subr.mxu0 0.0
    %409 = vmatpush1.msra.mxu0 0.0
    %410 = vmatprep.subr.mxu0 0.0
    %411 = vmatpush1.msra.mxu0 0.0
    %412 = vmatprep.subr.mxu0 0.0
    %413 = vmatpush1.msra.mxu0 0.0
    %414 = vmatprep.subr.mxu0 0.0
    %415 = vmatpush1.msra.mxu0 0.0
    %416 = vmatprep.subr.mxu0 0.0
    %417 = vmatpush1.msra.mxu0 0.0
    %418 = vmatprep.mubr.f32.mxu0 0.0
    %419 = vmatmul.mubr.f32.gmra.mrb[0].mxu0 %v352
    %v420 = vpop.f32.mrb[0].mxu0
    %v421 = vadd.f32 %v334, %v420
    %v422 = vpop.f32.mrb[0].mxu0
    %v423 = vadd.f32 %v338, %v422
    %424 = vdwg.mxu0
    %425 = vmatprep.subr.mxu0 %v323
    %426 = vmatpush1.msra.mxu0 %v322
    %427 = vmatprep.subr.mxu0 %v327
    %428 = vmatpush1.msra.mxu0 %v326
    %429 = vmatprep.subr.mxu0 0.0
    %430 = vmatpush1.msra.mxu0 0.0
    %431 = vmatprep.subr.mxu0 0.0
    %432 = vmatpush1.msra.mxu0 0.0
    %433 = vmatprep.subr.mxu0 0.0
    %434 = vmatpush1.msra.mxu0 0.0
    %435 = vmatprep.subr.mxu0 0.0
    %436 = vmatpush1.msra.mxu0 0.0
    %437 = vmatprep.subr.mxu0 0.0
    %438 = vmatpush1.msra.mxu0 0.0
    %439 = vmatprep.subr.mxu0 0.0
    %440 = vmatpush1.msra.mxu0 0.0
    %441 = vmatprep.subr.mxu0 0.0
    %442 = vmatpush1.msra.mxu0 0.0
    %443 = vmatprep.subr.mxu0 0.0
    %444 = vmatpush1.msra.mxu0 0.0
    %445 = vmatprep.subr.mxu0 0.0
    %446 = vmatpush1.msra.mxu0 0.0
    %447 = vmatprep.subr.mxu0 0.0
    %448 = vmatpush1.msra.mxu0 0.0
    %449 = vmatprep.subr.mxu0 0.0
    %450 = vmatpush1.msra.mxu0 0.0
    %451 = vmatprep.subr.mxu0 0.0
    %452 = vmatpush1.msra.mxu0 0.0
    %453 = vmatprep.subr.mxu0 0.0
    %454 = vmatpush1.msra.mxu0 0.0
    %455 = vmatprep.subr.mxu0 0.0
    %456 = vmatpush1.msra.mxu0 0.0
    %457 = vmatprep.subr.mxu0 0.0
    %458 = vmatpush1.msra.mxu0 0.0
    %459 = vmatprep.subr.mxu0 0.0
    %460 = vmatpush1.msra.mxu0 0.0
    %461 = vmatprep.subr.mxu0 0.0
    %462 = vmatpush1.msra.mxu0 0.0
    %463 = vmatprep.subr.mxu0 0.0
    %464 = vmatpush1.msra.mxu0 0.0
    %465 = vmatprep.subr.mxu0 0.0
    %466 = vmatpush1.msra.mxu0 0.0
    %467 = vmatprep.subr.mxu0 0.0
    %468 = vmatpush1.msra.mxu0 0.0
    %469 = vmatprep.subr.mxu0 0.0
    %470 = vmatpush1.msra.mxu0 0.0
    %471 = vmatprep.subr.mxu0 0.0
    %472 = vmatpush1.msra.mxu0 0.0
    %473 = vmatprep.subr.mxu0 0.0
    %474 = vmatpush1.msra.mxu0 0.0
    %475 = vmatprep.subr.mxu0 0.0
    %476 = vmatpush1.msra.mxu0 0.0
    %477 = vmatprep.subr.mxu0 0.0
    %478 = vmatpush1.msra.mxu0 0.0
    %479 = vmatprep.subr.mxu0 0.0
    %480 = vmatpush1.msra.mxu0 0.0
    %481 = vmatprep.subr.mxu0 0.0
    %482 = vmatpush1.msra.mxu0 0.0
    %483 = vmatprep.subr.mxu0 0.0
    %484 = vmatpush1.msra.mxu0 0.0
    %485 = vmatprep.subr.mxu0 0.0
    %486 = vmatpush1.msra.mxu0 0.0
    %487 = vmatprep.subr.mxu0 0.0
    %488 = vmatpush1.msra.mxu0 0.0
    %489 = vmatprep.mubr.f32.mxu0 0.0
    %490 = vmatmul.mubr.f32.gmra.mrb[0].mxu0 %v352
    %v491 = vpop.f32.mrb[0].mxu0
    %v492 = vadd.f32 %v342, %v491
    %v493 = vpop.f32.mrb[0].mxu0
    %v494 = vadd.f32 %v346, %v493
    %495 = vdwg.mxu0
    %v496 = vxor.u32 %v492, 2147483648
    %v497 = vmul.f32 %v496, 1.442695
    %v498 = vpow.pop %v497
    %v499 = vadd.f32 %v498, 1.0
    %v500 = vrcp.pop %v499
    %v501 = vmul.f32 1.0, %v500
    %v502 = vmul.f32 %v421, %v501
    %v503 = vxor.u32 %v494, 2147483648
    %v504 = vmul.f32 %v503, 1.442695
    %v505 = vpow.pop %v504
    %v506 = vadd.f32 %v505, 1.0
    %v507 = vrcp.pop %v506
    %v508 = vmul.f32 1.0, %v507
    %v509 = vmul.f32 %v423, %v508
    %v510 = vmax.f32 %v502, 0.0
    %v511 = vadd.f32 %v510, 0.0
    %s512 = scalar_lea.vmem %s3, 128
    %v513 = vld [vmem:[%s512] sm:$0xff]
    %v514 = vld [vmem:[%s512 + $0x8] sm:$0xff]
    %v515 = vld [vmem:[%s512 + $0x10] sm:$0xff]
    %v516 = vld [vmem:[%s512 + $0x18] sm:$0xff]
    %v517 = vld [vmem:[%s512 + $0x20] sm:$0xff]
    %v518 = vld [vmem:[%s512 + $0x28] sm:$0xff]
    %v519 = vld [vmem:[%s512 + $0x30] sm:$0xff]
    %v520 = vld [vmem:[%s512 + $0x38] sm:$0xff]
    %v521 = vld [vmem:[%s512 + $0x40] sm:$0xff]
    %v522 = vld [vmem:[%s512 + $0x48] sm:$0xff]
    %v523 = vld [vmem:[%s512 + $0x50] sm:$0xff]
    %v524 = vld [vmem:[%s512 + $0x58] sm:$0xff]
    %v525 = vld [vmem:[%s512 + $0x60] sm:$0xff]
    %v526 = vld [vmem:[%s512 + $0x68] sm:$0xff]
    %v527 = vld [vmem:[%s512 + $0x70] sm:$0xff]
    %v528 = vld [vmem:[%s512 + $0x78] sm:$0xff]
    %s529 = scalar_lea.vmem %s4, 1
    %v530 = vld [vmem:[%s529] sm:$0x1]
    %v532 = vlaneseq
    %v533 = vshrl.u32 %v532, 7
    %v534 = vsub.s32 0, %v533
    %v535 = vrot.slane %v530, %v534
    %537 = vmatprep.subr.mxu0 0.0
    %538 = vmatpush1.msra.mxu0 %v513
    %539 = vmatprep.subr.mxu0 0.0
    %540 = vmatpush1.msra.mxu0 %v514
    %541 = vmatprep.subr.mxu0 0.0
    %542 = vmatpush1.msra.mxu0 %v515
    %543 = vmatprep.subr.mxu0 0.0
    %544 = vmatpush1.msra.mxu0 %v516
    %545 = vmatprep.subr.mxu0 0.0
    %546 = vmatpush1.msra.mxu0 %v517
    %547 = vmatprep.subr.mxu0 0.0
    %548 = vmatpush1.msra.mxu0 %v518
    %549 = vmatprep.subr.mxu0 0.0
    %550 = vmatpush1.msra.mxu0 %v519
    %551 = vmatprep.subr.mxu0 0.0
    %552 = vmatpush1.msra.mxu0 %v520
    %553 = vmatprep.subr.mxu0 0.0
    %554 = vmatpush1.msra.mxu0 %v521
    %555 = vmatprep.subr.mxu0 0.0
    %556 = vmatpush1.msra.mxu0 %v522
    %557 = vmatprep.subr.mxu0 0.0
    %558 = vmatpush1.msra.mxu0 %v523
    %559 = vmatprep.subr.mxu0 0.0
    %560 = vmatpush1.msra.mxu0 %v524
    %561 = vmatprep.subr.mxu0 0.0
    %562 = vmatpush1.msra.mxu0 %v525
    %563 = vmatprep.subr.mxu0 0.0
    %564 = vmatpush1.msra.mxu0 %v526
    %565 = vmatprep.subr.mxu0 0.0
    %566 = vmatpush1.msra.mxu0 %v527
    %567 = vmatprep.subr.mxu0 0.0
    %568 = vmatpush1.msra.mxu0 %v528
    %569 = vmatprep.subr.mxu0 0.0
    %570 = vmatpush1.msra.mxu0 0.0
    %571 = vmatprep.subr.mxu0 0.0
    %572 = vmatpush1.msra.mxu0 0.0
    %573 = vmatprep.subr.mxu0 0.0
    %574 = vmatpush1.msra.mxu0 0.0
    %575 = vmatprep.subr.mxu0 0.0
    %576 = vmatpush1.msra.mxu0 0.0
    %577 = vmatprep.subr.mxu0 0.0
    %578 = vmatpush1.msra.mxu0 0.0
    %579 = vmatprep.subr.mxu0 0.0
    %580 = vmatpush1.msra.mxu0 0.0
    %581 = vmatprep.subr.mxu0 0.0
    %582 = vmatpush1.msra.mxu0 0.0
    %583 = vmatprep.subr.mxu0 0.0
    %584 = vmatpush1.msra.mxu0 0.0
    %585 = vmatprep.subr.mxu0 0.0
    %586 = vmatpush1.msra.mxu0 0.0
    %587 = vmatprep.subr.mxu0 0.0
    %588 = vmatpush1.msra.mxu0 0.0
    %589 = vmatprep.subr.mxu0 0.0
    %590 = vmatpush1.msra.mxu0 0.0
    %591 = vmatprep.subr.mxu0 0.0
    %592 = vmatpush1.msra.mxu0 0.0
    %593 = vmatprep.subr.mxu0 0.0
    %594 = vmatpush1.msra.mxu0 0.0
    %595 = vmatprep.subr.mxu0 0.0
    %596 = vmatpush1.msra.mxu0 0.0
    %597 = vmatprep.subr.mxu0 0.0
    %598 = vmatpush1.msra.mxu0 0.0
    %599 = vmatprep.subr.mxu0 0.0
    %600 = vmatpush1.msra.mxu0 0.0
    %601 = vmatprep.mubr.f32.mxu0 0.0
    %602 = vmatmul.mubr.f32.gmra.mrb[0].mxu0 %v509
    %v603 = vpop.f32.mrb[0].mxu0
    %v604 = vadd.f32 %v535, %v603
    %v605 = vpop.f32.mrb[0].mxu0
    %606 = vdwg.mxu0
    %v607 = vmul.f32 %v604, %v317
    %v608 = vsel %vm296, %v607, -inf
    %609 = vmax.xlane.f32.xlu0 %v608
    %v610 = vpop.xlane.xlu0 %609
    %v611 = vsub.f32 %v607, %v610
    %v612 = vmul.f32 %v611, 1.442695
    %v613 = vpow.pop %v612
    %v614 = vsel %vm296, %v613, 0.0
    %615 = vadd.xlane.f32.xlu0 %v614
    %v616 = vpop.xlane.xlu0 %615
    %v617 = vrcp.pop %v616
    %v618 = vmul.f32 %v613, %v617
    %v619 = vsub.f32 0.0, %v618
    %v620 = vadd.f32 %v618, 1e-15
    %v621 = vlog2.pop %v620
    %v622 = vmul.f32 %v621, 0.6931472
    %v623 = vmul.f32 %v619, %v622
    %v624 = vsel %vm296, %v623, 0.0
    %625 = vadd.xlane.f32.xlu0 %v624
    %v626 = vpop.xlane.xlu0 %625
    %v627 = vadd.f32 %v316, %v626
    %v628 = vsub.f32 0.8, %v618
    %v629 = vmul.f32 %v317, %v628
    %v630 = vmul.f32 %v31, %v618
    %s631 = scalar_lea.vmem %s1, 128
    %v632 = vld [vmem:[%s631] sm:$0xff]
    %v633 = vld [vmem:[%s631 + $0x8] sm:$0xff]
    %v634 = vld [vmem:[%s631 + $0x10] sm:$0xff]
    %v635 = vld [vmem:[%s631 + $0x18] sm:$0xff]
    %v636 = vld [vmem:[%s631 + $0x20] sm:$0xff]
    %v637 = vld [vmem:[%s631 + $0x28] sm:$0xff]
    %v638 = vld [vmem:[%s631 + $0x30] sm:$0xff]
    %v639 = vld [vmem:[%s631 + $0x38] sm:$0xff]
    %s640 = scalar_lea.vmem %s2, 8
    %v641 = vld [vmem:[%s640] sm:$0xf]
    %v643 = vlaneseq
    %v644 = vshrl.u32 %v643, 7
    %v645 = vsub.s32 0, %v644
    %v646 = vrot.slane %v641, %v645
    %v647 = vlaneseq
    %v648 = vshrl.u32 %v647, 7
    %v649 = vsub.s32 1, %v648
    %v650 = vrot.slane %v641, %v649
    %v651 = vlaneseq
    %v652 = vshrl.u32 %v651, 7
    %v653 = vsub.s32 2, %v652
    %v654 = vrot.slane %v641, %v653
    %v655 = vlaneseq
    %v656 = vshrl.u32 %v655, 7
    %v657 = vsub.s32 3, %v656
    %v658 = vrot.slane %v641, %v657
    %v664 = vsel %vm52, %v630, 0
    %666 = vmatprep.subr.mxu0 %v633
    %667 = vmatpush1.msra.mxu0 %v632
    %668 = vmatprep.subr.mxu0 %v637
    %669 = vmatpush1.msra.mxu0 %v636
    %670 = vmatprep.subr.mxu0 0.0
    %671 = vmatpush1.msra.mxu0 0.0
    %672 = vmatprep.subr.mxu0 0.0
    %673 = vmatpush1.msra.mxu0 0.0
    %674 = vmatprep.subr.mxu0 0.0
    %675 = vmatpush1.msra.mxu0 0.0
    %676 = vmatprep.subr.mxu0 0.0
    %677 = vmatpush1.msra.mxu0 0.0
    %678 = vmatprep.subr.mxu0 0.0
    %679 = vmatpush1.msra.mxu0 0.0
    %680 = vmatprep.subr.mxu0 0.0
    %681 = vmatpush1.msra.mxu0 0.0
    %682 = vmatprep.subr.mxu0 0.0
    %683 = vmatpush1.msra.mxu0 0.0
    %684 = vmatprep.subr.mxu0 0.0
    %685 = vmatpush1.msra.mxu0 0.0
    %686 = vmatprep.subr.mxu0 0.0
    %687 = vmatpush1.msra.mxu0 0.0
    %688 = vmatprep.subr.mxu0 0.0
    %689 = vmatpush1.msra.mxu0 0.0
    %690 = vmatprep.subr.mxu0 0.0
    %691 = vmatpush1.msra.mxu0 0.0
    %692 = vmatprep.subr.mxu0 0.0
    %693 = vmatpush1.msra.mxu0 0.0
    %694 = vmatprep.subr.mxu0 0.0
    %695 = vmatpush1.msra.mxu0 0.0
    %696 = vmatprep.subr.mxu0 0.0
    %697 = vmatpush1.msra.mxu0 0.0
    %698 = vmatprep.subr.mxu0 0.0
    %699 = vmatpush1.msra.mxu0 0.0
    %700 = vmatprep.subr.mxu0 0.0
    %701 = vmatpush1.msra.mxu0 0.0
    %702 = vmatprep.subr.mxu0 0.0
    %703 = vmatpush1.msra.mxu0 0.0
    %704 = vmatprep.subr.mxu0 0.0
    %705 = vmatpush1.msra.mxu0 0.0
    %706 = vmatprep.subr.mxu0 0.0
    %707 = vmatpush1.msra.mxu0 0.0
    %708 = vmatprep.subr.mxu0 0.0
    %709 = vmatpush1.msra.mxu0 0.0
    %710 = vmatprep.subr.mxu0 0.0
    %711 = vmatpush1.msra.mxu0 0.0
    %712 = vmatprep.subr.mxu0 0.0
    %713 = vmatpush1.msra.mxu0 0.0
    %714 = vmatprep.subr.mxu0 0.0
    %715 = vmatpush1.msra.mxu0 0.0
    %716 = vmatprep.subr.mxu0 0.0
    %717 = vmatpush1.msra.mxu0 0.0
    %718 = vmatprep.subr.mxu0 0.0
    %719 = vmatpush1.msra.mxu0 0.0
    %720 = vmatprep.subr.mxu0 0.0
    %721 = vmatpush1.msra.mxu0 0.0
    %722 = vmatprep.subr.mxu0 0.0
    %723 = vmatpush1.msra.mxu0 0.0
    %724 = vmatprep.subr.mxu0 0.0
    %725 = vmatpush1.msra.mxu0 0.0
    %726 = vmatprep.subr.mxu0 0.0
    %727 = vmatpush1.msra.mxu0 0.0
    %728 = vmatprep.subr.mxu0 0.0
    %729 = vmatpush1.msra.mxu0 0.0
    %730 = vmatprep.mubr.f32.mxu0 0.0
    %731 = vmatmul.mubr.f32.gmra.mrb[0].mxu0 %v664
    %v732 = vpop.f32.mrb[0].mxu0
    %v733 = vadd.f32 %v646, %v732
    %v734 = vpop.f32.mrb[0].mxu0
    %v735 = vadd.f32 %v650, %v734
    %736 = vdwg.mxu0
    %737 = vmatprep.subr.mxu0 %v635
    %738 = vmatpush1.msra.mxu0 %v634
    %739 = vmatprep.subr.mxu0 %v639
    %740 = vmatpush1.msra.mxu0 %v638
    %741 = vmatprep.subr.mxu0 0.0
    %742 = vmatpush1.msra.mxu0 0.0
    %743 = vmatprep.subr.mxu0 0.0
    %744 = vmatpush1.msra.mxu0 0.0
    %745 = vmatprep.subr.mxu0 0.0
    %746 = vmatpush1.msra.mxu0 0.0
    %747 = vmatprep.subr.mxu0 0.0
    %748 = vmatpush1.msra.mxu0 0.0
    %749 = vmatprep.subr.mxu0 0.0
    %750 = vmatpush1.msra.mxu0 0.0
    %751 = vmatprep.subr.mxu0 0.0
    %752 = vmatpush1.msra.mxu0 0.0
    %753 = vmatprep.subr.mxu0 0.0
    %754 = vmatpush1.msra.mxu0 0.0
    %755 = vmatprep.subr.mxu0 0.0
    %756 = vmatpush1.msra.mxu0 0.0
    %757 = vmatprep.subr.mxu0 0.0
    %758 = vmatpush1.msra.mxu0 0.0
    %759 = vmatprep.subr.mxu0 0.0
    %760 = vmatpush1.msra.mxu0 0.0
    %761 = vmatprep.subr.mxu0 0.0
    %762 = vmatpush1.msra.mxu0 0.0
    %763 = vmatprep.subr.mxu0 0.0
    %764 = vmatpush1.msra.mxu0 0.0
    %765 = vmatprep.subr.mxu0 0.0
    %766 = vmatpush1.msra.mxu0 0.0
    %767 = vmatprep.subr.mxu0 0.0
    %768 = vmatpush1.msra.mxu0 0.0
    %769 = vmatprep.subr.mxu0 0.0
    %770 = vmatpush1.msra.mxu0 0.0
    %771 = vmatprep.subr.mxu0 0.0
    %772 = vmatpush1.msra.mxu0 0.0
    %773 = vmatprep.subr.mxu0 0.0
    %774 = vmatpush1.msra.mxu0 0.0
    %775 = vmatprep.subr.mxu0 0.0
    %776 = vmatpush1.msra.mxu0 0.0
    %777 = vmatprep.subr.mxu0 0.0
    %778 = vmatpush1.msra.mxu0 0.0
    %779 = vmatprep.subr.mxu0 0.0
    %780 = vmatpush1.msra.mxu0 0.0
    %781 = vmatprep.subr.mxu0 0.0
    %782 = vmatpush1.msra.mxu0 0.0
    %783 = vmatprep.subr.mxu0 0.0
    %784 = vmatpush1.msra.mxu0 0.0
    %785 = vmatprep.subr.mxu0 0.0
    %786 = vmatpush1.msra.mxu0 0.0
    %787 = vmatprep.subr.mxu0 0.0
    %788 = vmatpush1.msra.mxu0 0.0
    %789 = vmatprep.subr.mxu0 0.0
    %790 = vmatpush1.msra.mxu0 0.0
    %791 = vmatprep.subr.mxu0 0.0
    %792 = vmatpush1.msra.mxu0 0.0
    %793 = vmatprep.subr.mxu0 0.0
    %794 = vmatpush1.msra.mxu0 0.0
    %795 = vmatprep.subr.mxu0 0.0
    %796 = vmatpush1.msra.mxu0 0.0
    %797 = vmatprep.subr.mxu0 0.0
    %798 = vmatpush1.msra.mxu0 0.0
    %799 = vmatprep.subr.mxu0 0.0
    %800 = vmatpush1.msra.mxu0 0.0
    %801 = vmatprep.mubr.f32.mxu0 0.0
    %802 = vmatmul.mubr.f32.gmra.mrb[0].mxu0 %v664
    %v803 = vpop.f32.mrb[0].mxu0
    %v804 = vadd.f32 %v654, %v803
    %v805 = vpop.f32.mrb[0].mxu0
    %v806 = vadd.f32 %v658, %v805
    %807 = vdwg.mxu0
    %v808 = vxor.u32 %v804, 2147483648
    %v809 = vmul.f32 %v808, 1.442695
    %v810 = vpow.pop %v809
    %v811 = vadd.f32 %v810, 1.0
    %v812 = vrcp.pop %v811
    %v813 = vmul.f32 1.0, %v812
    %v814 = vmul.f32 %v733, %v813
    %v815 = vxor.u32 %v806, 2147483648
    %v816 = vmul.f32 %v815, 1.442695
    %v817 = vpow.pop %v816
    %v818 = vadd.f32 %v817, 1.0
    %v819 = vrcp.pop %v818
    %v820 = vmul.f32 1.0, %v819
    %v821 = vmul.f32 %v735, %v820
    %v822 = vmax.f32 %v814, 0.0
    %v823 = vadd.f32 %v511, %v822
    %s824 = scalar_lea.vmem %s3, 256
    %v825 = vld [vmem:[%s824] sm:$0xff]
    %v826 = vld [vmem:[%s824 + $0x8] sm:$0xff]
    %v827 = vld [vmem:[%s824 + $0x10] sm:$0xff]
    %v828 = vld [vmem:[%s824 + $0x18] sm:$0xff]
    %v829 = vld [vmem:[%s824 + $0x20] sm:$0xff]
    %v830 = vld [vmem:[%s824 + $0x28] sm:$0xff]
    %v831 = vld [vmem:[%s824 + $0x30] sm:$0xff]
    %v832 = vld [vmem:[%s824 + $0x38] sm:$0xff]
    %v833 = vld [vmem:[%s824 + $0x40] sm:$0xff]
    %v834 = vld [vmem:[%s824 + $0x48] sm:$0xff]
    %v835 = vld [vmem:[%s824 + $0x50] sm:$0xff]
    %v836 = vld [vmem:[%s824 + $0x58] sm:$0xff]
    %v837 = vld [vmem:[%s824 + $0x60] sm:$0xff]
    %v838 = vld [vmem:[%s824 + $0x68] sm:$0xff]
    %v839 = vld [vmem:[%s824 + $0x70] sm:$0xff]
    %v840 = vld [vmem:[%s824 + $0x78] sm:$0xff]
    %s841 = scalar_lea.vmem %s4, 2
    %v842 = vld [vmem:[%s841] sm:$0x1]
    %v844 = vlaneseq
    %v845 = vshrl.u32 %v844, 7
    %v846 = vsub.s32 0, %v845
    %v847 = vrot.slane %v842, %v846
    %849 = vmatprep.subr.mxu0 0.0
    %850 = vmatpush1.msra.mxu0 %v825
    %851 = vmatprep.subr.mxu0 0.0
    %852 = vmatpush1.msra.mxu0 %v826
    %853 = vmatprep.subr.mxu0 0.0
    %854 = vmatpush1.msra.mxu0 %v827
    %855 = vmatprep.subr.mxu0 0.0
    %856 = vmatpush1.msra.mxu0 %v828
    %857 = vmatprep.subr.mxu0 0.0
    %858 = vmatpush1.msra.mxu0 %v829
    %859 = vmatprep.subr.mxu0 0.0
    %860 = vmatpush1.msra.mxu0 %v830
    %861 = vmatprep.subr.mxu0 0.0
    %862 = vmatpush1.msra.mxu0 %v831
    %863 = vmatprep.subr.mxu0 0.0
    %864 = vmatpush1.msra.mxu0 %v832
    %865 = vmatprep.subr.mxu0 0.0
    %866 = vmatpush1.msra.mxu0 %v833
    %867 = vmatprep.subr.mxu0 0.0
    %868 = vmatpush1.msra.mxu0 %v834
    %869 = vmatprep.subr.mxu0 0.0
    %870 = vmatpush1.msra.mxu0 %v835
    %871 = vmatprep.subr.mxu0 0.0
    %872 = vmatpush1.msra.mxu0 %v836
    %873 = vmatprep.subr.mxu0 0.0
    %874 = vmatpush1.msra.mxu0 %v837
    %875 = vmatprep.subr.mxu0 0.0
    %876 = vmatpush1.msra.mxu0 %v838
    %877 = vmatprep.subr.mxu0 0.0
    %878 = vmatpush1.msra.mxu0 %v839
    %879 = vmatprep.subr.mxu0 0.0
    %880 = vmatpush1.msra.mxu0 %v840
    %881 = vmatprep.subr.mxu0 0.0
    %882 = vmatpush1.msra.mxu0 0.0
    %883 = vmatprep.subr.mxu0 0.0
    %884 = vmatpush1.msra.mxu0 0.0
    %885 = vmatprep.subr.mxu0 0.0
    %886 = vmatpush1.msra.mxu0 0.0
    %887 = vmatprep.subr.mxu0 0.0
    %888 = vmatpush1.msra.mxu0 0.0
    %889 = vmatprep.subr.mxu0 0.0
    %890 = vmatpush1.msra.mxu0 0.0
    %891 = vmatprep.subr.mxu0 0.0
    %892 = vmatpush1.msra.mxu0 0.0
    %893 = vmatprep.subr.mxu0 0.0
    %894 = vmatpush1.msra.mxu0 0.0
    %895 = vmatprep.subr.mxu0 0.0
    %896 = vmatpush1.msra.mxu0 0.0
    %897 = vmatprep.subr.mxu0 0.0
    %898 = vmatpush1.msra.mxu0 0.0
    %899 = vmatprep.subr.mxu0 0.0
    %900 = vmatpush1.msra.mxu0 0.0
    %901 = vmatprep.subr.mxu0 0.0
    %902 = vmatpush1.msra.mxu0 0.0
    %903 = vmatprep.subr.mxu0 0.0
    %904 = vmatpush1.msra.mxu0 0.0
    %905 = vmatprep.subr.mxu0 0.0
    %906 = vmatpush1.msra.mxu0 0.0
    %907 = vmatprep.subr.mxu0 0.0
    %908 = vmatpush1.msra.mxu0 0.0
    %909 = vmatprep.subr.mxu0 0.0
    %910 = vmatpush1.msra.mxu0 0.0
    %911 = vmatprep.subr.mxu0 0.0
    %912 = vmatpush1.msra.mxu0 0.0
    %913 = vmatprep.mubr.f32.mxu0 0.0
    %914 = vmatmul.mubr.f32.gmra.mrb[0].mxu0 %v821
    %v915 = vpop.f32.mrb[0].mxu0
    %v916 = vadd.f32 %v847, %v915
    %v917 = vpop.f32.mrb[0].mxu0
    %918 = vdwg.mxu0
    %v919 = vmul.f32 %v916, %v629
    %v920 = vsel %vm296, %v919, -inf
    %921 = vmax.xlane.f32.xlu0 %v920
    %v922 = vpop.xlane.xlu0 %921
    %v923 = vsub.f32 %v919, %v922
    %v924 = vmul.f32 %v923, 1.442695
    %v925 = vpow.pop %v924
    %v926 = vsel %vm296, %v925, 0.0
    %927 = vadd.xlane.f32.xlu0 %v926
    %v928 = vpop.xlane.xlu0 %927
    %v929 = vrcp.pop %v928
    %v930 = vmul.f32 %v925, %v929
    %v931 = vsub.f32 0.0, %v930
    %v932 = vadd.f32 %v930, 1e-15
    %v933 = vlog2.pop %v932
    %v934 = vmul.f32 %v933, 0.6931472
    %v935 = vmul.f32 %v931, %v934
    %v936 = vsel %vm296, %v935, 0.0
    %937 = vadd.xlane.f32.xlu0 %v936
    %v938 = vpop.xlane.xlu0 %937
    %v939 = vadd.f32 %v627, %v938
    %v940 = vmul.f32 %v31, %v930
    %s941 = scalar_lea.vmem %s1, 192
    %v942 = vld [vmem:[%s941] sm:$0xff]
    %v943 = vld [vmem:[%s941 + $0x8] sm:$0xff]
    %v944 = vld [vmem:[%s941 + $0x10] sm:$0xff]
    %v945 = vld [vmem:[%s941 + $0x18] sm:$0xff]
    %v946 = vld [vmem:[%s941 + $0x20] sm:$0xff]
    %v947 = vld [vmem:[%s941 + $0x28] sm:$0xff]
    %v948 = vld [vmem:[%s941 + $0x30] sm:$0xff]
    %v949 = vld [vmem:[%s941 + $0x38] sm:$0xff]
    %s950 = scalar_lea.vmem %s2, 12
    %v951 = vld [vmem:[%s950] sm:$0xf]
    %v953 = vlaneseq
    %v954 = vshrl.u32 %v953, 7
    %v955 = vsub.s32 0, %v954
    %v956 = vrot.slane %v951, %v955
    %v957 = vlaneseq
    %v958 = vshrl.u32 %v957, 7
    %v959 = vsub.s32 2, %v958
    %v960 = vrot.slane %v951, %v959
    %v964 = vsel %vm52, %v940, 0
    %966 = vmatprep.subr.mxu0 %v943
    %967 = vmatpush1.msra.mxu0 %v942
    %968 = vmatprep.subr.mxu0 %v947
    %969 = vmatpush1.msra.mxu0 %v946
    %970 = vmatprep.subr.mxu0 0.0
    %971 = vmatpush1.msra.mxu0 0.0
    %972 = vmatprep.subr.mxu0 0.0
    %973 = vmatpush1.msra.mxu0 0.0
    %974 = vmatprep.subr.mxu0 0.0
    %975 = vmatpush1.msra.mxu0 0.0
    %976 = vmatprep.subr.mxu0 0.0
    %977 = vmatpush1.msra.mxu0 0.0
    %978 = vmatprep.subr.mxu0 0.0
    %979 = vmatpush1.msra.mxu0 0.0
    %980 = vmatprep.subr.mxu0 0.0
    %981 = vmatpush1.msra.mxu0 0.0
    %982 = vmatprep.subr.mxu0 0.0
    %983 = vmatpush1.msra.mxu0 0.0
    %984 = vmatprep.subr.mxu0 0.0
    %985 = vmatpush1.msra.mxu0 0.0
    %986 = vmatprep.subr.mxu0 0.0
    %987 = vmatpush1.msra.mxu0 0.0
    %988 = vmatprep.subr.mxu0 0.0
    %989 = vmatpush1.msra.mxu0 0.0
    %990 = vmatprep.subr.mxu0 0.0
    %991 = vmatpush1.msra.mxu0 0.0
    %992 = vmatprep.subr.mxu0 0.0
    %993 = vmatpush1.msra.mxu0 0.0
    %994 = vmatprep.subr.mxu0 0.0
    %995 = vmatpush1.msra.mxu0 0.0
    %996 = vmatprep.subr.mxu0 0.0
    %997 = vmatpush1.msra.mxu0 0.0
    %998 = vmatprep.subr.mxu0 0.0
    %999 = vmatpush1.msra.mxu0 0.0
    %1000 = vmatprep.subr.mxu0 0.0
    %1001 = vmatpush1.msra.mxu0 0.0
    %1002 = vmatprep.subr.mxu0 0.0
    %1003 = vmatpush1.msra.mxu0 0.0
    %1004 = vmatprep.subr.mxu0 0.0
    %1005 = vmatpush1.msra.mxu0 0.0
    %1006 = vmatprep.subr.mxu0 0.0
    %1007 = vmatpush1.msra.mxu0 0.0
    %1008 = vmatprep.subr.mxu0 0.0
    %1009 = vmatpush1.msra.mxu0 0.0
    %1010 = vmatprep.subr.mxu0 0.0
    %1011 = vmatpush1.msra.mxu0 0.0
    %1012 = vmatprep.subr.mxu0 0.0
    %1013 = vmatpush1.msra.mxu0 0.0
    %1014 = vmatprep.subr.mxu0 0.0
    %1015 = vmatpush1.msra.mxu0 0.0
    %1016 = vmatprep.subr.mxu0 0.0
    %1017 = vmatpush1.msra.mxu0 0.0
    %1018 = vmatprep.subr.mxu0 0.0
    %1019 = vmatpush1.msra.mxu0 0.0
    %1020 = vmatprep.subr.mxu0 0.0
    %1021 = vmatpush1.msra.mxu0 0.0
    %1022 = vmatprep.subr.mxu0 0.0
    %1023 = vmatpush1.msra.mxu0 0.0
    %1024 = vmatprep.subr.mxu0 0.0
    %1025 = vmatpush1.msra.mxu0 0.0
    %1026 = vmatprep.subr.mxu0 0.0
    %1027 = vmatpush1.msra.mxu0 0.0
    %1028 = vmatprep.subr.mxu0 0.0
    %1029 = vmatpush1.msra.mxu0 0.0
    %1030 = vmatprep.mubr.f32.mxu0 0.0
    %1031 = vmatmul.mubr.f32.gmra.mrb[0].mxu0 %v964
    %v1032 = vpop.f32.mrb[0].mxu0
    %v1033 = vadd.f32 %v956, %v1032
    %v1034 = vpop.f32.mrb[0].mxu0
    %1035 = vdwg.mxu0
    %1036 = vmatprep.subr.mxu0 %v945
    %1037 = vmatpush1.msra.mxu0 %v944
    %1038 = vmatprep.subr.mxu0 %v949
    %1039 = vmatpush1.msra.mxu0 %v948
    %1040 = vmatprep.subr.mxu0 0.0
    %1041 = vmatpush1.msra.mxu0 0.0
    %1042 = vmatprep.subr.mxu0 0.0
    %1043 = vmatpush1.msra.mxu0 0.0
    %1044 = vmatprep.subr.mxu0 0.0
    %1045 = vmatpush1.msra.mxu0 0.0
    %1046 = vmatprep.subr.mxu0 0.0
    %1047 = vmatpush1.msra.mxu0 0.0
    %1048 = vmatprep.subr.mxu0 0.0
    %1049 = vmatpush1.msra.mxu0 0.0
    %1050 = vmatprep.subr.mxu0 0.0
    %1051 = vmatpush1.msra.mxu0 0.0
    %1052 = vmatprep.subr.mxu0 0.0
    %1053 = vmatpush1.msra.mxu0 0.0
    %1054 = vmatprep.subr.mxu0 0.0
    %1055 = vmatpush1.msra.mxu0 0.0
    %1056 = vmatprep.subr.mxu0 0.0
    %1057 = vmatpush1.msra.mxu0 0.0
    %1058 = vmatprep.subr.mxu0 0.0
    %1059 = vmatpush1.msra.mxu0 0.0
    %1060 = vmatprep.subr.mxu0 0.0
    %1061 = vmatpush1.msra.mxu0 0.0
    %1062 = vmatprep.subr.mxu0 0.0
    %1063 = vmatpush1.msra.mxu0 0.0
    %1064 = vmatprep.subr.mxu0 0.0
    %1065 = vmatpush1.msra.mxu0 0.0
    %1066 = vmatprep.subr.mxu0 0.0
    %1067 = vmatpush1.msra.mxu0 0.0
    %1068 = vmatprep.subr.mxu0 0.0
    %1069 = vmatpush1.msra.mxu0 0.0
    %1070 = vmatprep.subr.mxu0 0.0
    %1071 = vmatpush1.msra.mxu0 0.0
    %1072 = vmatprep.subr.mxu0 0.0
    %1073 = vmatpush1.msra.mxu0 0.0
    %1074 = vmatprep.subr.mxu0 0.0
    %1075 = vmatpush1.msra.mxu0 0.0
    %1076 = vmatprep.subr.mxu0 0.0
    %1077 = vmatpush1.msra.mxu0 0.0
    %1078 = vmatprep.subr.mxu0 0.0
    %1079 = vmatpush1.msra.mxu0 0.0
    %1080 = vmatprep.subr.mxu0 0.0
    %1081 = vmatpush1.msra.mxu0 0.0
    %1082 = vmatprep.subr.mxu0 0.0
    %1083 = vmatpush1.msra.mxu0 0.0
    %1084 = vmatprep.subr.mxu0 0.0
    %1085 = vmatpush1.msra.mxu0 0.0
    %1086 = vmatprep.subr.mxu0 0.0
    %1087 = vmatpush1.msra.mxu0 0.0
    %1088 = vmatprep.subr.mxu0 0.0
    %1089 = vmatpush1.msra.mxu0 0.0
    %1090 = vmatprep.subr.mxu0 0.0
    %1091 = vmatpush1.msra.mxu0 0.0
    %1092 = vmatprep.subr.mxu0 0.0
    %1093 = vmatpush1.msra.mxu0 0.0
    %1094 = vmatprep.subr.mxu0 0.0
    %1095 = vmatpush1.msra.mxu0 0.0
    %1096 = vmatprep.subr.mxu0 0.0
    %1097 = vmatpush1.msra.mxu0 0.0
    %1098 = vmatprep.subr.mxu0 0.0
    %1099 = vmatpush1.msra.mxu0 0.0
    %1100 = vmatprep.mubr.f32.mxu0 0.0
    %1101 = vmatmul.mubr.f32.gmra.mrb[0].mxu0 %v964
    %v1102 = vpop.f32.mrb[0].mxu0
    %v1103 = vadd.f32 %v960, %v1102
    %v1104 = vpop.f32.mrb[0].mxu0
    %1105 = vdwg.mxu0
    %v1106 = vxor.u32 %v1103, 2147483648
    %v1107 = vmul.f32 %v1106, 1.442695
    %v1108 = vpow.pop %v1107
    %v1109 = vadd.f32 %v1108, 1.0
    %v1110 = vrcp.pop %v1109
    %v1111 = vmul.f32 1.0, %v1110
    %v1112 = vmul.f32 %v1033, %v1111
    %v1113 = vmax.f32 %v1112, 0.0
    %v1114 = vadd.f32 %v823, %v1113
    %v1115 = vld [vmem:[%s5] sm:$0xff]
    %v1116 = vld [vmem:[%s5 + $0x8] sm:$0xff]
    %v1117 = vld [vmem:[%s5 + $0x10] sm:$0xff]
    %v1118 = vld [vmem:[%s5 + $0x18] sm:$0xff]
    %v1119 = vld [vmem:[%s5 + $0x20] sm:$0xff]
    %v1120 = vld [vmem:[%s5 + $0x28] sm:$0xff]
    %v1121 = vld [vmem:[%s5 + $0x30] sm:$0xff]
    %v1122 = vld [vmem:[%s5 + $0x38] sm:$0xff]
    %v1123 = vld [vmem:[%s5 + $0x40] sm:$0xff]
    %v1124 = vld [vmem:[%s5 + $0x48] sm:$0xff]
    %v1125 = vld [vmem:[%s5 + $0x50] sm:$0xff]
    %v1126 = vld [vmem:[%s5 + $0x58] sm:$0xff]
    %v1127 = vld [vmem:[%s5 + $0x60] sm:$0xff]
    %v1128 = vld [vmem:[%s5 + $0x68] sm:$0xff]
    %v1129 = vld [vmem:[%s5 + $0x70] sm:$0xff]
    %v1130 = vld [vmem:[%s5 + $0x78] sm:$0xff]
    %v1131 = vld [vmem:[%s6] sm:$0x1]
    %v1133 = vlaneseq
    %v1134 = vshrl.u32 %v1133, 7
    %v1135 = vsub.s32 0, %v1134
    %v1136 = vrot.slane %v1131, %v1135
    %1138 = vmatprep.subr.mxu0 0.0
    %1139 = vmatpush1.msra.mxu0 %v1115
    %1140 = vmatprep.subr.mxu0 0.0
    %1141 = vmatpush1.msra.mxu0 %v1116
    %1142 = vmatprep.subr.mxu0 0.0
    %1143 = vmatpush1.msra.mxu0 %v1117
    %1144 = vmatprep.subr.mxu0 0.0
    %1145 = vmatpush1.msra.mxu0 %v1118
    %1146 = vmatprep.subr.mxu0 0.0
    %1147 = vmatpush1.msra.mxu0 %v1119
    %1148 = vmatprep.subr.mxu0 0.0
    %1149 = vmatpush1.msra.mxu0 %v1120
    %1150 = vmatprep.subr.mxu0 0.0
    %1151 = vmatpush1.msra.mxu0 %v1121
    %1152 = vmatprep.subr.mxu0 0.0
    %1153 = vmatpush1.msra.mxu0 %v1122
    %1154 = vmatprep.subr.mxu0 0.0
    %1155 = vmatpush1.msra.mxu0 %v1123
    %1156 = vmatprep.subr.mxu0 0.0
    %1157 = vmatpush1.msra.mxu0 %v1124
    %1158 = vmatprep.subr.mxu0 0.0
    %1159 = vmatpush1.msra.mxu0 %v1125
    %1160 = vmatprep.subr.mxu0 0.0
    %1161 = vmatpush1.msra.mxu0 %v1126
    %1162 = vmatprep.subr.mxu0 0.0
    %1163 = vmatpush1.msra.mxu0 %v1127
    %1164 = vmatprep.subr.mxu0 0.0
    %1165 = vmatpush1.msra.mxu0 %v1128
    %1166 = vmatprep.subr.mxu0 0.0
    %1167 = vmatpush1.msra.mxu0 %v1129
    %1168 = vmatprep.subr.mxu0 0.0
    %1169 = vmatpush1.msra.mxu0 %v1130
    %1170 = vmatprep.subr.mxu0 0.0
    %1171 = vmatpush1.msra.mxu0 0.0
    %1172 = vmatprep.subr.mxu0 0.0
    %1173 = vmatpush1.msra.mxu0 0.0
    %1174 = vmatprep.subr.mxu0 0.0
    %1175 = vmatpush1.msra.mxu0 0.0
    %1176 = vmatprep.subr.mxu0 0.0
    %1177 = vmatpush1.msra.mxu0 0.0
    %1178 = vmatprep.subr.mxu0 0.0
    %1179 = vmatpush1.msra.mxu0 0.0
    %1180 = vmatprep.subr.mxu0 0.0
    %1181 = vmatpush1.msra.mxu0 0.0
    %1182 = vmatprep.subr.mxu0 0.0
    %1183 = vmatpush1.msra.mxu0 0.0
    %1184 = vmatprep.subr.mxu0 0.0
    %1185 = vmatpush1.msra.mxu0 0.0
    %1186 = vmatprep.subr.mxu0 0.0
    %1187 = vmatpush1.msra.mxu0 0.0
    %1188 = vmatprep.subr.mxu0 0.0
    %1189 = vmatpush1.msra.mxu0 0.0
    %1190 = vmatprep.subr.mxu0 0.0
    %1191 = vmatpush1.msra.mxu0 0.0
    %1192 = vmatprep.subr.mxu0 0.0
    %1193 = vmatpush1.msra.mxu0 0.0
    %1194 = vmatprep.subr.mxu0 0.0
    %1195 = vmatpush1.msra.mxu0 0.0
    %1196 = vmatprep.subr.mxu0 0.0
    %1197 = vmatpush1.msra.mxu0 0.0
    %1198 = vmatprep.subr.mxu0 0.0
    %1199 = vmatpush1.msra.mxu0 0.0
    %1200 = vmatprep.subr.mxu0 0.0
    %1201 = vmatpush1.msra.mxu0 0.0
    %1202 = vmatprep.mubr.f32.mxu0 0.0
    %1203 = vmatmul.mubr.f32.gmra.mrb[0].mxu0 %v1114
    %v1204 = vpop.f32.mrb[0].mxu0
    %v1205 = vadd.f32 %v1136, %v1204
    %v1206 = vpop.f32.mrb[0].mxu0
    %1207 = vdwg.mxu0
    %v1208 = vlaneseq
    %v1209 = vand.u32 %v1208, 127
    %vm1210 = vcmp.lt.s32.totalorder %v1209, 2
    %v1211 = vsel %vm1210, %v1205, -1e+30
    %vm1212 = vcmask 1041408
    %v1213 = vsel %vm1212, %v1211, -inf
    %1214 = vmax.xlane.f32.xlu0 %v1213
    %v1215 = vpop.xlane.xlu0 %1214
    %v1216 = vsub.f32 %v1205, %v1215
    %v1217 = vmul.f32 %v1216, 1.442695
    %v1218 = vpow.pop %v1217
    %v1219 = vsel %vm1210, %v1218, 0.0
    %v1220 = vsel %vm1212, %v1219, 0.0
    %1221 = vadd.xlane.f32.xlu0 %v1220
    %v1222 = vpop.xlane.xlu0 %1221
    %v1223 = vrcp.pop %v1222
    %v1224 = vmul.f32 %v1219, %v1223
    %1225 = vst [vmem:[%s7] sm:$0x3] %v1224
    %vm1226 = vcmask 1024
    %1227 = vst.msk [vmem:[#allocation2] sm:$0x3] %vm1226, %v939
    %1228 = vst [vmem:[#allocation4] sm:$0x3] %v1114
    // Predicated region
    $region30: #{_lambda_.4} parent=1 // pred_check
      _
    $region31: #{_lambda_.4} parent=1 // pred_check_branch
      %1230 = sbr.rel (0) target = $region33
    $region32: #{_lambda_.4} parent=1 // pred_region
      _
    $region33: #{_lambda_.4} parent=1 // pred_fallthru
      _
    // Predicated region
    $region34: #{_lambda_.4} parent=1 // pred_check
      _
    $region35: #{_lambda_.4} parent=1 // pred_check_branch
      %1232 = sbr.rel (0) target = $region37
    $region36: #{_lambda_.4} parent=1 // pred_region
      %s1234 = ssub.s32 32, 32
      %1235 = vsyncadd [#allocation3], %s1234
      %s1237 = sshll.u32 [#allocation2], 4
      %s1238 = int_to_ptr.vmem [resolvable:$true] %s1237
      %1240 = dma.vmem_to_hbm [thread:$0]  %s1238, 32, %s8, [#allocation3]
    $region37: #{_lambda_.4} parent=1 // pred_fallthru
      _
    // Predicated region
    $region38: #{_lambda_.4} parent=1 // pred_check
      _
    $region39: #{_lambda_.4} parent=1 // pred_check_branch
      %1242 = sbr.rel (0) target = $region41
    $region40: #{_lambda_.4} parent=1 // pred_region
      %s1244 = ssub.s32 32, 32
      %1245 = vsyncadd [#allocation5], %s1244
      %s1247 = sshll.u32 [#allocation4], 4
      %s1248 = int_to_ptr.vmem [resolvable:$true] %s1247
      %1250 = dma.vmem_to_hbm [thread:$0]  %s1248, 32, %s9, [#allocation5]
    $region41: #{_lambda_.4} parent=1 // pred_fallthru
      _
    // Predicated region
    $region42: #{_lambda_.4} parent=1 // pred_check
      _
    $region43: #{_lambda_.4} parent=1 // pred_check_branch
      %1252 = sbr.rel (0) target = $region45
    $region44: #{_lambda_.4} parent=1 // pred_region
      _
    $region45: #{_lambda_.4} parent=1 // pred_fallthru
      _
    // Predicated region
    $region46: #{_lambda_.4} parent=1 // pred_check
      _
    $region47: #{_lambda_.4} parent=1 // pred_check_branch
      %1254 = sbr.rel (0) target = $region49
    $region48: #{_lambda_.4} parent=1 // pred_region
      %1255 = dma.done [#allocation3], 32
    $region49: #{_lambda_.4} parent=1 // pred_fallthru
      _
    // Predicated region
    $region50: #{_lambda_.4} parent=1 // pred_check
      _
    $region51: #{_lambda_.4} parent=1 // pred_check_branch
      %1257 = sbr.rel (0) target = $region53
    $region52: #{_lambda_.4} parent=1 // pred_region
      %1258 = dma.done [#allocation5], 32
    $region53: #{_lambda_.4} parent=1 // pred_fallthru
      _
    %1259 = vsyncpa [#allocation3], 1
    %1260 = vsyncpa [#allocation5], 1

// kernel: _lambda_.5
$region0: #{_lambda_.5}
  #allocation0 [shape = 'u32[]', space=smem, size = 0x4, offset = 0x4, fixed_abs, tag = 'smem constant byte address 0x4 - core index']
  #allocation1 [shape = 'u32[144,128]{1,0:T(1,128)}', space=vmem, size = 0x12000, scoped, tag = 'internal scratch']
  %s0 = inlined_call_operand.vmem [shape: f32[4,2], index: 0, kind: input, shape index: {}]
  %s1 = inlined_call_operand.vmem [shape: f32[4,2,512], index: 1, kind: input, shape index: {}]
  %s2 = inlined_call_operand.vmem [shape: f32[4,1,512], index: 2, kind: input, shape index: {}]
  %s3 = inlined_call_operand.vmem [shape: f32[3,128,2], index: 3, kind: input, shape index: {}]
  %s4 = inlined_call_operand.vmem [shape: f32[3,1,2], index: 4, kind: input, shape index: {}]
  %s5 = inlined_call_operand.vmem [shape: f32[128,128], index: 5, kind: input, shape index: {}]
  %s6 = inlined_call_operand.vmem [shape: f32[1,128], index: 6, kind: input, shape index: {}]
  %s7 = inlined_call_operand.vmem [shape: f32[4,128], index: 7, kind: output, shape index: {0}]
  %s8 = inlined_call_operand.vmem [shape: f32[4,1], index: 8, kind: output, shape index: {1}]
  %s9 = inlined_call_operand.hbm [shape: f32[4,128], index: 9, kind: output, shape index: {2}]
  %10 = xla_tuple %s7, %s8, %s9
  %s11 = sld [smem:[#allocation0]]
  $region54: #{_lambda_.5} parent=0
    _
  %s13 = ssub.s32 1, %s11
  %s14 = scalar_select 0, %s13, %s11
  $region1: #{_lambda_.5} parent=0
    #allocation2 [shape = 'u8[2048]{0}', space=vmem, size = 0x800, scoped, tag = 'output window, operand 2, single buffered']
    #allocation3 [shape = 's32[1]{0}', space=sflag, size = 0x4, scoped, tag = 'scoped memory for _lambda_.5']
    %15 = vsyncpa [#allocation3], 0
    // Predicated region
    $region2: #{_lambda_.5} parent=1 // pred_check
      _
    $region3: #{_lambda_.5} parent=1 // pred_check_branch
      %17 = sbr.rel (0) target = $region5
    $region4: #{_lambda_.5} parent=1 // pred_region
      _
    $region5: #{_lambda_.5} parent=1 // pred_fallthru
      _
    // Predicated region
    $region6: #{_lambda_.5} parent=1 // pred_check
      _
    $region7: #{_lambda_.5} parent=1 // pred_check_branch
      %19 = sbr.rel (0) target = $region9
    $region8: #{_lambda_.5} parent=1 // pred_region
      _
    $region9: #{_lambda_.5} parent=1 // pred_fallthru
      _
    // Predicated region
    $region10: #{_lambda_.5} parent=1 // pred_check
      _
    $region11: #{_lambda_.5} parent=1 // pred_check_branch
      %21 = sbr.rel (0) target = $region13
    $region12: #{_lambda_.5} parent=1 // pred_region
      _
    $region13: #{_lambda_.5} parent=1 // pred_fallthru
      _
    // Predicated region
    $region14: #{_lambda_.5} parent=1 // pred_check
      _
    $region15: #{_lambda_.5} parent=1 // pred_check_branch
      %23 = sbr.rel (0) target = $region17
    $region16: #{_lambda_.5} parent=1 // pred_region
      _
    $region17: #{_lambda_.5} parent=1 // pred_fallthru
      _
    // Predicated region
    $region18: #{_lambda_.5} parent=1 // pred_check
      _
    $region19: #{_lambda_.5} parent=1 // pred_check_branch
      %25 = sbr.rel (0) target = $region21
    $region20: #{_lambda_.5} parent=1 // pred_region
      _
    $region21: #{_lambda_.5} parent=1 // pred_fallthru
      _
    // Predicated region
    $region22: #{_lambda_.5} parent=1 // pred_check
      _
    $region23: #{_lambda_.5} parent=1 // pred_check_branch
      %27 = sbr.rel (0) target = $region25
    $region24: #{_lambda_.5} parent=1 // pred_region
      _
    $region25: #{_lambda_.5} parent=1 // pred_fallthru
      _
    // Predicated region
    $region26: #{_lambda_.5} parent=1 // pred_check
      _
    $region27: #{_lambda_.5} parent=1 // pred_check_branch
      %29 = sbr.rel (0) target = $region29
    $region28: #{_lambda_.5} parent=1 // pred_region
      _
    $region29: #{_lambda_.5} parent=1 // pred_fallthru
      _
    %v30 = vld [vmem:[%s0] sm:$0xf]
    %v31 = vld [vmem:[%s1] sm:$0xff]
    %v32 = vld [vmem:[%s2] sm:$0xf]
    %v34 = vlaneseq
    %v35 = vshrl.u32 %v34, 7
    %v36 = vsub.s32 1, %v35
    %v37 = vrot.slane %v32, %v36
    %v38 = vlaneseq
    %v39 = vshrl.u32 %v38, 7
    %v40 = vsub.s32 3, %v39
    %v41 = vrot.slane %v32, %v40
    %v45 = vcombine.high %v31, %v31
    %v47 = vunpack.c.l.s4 1983009808
    %v48 = vunpack.c.0.s8 %v47
    %v49 = vlaneseq
    %v50 = vshrl.u32 %v49, 7
    %v51 = vsub.s32 %v48, %v50
    %v52 = vrot.slane %v31, %v51
    %v54 = vunpack.c.l.s4 1983009808
    %v55 = vunpack.c.0.s8 %v54
    %v56 = vlaneseq
    %v57 = vshrl.u32 %v56, 7
    %v58 = vsub.s32 %v55, %v57
    %v59 = vrot.slane %v45, %v58
    %v60 = vcombine.high %v52, %v52
    %v61 = vcombine.high %v59, %v59
    %vm62 = vcmask 15360
    %v64 = vsel %vm62, %v30, 0
    %vm66 = vcmask 1041408
    %v67 = vsel %vm66, %v52, 0
    %v69 = vsel %vm66, %v60, 0
    %v71 = vsel %vm66, %v59, 0
    %v73 = vsel %vm66, %v61, 0
    %75 = vmatprep.subr.mxu0 %v69
    %76 = vmatpush1.msra.mxu0 %v67
    %77 = vmatprep.subr.mxu0 0.0
    %78 = vmatpush1.msra.mxu0 0.0
    %79 = vmatprep.subr.mxu0 0.0
    %80 = vmatpush1.msra.mxu0 0.0
    %81 = vmatprep.subr.mxu0 0.0
    %82 = vmatpush1.msra.mxu0 0.0
    %83 = vmatprep.subr.mxu0 0.0
    %84 = vmatpush1.msra.mxu0 0.0
    %85 = vmatprep.subr.mxu0 0.0
    %86 = vmatpush1.msra.mxu0 0.0
    %87 = vmatprep.subr.mxu0 0.0
    %88 = vmatpush1.msra.mxu0 0.0
    %89 = vmatprep.subr.mxu0 0.0
    %90 = vmatpush1.msra.mxu0 0.0
    %91 = vmatprep.subr.mxu0 0.0
    %92 = vmatpush1.msra.mxu0 0.0
    %93 = vmatprep.subr.mxu0 0.0
    %94 = vmatpush1.msra.mxu0 0.0
    %95 = vmatprep.subr.mxu0 0.0
    %96 = vmatpush1.msra.mxu0 0.0
    %97 = vmatprep.subr.mxu0 0.0
    %98 = vmatpush1.msra.mxu0 0.0
    %99 = vmatprep.subr.mxu0 0.0
    %100 = vmatpush1.msra.mxu0 0.0
    %101 = vmatprep.subr.mxu0 0.0
    %102 = vmatpush1.msra.mxu0 0.0
    %103 = vmatprep.subr.mxu0 0.0
    %104 = vmatpush1.msra.mxu0 0.0
    %105 = vmatprep.subr.mxu0 0.0
    %106 = vmatpush1.msra.mxu0 0.0
    %107 = vmatprep.subr.mxu0 0.0
    %108 = vmatpush1.msra.mxu0 0.0
    %109 = vmatprep.subr.mxu0 0.0
    %110 = vmatpush1.msra.mxu0 0.0
    %111 = vmatprep.subr.mxu0 0.0
    %112 = vmatpush1.msra.mxu0 0.0
    %113 = vmatprep.subr.mxu0 0.0
    %114 = vmatpush1.msra.mxu0 0.0
    %115 = vmatprep.subr.mxu0 0.0
    %116 = vmatpush1.msra.mxu0 0.0
    %117 = vmatprep.subr.mxu0 0.0
    %118 = vmatpush1.msra.mxu0 0.0
    %119 = vmatprep.subr.mxu0 0.0
    %120 = vmatpush1.msra.mxu0 0.0
    %121 = vmatprep.subr.mxu0 0.0
    %122 = vmatpush1.msra.mxu0 0.0
    %123 = vmatprep.subr.mxu0 0.0
    %124 = vmatpush1.msra.mxu0 0.0
    %125 = vmatprep.subr.mxu0 0.0
    %126 = vmatpush1.msra.mxu0 0.0
    %127 = vmatprep.subr.mxu0 0.0
    %128 = vmatpush1.msra.mxu0 0.0
    %129 = vmatprep.subr.mxu0 0.0
    %130 = vmatpush1.msra.mxu0 0.0
    %131 = vmatprep.subr.mxu0 0.0
    %132 = vmatpush1.msra.mxu0 0.0
    %133 = vmatprep.subr.mxu0 0.0
    %134 = vmatpush1.msra.mxu0 0.0
    %135 = vmatprep.subr.mxu0 0.0
    %136 = vmatpush1.msra.mxu0 0.0
    %137 = vmatprep.subr.mxu0 0.0
    %138 = vmatpush1.msra.mxu0 0.0
    %139 = vmatprep.mubr.f32.mxu0 0.0
    %140 = vmatmul.mubr.f32.gmra.mrb[0].mxu0 %v64
    %v141 = vpop.f32.mrb[0].mxu0
    %v142 = vpop.f32.mrb[0].mxu0
    %v143 = vadd.f32 %v37, %v142
    %144 = vdwg.mxu0
    %145 = vmatprep.subr.mxu0 %v73
    %146 = vmatpush1.msra.mxu0 %v71
    %147 = vmatprep.subr.mxu0 0.0
    %148 = vmatpush1.msra.mxu0 0.0
    %149 = vmatprep.subr.mxu0 0.0
    %150 = vmatpush1.msra.mxu0 0.0
    %151 = vmatprep.subr.mxu0 0.0
    %152 = vmatpush1.msra.mxu0 0.0
    %153 = vmatprep.subr.mxu0 0.0
    %154 = vmatpush1.msra.mxu0 0.0
    %155 = vmatprep.subr.mxu0 0.0
    %156 = vmatpush1.msra.mxu0 0.0
    %157 = vmatprep.subr.mxu0 0.0
    %158 = vmatpush1.msra.mxu0 0.0
    %159 = vmatprep.subr.mxu0 0.0
    %160 = vmatpush1.msra.mxu0 0.0
    %161 = vmatprep.subr.mxu0 0.0
    %162 = vmatpush1.msra.mxu0 0.0
    %163 = vmatprep.subr.mxu0 0.0
    %164 = vmatpush1.msra.mxu0 0.0
    %165 = vmatprep.subr.mxu0 0.0
    %166 = vmatpush1.msra.mxu0 0.0
    %167 = vmatprep.subr.mxu0 0.0
    %168 = vmatpush1.msra.mxu0 0.0
    %169 = vmatprep.subr.mxu0 0.0
    %170 = vmatpush1.msra.mxu0 0.0
    %171 = vmatprep.subr.mxu0 0.0
    %172 = vmatpush1.msra.mxu0 0.0
    %173 = vmatprep.subr.mxu0 0.0
    %174 = vmatpush1.msra.mxu0 0.0
    %175 = vmatprep.subr.mxu0 0.0
    %176 = vmatpush1.msra.mxu0 0.0
    %177 = vmatprep.subr.mxu0 0.0
    %178 = vmatpush1.msra.mxu0 0.0
    %179 = vmatprep.subr.mxu0 0.0
    %180 = vmatpush1.msra.mxu0 0.0
    %181 = vmatprep.subr.mxu0 0.0
    %182 = vmatpush1.msra.mxu0 0.0
    %183 = vmatprep.subr.mxu0 0.0
    %184 = vmatpush1.msra.mxu0 0.0
    %185 = vmatprep.subr.mxu0 0.0
    %186 = vmatpush1.msra.mxu0 0.0
    %187 = vmatprep.subr.mxu0 0.0
    %188 = vmatpush1.msra.mxu0 0.0
    %189 = vmatprep.subr.mxu0 0.0
    %190 = vmatpush1.msra.mxu0 0.0
    %191 = vmatprep.subr.mxu0 0.0
    %192 = vmatpush1.msra.mxu0 0.0
    %193 = vmatprep.subr.mxu0 0.0
    %194 = vmatpush1.msra.mxu0 0.0
    %195 = vmatprep.subr.mxu0 0.0
    %196 = vmatpush1.msra.mxu0 0.0
    %197 = vmatprep.subr.mxu0 0.0
    %198 = vmatpush1.msra.mxu0 0.0
    %199 = vmatprep.subr.mxu0 0.0
    %200 = vmatpush1.msra.mxu0 0.0
    %201 = vmatprep.subr.mxu0 0.0
    %202 = vmatpush1.msra.mxu0 0.0
    %203 = vmatprep.subr.mxu0 0.0
    %204 = vmatpush1.msra.mxu0 0.0
    %205 = vmatprep.subr.mxu0 0.0
    %206 = vmatpush1.msra.mxu0 0.0
    %207 = vmatprep.subr.mxu0 0.0
    %208 = vmatpush1.msra.mxu0 0.0
    %209 = vmatprep.mubr.f32.mxu0 0.0
    %210 = vmatmul.mubr.f32.gmra.mrb[0].mxu0 %v64
    %v211 = vpop.f32.mrb[0].mxu0
    %v212 = vpop.f32.mrb[0].mxu0
    %v213 = vadd.f32 %v41, %v212
    %214 = vdwg.mxu0
    %v215 = vxor.u32 %v213, 2147483648
    %v216 = vmul.f32 %v215, 1.442695
    %v217 = vpow.pop %v216
    %v218 = vadd.f32 %v217, 1.0
    %v219 = vrcp.pop %v218
    %v220 = vmul.f32 1.0, %v219
    %v221 = vmul.f32 %v143, %v220
    %v222 = vld [vmem:[%s3] sm:$0xff]
    %v223 = vld [vmem:[%s3 + $0x8] sm:$0xff]
    %v224 = vld [vmem:[%s3 + $0x10] sm:$0xff]
    %v225 = vld [vmem:[%s3 + $0x18] sm:$0xff]
    %v226 = vld [vmem:[%s3 + $0x20] sm:$0xff]
    %v227 = vld [vmem:[%s3 + $0x28] sm:$0xff]
    %v228 = vld [vmem:[%s3 + $0x30] sm:$0xff]
    %v229 = vld [vmem:[%s3 + $0x38] sm:$0xff]
    %v230 = vld [vmem:[%s3 + $0x40] sm:$0xff]
    %v231 = vld [vmem:[%s3 + $0x48] sm:$0xff]
    %v232 = vld [vmem:[%s3 + $0x50] sm:$0xff]
    %v233 = vld [vmem:[%s3 + $0x58] sm:$0xff]
    %v234 = vld [vmem:[%s3 + $0x60] sm:$0xff]
    %v235 = vld [vmem:[%s3 + $0x68] sm:$0xff]
    %v236 = vld [vmem:[%s3 + $0x70] sm:$0xff]
    %v237 = vld [vmem:[%s3 + $0x78] sm:$0xff]
    %v238 = vld [vmem:[%s4] sm:$0x1]
    %v240 = vlaneseq
    %v241 = vshrl.u32 %v240, 7
    %v242 = vsub.s32 0, %v241
    %v243 = vrot.slane %v238, %v242
    %245 = vmatprep.subr.mxu0 0.0
    %246 = vmatpush1.msra.mxu0 %v222
    %247 = vmatprep.subr.mxu0 0.0
    %248 = vmatpush1.msra.mxu0 %v223
    %249 = vmatprep.subr.mxu0 0.0
    %250 = vmatpush1.msra.mxu0 %v224
    %251 = vmatprep.subr.mxu0 0.0
    %252 = vmatpush1.msra.mxu0 %v225
    %253 = vmatprep.subr.mxu0 0.0
    %254 = vmatpush1.msra.mxu0 %v226
    %255 = vmatprep.subr.mxu0 0.0
    %256 = vmatpush1.msra.mxu0 %v227
    %257 = vmatprep.subr.mxu0 0.0
    %258 = vmatpush1.msra.mxu0 %v228
    %259 = vmatprep.subr.mxu0 0.0
    %260 = vmatpush1.msra.mxu0 %v229
    %261 = vmatprep.subr.mxu0 0.0
    %262 = vmatpush1.msra.mxu0 %v230
    %263 = vmatprep.subr.mxu0 0.0
    %264 = vmatpush1.msra.mxu0 %v231
    %265 = vmatprep.subr.mxu0 0.0
    %266 = vmatpush1.msra.mxu0 %v232
    %267 = vmatprep.subr.mxu0 0.0
    %268 = vmatpush1.msra.mxu0 %v233
    %269 = vmatprep.subr.mxu0 0.0
    %270 = vmatpush1.msra.mxu0 %v234
    %271 = vmatprep.subr.mxu0 0.0
    %272 = vmatpush1.msra.mxu0 %v235
    %273 = vmatprep.subr.mxu0 0.0
    %274 = vmatpush1.msra.mxu0 %v236
    %275 = vmatprep.subr.mxu0 0.0
    %276 = vmatpush1.msra.mxu0 %v237
    %277 = vmatprep.subr.mxu0 0.0
    %278 = vmatpush1.msra.mxu0 0.0
    %279 = vmatprep.subr.mxu0 0.0
    %280 = vmatpush1.msra.mxu0 0.0
    %281 = vmatprep.subr.mxu0 0.0
    %282 = vmatpush1.msra.mxu0 0.0
    %283 = vmatprep.subr.mxu0 0.0
    %284 = vmatpush1.msra.mxu0 0.0
    %285 = vmatprep.subr.mxu0 0.0
    %286 = vmatpush1.msra.mxu0 0.0
    %287 = vmatprep.subr.mxu0 0.0
    %288 = vmatpush1.msra.mxu0 0.0
    %289 = vmatprep.subr.mxu0 0.0
    %290 = vmatpush1.msra.mxu0 0.0
    %291 = vmatprep.subr.mxu0 0.0
    %292 = vmatpush1.msra.mxu0 0.0
    %293 = vmatprep.subr.mxu0 0.0
    %294 = vmatpush1.msra.mxu0 0.0
    %295 = vmatprep.subr.mxu0 0.0
    %296 = vmatpush1.msra.mxu0 0.0
    %297 = vmatprep.subr.mxu0 0.0
    %298 = vmatpush1.msra.mxu0 0.0
    %299 = vmatprep.subr.mxu0 0.0
    %300 = vmatpush1.msra.mxu0 0.0
    %301 = vmatprep.subr.mxu0 0.0
    %302 = vmatpush1.msra.mxu0 0.0
    %303 = vmatprep.subr.mxu0 0.0
    %304 = vmatpush1.msra.mxu0 0.0
    %305 = vmatprep.subr.mxu0 0.0
    %306 = vmatpush1.msra.mxu0 0.0
    %307 = vmatprep.subr.mxu0 0.0
    %308 = vmatpush1.msra.mxu0 0.0
    %309 = vmatprep.mubr.f32.mxu0 0.0
    %310 = vmatmul.mubr.f32.gmra.mrb[0].mxu0 %v221
    %v311 = vpop.f32.mrb[0].mxu0
    %v312 = vadd.f32 %v243, %v311
    %v313 = vpop.f32.mrb[0].mxu0
    %314 = vdwg.mxu0
    %vm315 = vcmask 11264
    %v316 = vsel %vm315, %v312, -inf
    %317 = vmax.xlane.f32.xlu0 %v316
    %v318 = vpop.xlane.xlu0 %317
    %v319 = vsub.f32 %v312, %v318
    %v320 = vmul.f32 %v319, 1.442695
    %v321 = vpow.pop %v320
    %v322 = vsel %vm315, %v321, 0.0
    %323 = vadd.xlane.f32.xlu0 %v322
    %v324 = vpop.xlane.xlu0 %323
    %v325 = vrcp.pop %v324
    %v326 = vmul.f32 %v321, %v325
    %v327 = vsub.f32 0.0, %v326
    %v328 = vadd.f32 %v326, 1e-15
    %v329 = vlog2.pop %v328
    %v330 = vmul.f32 %v329, 0.6931472
    %v331 = vmul.f32 %v327, %v330
    %v332 = vsel %vm315, %v331, 0.0
    %333 = vadd.xlane.f32.xlu0 %v332
    %v334 = vpop.xlane.xlu0 %333
    %v335 = vadd.f32 %v334, 0.0
    %v336 = vsub.f32 1.3, %v326
    %v337 = vmul.f32 %v30, %v326
    %s338 = scalar_lea.vmem %s1, 8
    %v339 = vld [vmem:[%s338] sm:$0xff]
    %s340 = scalar_lea.vmem %s2, 4
    %v341 = vld [vmem:[%s340] sm:$0xf]
    %v343 = vlaneseq
    %v344 = vshrl.u32 %v343, 7
    %v345 = vsub.s32 0, %v344
    %v346 = vrot.slane %v341, %v345
    %v347 = vlaneseq
    %v348 = vshrl.u32 %v347, 7
    %v349 = vsub.s32 1, %v348
    %v350 = vrot.slane %v341, %v349
    %v351 = vlaneseq
    %v352 = vshrl.u32 %v351, 7
    %v353 = vsub.s32 2, %v352
    %v354 = vrot.slane %v341, %v353
    %v355 = vlaneseq
    %v356 = vshrl.u32 %v355, 7
    %v357 = vsub.s32 3, %v356
    %v358 = vrot.slane %v341, %v357
    %v364 = vcombine.high %v339, %v339
    %v366 = vunpack.c.l.s4 1983009808
    %v367 = vunpack.c.0.s8 %v366
    %v368 = vlaneseq
    %v369 = vshrl.u32 %v368, 7
    %v370 = vsub.s32 %v367, %v369
    %v371 = vrot.slane %v339, %v370
    %v373 = vunpack.c.l.s4 1983009808
    %v374 = vunpack.c.0.s8 %v373
    %v375 = vlaneseq
    %v376 = vshrl.u32 %v375, 7
    %v377 = vsub.s32 %v374, %v376
    %v378 = vrot.slane %v364, %v377
    %v379 = vcombine.high %v371, %v371
    %v380 = vcombine.high %v378, %v378
    %v382 = vsel %vm62, %v337, 0
    %v384 = vsel %vm66, %v371, 0
    %v386 = vsel %vm66, %v379, 0
    %v388 = vsel %vm66, %v378, 0
    %v390 = vsel %vm66, %v380, 0
    %392 = vmatprep.subr.mxu0 %v386
    %393 = vmatpush1.msra.mxu0 %v384
    %394 = vmatprep.subr.mxu0 0.0
    %395 = vmatpush1.msra.mxu0 0.0
    %396 = vmatprep.subr.mxu0 0.0
    %397 = vmatpush1.msra.mxu0 0.0
    %398 = vmatprep.subr.mxu0 0.0
    %399 = vmatpush1.msra.mxu0 0.0
    %400 = vmatprep.subr.mxu0 0.0
    %401 = vmatpush1.msra.mxu0 0.0
    %402 = vmatprep.subr.mxu0 0.0
    %403 = vmatpush1.msra.mxu0 0.0
    %404 = vmatprep.subr.mxu0 0.0
    %405 = vmatpush1.msra.mxu0 0.0
    %406 = vmatprep.subr.mxu0 0.0
    %407 = vmatpush1.msra.mxu0 0.0
    %408 = vmatprep.subr.mxu0 0.0
    %409 = vmatpush1.msra.mxu0 0.0
    %410 = vmatprep.subr.mxu0 0.0
    %411 = vmatpush1.msra.mxu0 0.0
    %412 = vmatprep.subr.mxu0 0.0
    %413 = vmatpush1.msra.mxu0 0.0
    %414 = vmatprep.subr.mxu0 0.0
    %415 = vmatpush1.msra.mxu0 0.0
    %416 = vmatprep.subr.mxu0 0.0
    %417 = vmatpush1.msra.mxu0 0.0
    %418 = vmatprep.subr.mxu0 0.0
    %419 = vmatpush1.msra.mxu0 0.0
    %420 = vmatprep.subr.mxu0 0.0
    %421 = vmatpush1.msra.mxu0 0.0
    %422 = vmatprep.subr.mxu0 0.0
    %423 = vmatpush1.msra.mxu0 0.0
    %424 = vmatprep.subr.mxu0 0.0
    %425 = vmatpush1.msra.mxu0 0.0
    %426 = vmatprep.subr.mxu0 0.0
    %427 = vmatpush1.msra.mxu0 0.0
    %428 = vmatprep.subr.mxu0 0.0
    %429 = vmatpush1.msra.mxu0 0.0
    %430 = vmatprep.subr.mxu0 0.0
    %431 = vmatpush1.msra.mxu0 0.0
    %432 = vmatprep.subr.mxu0 0.0
    %433 = vmatpush1.msra.mxu0 0.0
    %434 = vmatprep.subr.mxu0 0.0
    %435 = vmatpush1.msra.mxu0 0.0
    %436 = vmatprep.subr.mxu0 0.0
    %437 = vmatpush1.msra.mxu0 0.0
    %438 = vmatprep.subr.mxu0 0.0
    %439 = vmatpush1.msra.mxu0 0.0
    %440 = vmatprep.subr.mxu0 0.0
    %441 = vmatpush1.msra.mxu0 0.0
    %442 = vmatprep.subr.mxu0 0.0
    %443 = vmatpush1.msra.mxu0 0.0
    %444 = vmatprep.subr.mxu0 0.0
    %445 = vmatpush1.msra.mxu0 0.0
    %446 = vmatprep.subr.mxu0 0.0
    %447 = vmatpush1.msra.mxu0 0.0
    %448 = vmatprep.subr.mxu0 0.0
    %449 = vmatpush1.msra.mxu0 0.0
    %450 = vmatprep.subr.mxu0 0.0
    %451 = vmatpush1.msra.mxu0 0.0
    %452 = vmatprep.subr.mxu0 0.0
    %453 = vmatpush1.msra.mxu0 0.0
    %454 = vmatprep.subr.mxu0 0.0
    %455 = vmatpush1.msra.mxu0 0.0
    %456 = vmatprep.mubr.f32.mxu0 0.0
    %457 = vmatmul.mubr.f32.gmra.mrb[0].mxu0 %v382
    %v458 = vpop.f32.mrb[0].mxu0
    %v459 = vadd.f32 %v346, %v458
    %v460 = vpop.f32.mrb[0].mxu0
    %v461 = vadd.f32 %v350, %v460
    %462 = vdwg.mxu0
    %463 = vmatprep.subr.mxu0 %v390
    %464 = vmatpush1.msra.mxu0 %v388
    %465 = vmatprep.subr.mxu0 0.0
    %466 = vmatpush1.msra.mxu0 0.0
    %467 = vmatprep.subr.mxu0 0.0
    %468 = vmatpush1.msra.mxu0 0.0
    %469 = vmatprep.subr.mxu0 0.0
    %470 = vmatpush1.msra.mxu0 0.0
    %471 = vmatprep.subr.mxu0 0.0
    %472 = vmatpush1.msra.mxu0 0.0
    %473 = vmatprep.subr.mxu0 0.0
    %474 = vmatpush1.msra.mxu0 0.0
    %475 = vmatprep.subr.mxu0 0.0
    %476 = vmatpush1.msra.mxu0 0.0
    %477 = vmatprep.subr.mxu0 0.0
    %478 = vmatpush1.msra.mxu0 0.0
    %479 = vmatprep.subr.mxu0 0.0
    %480 = vmatpush1.msra.mxu0 0.0
    %481 = vmatprep.subr.mxu0 0.0
    %482 = vmatpush1.msra.mxu0 0.0
    %483 = vmatprep.subr.mxu0 0.0
    %484 = vmatpush1.msra.mxu0 0.0
    %485 = vmatprep.subr.mxu0 0.0
    %486 = vmatpush1.msra.mxu0 0.0
    %487 = vmatprep.subr.mxu0 0.0
    %488 = vmatpush1.msra.mxu0 0.0
    %489 = vmatprep.subr.mxu0 0.0
    %490 = vmatpush1.msra.mxu0 0.0
    %491 = vmatprep.subr.mxu0 0.0
    %492 = vmatpush1.msra.mxu0 0.0
    %493 = vmatprep.subr.mxu0 0.0
    %494 = vmatpush1.msra.mxu0 0.0
    %495 = vmatprep.subr.mxu0 0.0
    %496 = vmatpush1.msra.mxu0 0.0
    %497 = vmatprep.subr.mxu0 0.0
    %498 = vmatpush1.msra.mxu0 0.0
    %499 = vmatprep.subr.mxu0 0.0
    %500 = vmatpush1.msra.mxu0 0.0
    %501 = vmatprep.subr.mxu0 0.0
    %502 = vmatpush1.msra.mxu0 0.0
    %503 = vmatprep.subr.mxu0 0.0
    %504 = vmatpush1.msra.mxu0 0.0
    %505 = vmatprep.subr.mxu0 0.0
    %506 = vmatpush1.msra.mxu0 0.0
    %507 = vmatprep.subr.mxu0 0.0
    %508 = vmatpush1.msra.mxu0 0.0
    %509 = vmatprep.subr.mxu0 0.0
    %510 = vmatpush1.msra.mxu0 0.0
    %511 = vmatprep.subr.mxu0 0.0
    %512 = vmatpush1.msra.mxu0 0.0
    %513 = vmatprep.subr.mxu0 0.0
    %514 = vmatpush1.msra.mxu0 0.0
    %515 = vmatprep.subr.mxu0 0.0
    %516 = vmatpush1.msra.mxu0 0.0
    %517 = vmatprep.subr.mxu0 0.0
    %518 = vmatpush1.msra.mxu0 0.0
    %519 = vmatprep.subr.mxu0 0.0
    %520 = vmatpush1.msra.mxu0 0.0
    %521 = vmatprep.subr.mxu0 0.0
    %522 = vmatpush1.msra.mxu0 0.0
    %523 = vmatprep.subr.mxu0 0.0
    %524 = vmatpush1.msra.mxu0 0.0
    %525 = vmatprep.subr.mxu0 0.0
    %526 = vmatpush1.msra.mxu0 0.0
    %527 = vmatprep.mubr.f32.mxu0 0.0
    %528 = vmatmul.mubr.f32.gmra.mrb[0].mxu0 %v382
    %v529 = vpop.f32.mrb[0].mxu0
    %v530 = vadd.f32 %v354, %v529
    %v531 = vpop.f32.mrb[0].mxu0
    %v532 = vadd.f32 %v358, %v531
    %533 = vdwg.mxu0
    %v534 = vxor.u32 %v530, 2147483648
    %v535 = vmul.f32 %v534, 1.442695
    %v536 = vpow.pop %v535
    %v537 = vadd.f32 %v536, 1.0
    %v538 = vrcp.pop %v537
    %v539 = vmul.f32 1.0, %v538
    %v540 = vmul.f32 %v459, %v539
    %v541 = vxor.u32 %v532, 2147483648
    %v542 = vmul.f32 %v541, 1.442695
    %v543 = vpow.pop %v542
    %v544 = vadd.f32 %v543, 1.0
    %v545 = vrcp.pop %v544
    %v546 = vmul.f32 1.0, %v545
    %v547 = vmul.f32 %v461, %v546
    %v548 = vmax.f32 %v540, 0.0
    %v549 = vadd.f32 %v548, 0.0
    %s550 = scalar_lea.vmem %s3, 128
    %v551 = vld [vmem:[%s550] sm:$0xff]
    %v552 = vld [vmem:[%s550 + $0x8] sm:$0xff]
    %v553 = vld [vmem:[%s550 + $0x10] sm:$0xff]
    %v554 = vld [vmem:[%s550 + $0x18] sm:$0xff]
    %v555 = vld [vmem:[%s550 + $0x20] sm:$0xff]
    %v556 = vld [vmem:[%s550 + $0x28] sm:$0xff]
    %v557 = vld [vmem:[%s550 + $0x30] sm:$0xff]
    %v558 = vld [vmem:[%s550 + $0x38] sm:$0xff]
    %v559 = vld [vmem:[%s550 + $0x40] sm:$0xff]
    %v560 = vld [vmem:[%s550 + $0x48] sm:$0xff]
    %v561 = vld [vmem:[%s550 + $0x50] sm:$0xff]
    %v562 = vld [vmem:[%s550 + $0x58] sm:$0xff]
    %v563 = vld [vmem:[%s550 + $0x60] sm:$0xff]
    %v564 = vld [vmem:[%s550 + $0x68] sm:$0xff]
    %v565 = vld [vmem:[%s550 + $0x70] sm:$0xff]
    %v566 = vld [vmem:[%s550 + $0x78] sm:$0xff]
    %s567 = scalar_lea.vmem %s4, 1
    %v568 = vld [vmem:[%s567] sm:$0x1]
    %v570 = vlaneseq
    %v571 = vshrl.u32 %v570, 7
    %v572 = vsub.s32 0, %v571
    %v573 = vrot.slane %v568, %v572
    %575 = vmatprep.subr.mxu0 0.0
    %576 = vmatpush1.msra.mxu0 %v551
    %577 = vmatprep.subr.mxu0 0.0
    %578 = vmatpush1.msra.mxu0 %v552
    %579 = vmatprep.subr.mxu0 0.0
    %580 = vmatpush1.msra.mxu0 %v553
    %581 = vmatprep.subr.mxu0 0.0
    %582 = vmatpush1.msra.mxu0 %v554
    %583 = vmatprep.subr.mxu0 0.0
    %584 = vmatpush1.msra.mxu0 %v555
    %585 = vmatprep.subr.mxu0 0.0
    %586 = vmatpush1.msra.mxu0 %v556
    %587 = vmatprep.subr.mxu0 0.0
    %588 = vmatpush1.msra.mxu0 %v557
    %589 = vmatprep.subr.mxu0 0.0
    %590 = vmatpush1.msra.mxu0 %v558
    %591 = vmatprep.subr.mxu0 0.0
    %592 = vmatpush1.msra.mxu0 %v559
    %593 = vmatprep.subr.mxu0 0.0
    %594 = vmatpush1.msra.mxu0 %v560
    %595 = vmatprep.subr.mxu0 0.0
    %596 = vmatpush1.msra.mxu0 %v561
    %597 = vmatprep.subr.mxu0 0.0
    %598 = vmatpush1.msra.mxu0 %v562
    %599 = vmatprep.subr.mxu0 0.0
    %600 = vmatpush1.msra.mxu0 %v563
    %601 = vmatprep.subr.mxu0 0.0
    %602 = vmatpush1.msra.mxu0 %v564
    %603 = vmatprep.subr.mxu0 0.0
    %604 = vmatpush1.msra.mxu0 %v565
    %605 = vmatprep.subr.mxu0 0.0
    %606 = vmatpush1.msra.mxu0 %v566
    %607 = vmatprep.subr.mxu0 0.0
    %608 = vmatpush1.msra.mxu0 0.0
    %609 = vmatprep.subr.mxu0 0.0
    %610 = vmatpush1.msra.mxu0 0.0
    %611 = vmatprep.subr.mxu0 0.0
    %612 = vmatpush1.msra.mxu0 0.0
    %613 = vmatprep.subr.mxu0 0.0
    %614 = vmatpush1.msra.mxu0 0.0
    %615 = vmatprep.subr.mxu0 0.0
    %616 = vmatpush1.msra.mxu0 0.0
    %617 = vmatprep.subr.mxu0 0.0
    %618 = vmatpush1.msra.mxu0 0.0
    %619 = vmatprep.subr.mxu0 0.0
    %620 = vmatpush1.msra.mxu0 0.0
    %621 = vmatprep.subr.mxu0 0.0
    %622 = vmatpush1.msra.mxu0 0.0
    %623 = vmatprep.subr.mxu0 0.0
    %624 = vmatpush1.msra.mxu0 0.0
    %625 = vmatprep.subr.mxu0 0.0
    %626 = vmatpush1.msra.mxu0 0.0
    %627 = vmatprep.subr.mxu0 0.0
    %628 = vmatpush1.msra.mxu0 0.0
    %629 = vmatprep.subr.mxu0 0.0
    %630 = vmatpush1.msra.mxu0 0.0
    %631 = vmatprep.subr.mxu0 0.0
    %632 = vmatpush1.msra.mxu0 0.0
    %633 = vmatprep.subr.mxu0 0.0
    %634 = vmatpush1.msra.mxu0 0.0
    %635 = vmatprep.subr.mxu0 0.0
    %636 = vmatpush1.msra.mxu0 0.0
    %637 = vmatprep.subr.mxu0 0.0
    %638 = vmatpush1.msra.mxu0 0.0
    %639 = vmatprep.mubr.f32.mxu0 0.0
    %640 = vmatmul.mubr.f32.gmra.mrb[0].mxu0 %v547
    %v641 = vpop.f32.mrb[0].mxu0
    %v642 = vadd.f32 %v573, %v641
    %v643 = vpop.f32.mrb[0].mxu0
    %644 = vdwg.mxu0
    %v645 = vmul.f32 %v642, %v336
    %v646 = vsel %vm315, %v645, -inf
    %647 = vmax.xlane.f32.xlu0 %v646
    %v648 = vpop.xlane.xlu0 %647
    %v649 = vsub.f32 %v645, %v648
    %v650 = vmul.f32 %v649, 1.442695
    %v651 = vpow.pop %v650
    %v652 = vsel %vm315, %v651, 0.0
    %653 = vadd.xlane.f32.xlu0 %v652
    %v654 = vpop.xlane.xlu0 %653
    %v655 = vrcp.pop %v654
    %v656 = vmul.f32 %v651, %v655
    %v657 = vsub.f32 0.0, %v656
    %v658 = vadd.f32 %v656, 1e-15
    %v659 = vlog2.pop %v658
    %v660 = vmul.f32 %v659, 0.6931472
    %v661 = vmul.f32 %v657, %v660
    %v662 = vsel %vm315, %v661, 0.0
    %663 = vadd.xlane.f32.xlu0 %v662
    %v664 = vpop.xlane.xlu0 %663
    %v665 = vadd.f32 %v335, %v664
    %v666 = vsub.f32 1.3, %v656
    %v667 = vmul.f32 %v336, %v666
    %v668 = vmul.f32 %v30, %v656
    %s669 = scalar_lea.vmem %s1, 16
    %v670 = vld [vmem:[%s669] sm:$0xff]
    %s671 = scalar_lea.vmem %s2, 8
    %v672 = vld [vmem:[%s671] sm:$0xf]
    %v674 = vlaneseq
    %v675 = vshrl.u32 %v674, 7
    %v676 = vsub.s32 0, %v675
    %v677 = vrot.slane %v672, %v676
    %v678 = vlaneseq
    %v679 = vshrl.u32 %v678, 7
    %v680 = vsub.s32 1, %v679
    %v681 = vrot.slane %v672, %v680
    %v682 = vlaneseq
    %v683 = vshrl.u32 %v682, 7
    %v684 = vsub.s32 2, %v683
    %v685 = vrot.slane %v672, %v684
    %v686 = vlaneseq
    %v687 = vshrl.u32 %v686, 7
    %v688 = vsub.s32 3, %v687
    %v689 = vrot.slane %v672, %v688
    %v695 = vcombine.high %v670, %v670
    %v697 = vunpack.c.l.s4 1983009808
    %v698 = vunpack.c.0.s8 %v697
    %v699 = vlaneseq
    %v700 = vshrl.u32 %v699, 7
    %v701 = vsub.s32 %v698, %v700
    %v702 = vrot.slane %v670, %v701
    %v704 = vunpack.c.l.s4 1983009808
    %v705 = vunpack.c.0.s8 %v704
    %v706 = vlaneseq
    %v707 = vshrl.u32 %v706, 7
    %v708 = vsub.s32 %v705, %v707
    %v709 = vrot.slane %v695, %v708
    %v710 = vcombine.high %v702, %v702
    %v711 = vcombine.high %v709, %v709
    %v713 = vsel %vm62, %v668, 0
    %v715 = vsel %vm66, %v702, 0
    %v717 = vsel %vm66, %v710, 0
    %v719 = vsel %vm66, %v709, 0
    %v721 = vsel %vm66, %v711, 0
    %723 = vmatprep.subr.mxu0 %v717
    %724 = vmatpush1.msra.mxu0 %v715
    %725 = vmatprep.subr.mxu0 0.0
    %726 = vmatpush1.msra.mxu0 0.0
    %727 = vmatprep.subr.mxu0 0.0
    %728 = vmatpush1.msra.mxu0 0.0
    %729 = vmatprep.subr.mxu0 0.0
    %730 = vmatpush1.msra.mxu0 0.0
    %731 = vmatprep.subr.mxu0 0.0
    %732 = vmatpush1.msra.mxu0 0.0
    %733 = vmatprep.subr.mxu0 0.0
    %734 = vmatpush1.msra.mxu0 0.0
    %735 = vmatprep.subr.mxu0 0.0
    %736 = vmatpush1.msra.mxu0 0.0
    %737 = vmatprep.subr.mxu0 0.0
    %738 = vmatpush1.msra.mxu0 0.0
    %739 = vmatprep.subr.mxu0 0.0
    %740 = vmatpush1.msra.mxu0 0.0
    %741 = vmatprep.subr.mxu0 0.0
    %742 = vmatpush1.msra.mxu0 0.0
    %743 = vmatprep.subr.mxu0 0.0
    %744 = vmatpush1.msra.mxu0 0.0
    %745 = vmatprep.subr.mxu0 0.0
    %746 = vmatpush1.msra.mxu0 0.0
    %747 = vmatprep.subr.mxu0 0.0
    %748 = vmatpush1.msra.mxu0 0.0
    %749 = vmatprep.subr.mxu0 0.0
    %750 = vmatpush1.msra.mxu0 0.0
    %751 = vmatprep.subr.mxu0 0.0
    %752 = vmatpush1.msra.mxu0 0.0
    %753 = vmatprep.subr.mxu0 0.0
    %754 = vmatpush1.msra.mxu0 0.0
    %755 = vmatprep.subr.mxu0 0.0
    %756 = vmatpush1.msra.mxu0 0.0
    %757 = vmatprep.subr.mxu0 0.0
    %758 = vmatpush1.msra.mxu0 0.0
    %759 = vmatprep.subr.mxu0 0.0
    %760 = vmatpush1.msra.mxu0 0.0
    %761 = vmatprep.subr.mxu0 0.0
    %762 = vmatpush1.msra.mxu0 0.0
    %763 = vmatprep.subr.mxu0 0.0
    %764 = vmatpush1.msra.mxu0 0.0
    %765 = vmatprep.subr.mxu0 0.0
    %766 = vmatpush1.msra.mxu0 0.0
    %767 = vmatprep.subr.mxu0 0.0
    %768 = vmatpush1.msra.mxu0 0.0
    %769 = vmatprep.subr.mxu0 0.0
    %770 = vmatpush1.msra.mxu0 0.0
    %771 = vmatprep.subr.mxu0 0.0
    %772 = vmatpush1.msra.mxu0 0.0
    %773 = vmatprep.subr.mxu0 0.0
    %774 = vmatpush1.msra.mxu0 0.0
    %775 = vmatprep.subr.mxu0 0.0
    %776 = vmatpush1.msra.mxu0 0.0
    %777 = vmatprep.subr.mxu0 0.0
    %778 = vmatpush1.msra.mxu0 0.0
    %779 = vmatprep.subr.mxu0 0.0
    %780 = vmatpush1.msra.mxu0 0.0
    %781 = vmatprep.subr.mxu0 0.0
    %782 = vmatpush1.msra.mxu0 0.0
    %783 = vmatprep.subr.mxu0 0.0
    %784 = vmatpush1.msra.mxu0 0.0
    %785 = vmatprep.subr.mxu0 0.0
    %786 = vmatpush1.msra.mxu0 0.0
    %787 = vmatprep.mubr.f32.mxu0 0.0
    %788 = vmatmul.mubr.f32.gmra.mrb[0].mxu0 %v713
    %v789 = vpop.f32.mrb[0].mxu0
    %v790 = vadd.f32 %v677, %v789
    %v791 = vpop.f32.mrb[0].mxu0
    %v792 = vadd.f32 %v681, %v791
    %793 = vdwg.mxu0
    %794 = vmatprep.subr.mxu0 %v721
    %795 = vmatpush1.msra.mxu0 %v719
    %796 = vmatprep.subr.mxu0 0.0
    %797 = vmatpush1.msra.mxu0 0.0
    %798 = vmatprep.subr.mxu0 0.0
    %799 = vmatpush1.msra.mxu0 0.0
    %800 = vmatprep.subr.mxu0 0.0
    %801 = vmatpush1.msra.mxu0 0.0
    %802 = vmatprep.subr.mxu0 0.0
    %803 = vmatpush1.msra.mxu0 0.0
    %804 = vmatprep.subr.mxu0 0.0
    %805 = vmatpush1.msra.mxu0 0.0
    %806 = vmatprep.subr.mxu0 0.0
    %807 = vmatpush1.msra.mxu0 0.0
    %808 = vmatprep.subr.mxu0 0.0
    %809 = vmatpush1.msra.mxu0 0.0
    %810 = vmatprep.subr.mxu0 0.0
    %811 = vmatpush1.msra.mxu0 0.0
    %812 = vmatprep.subr.mxu0 0.0
    %813 = vmatpush1.msra.mxu0 0.0
    %814 = vmatprep.subr.mxu0 0.0
    %815 = vmatpush1.msra.mxu0 0.0
    %816 = vmatprep.subr.mxu0 0.0
    %817 = vmatpush1.msra.mxu0 0.0
    %818 = vmatprep.subr.mxu0 0.0
    %819 = vmatpush1.msra.mxu0 0.0
    %820 = vmatprep.subr.mxu0 0.0
    %821 = vmatpush1.msra.mxu0 0.0
    %822 = vmatprep.subr.mxu0 0.0
    %823 = vmatpush1.msra.mxu0 0.0
    %824 = vmatprep.subr.mxu0 0.0
    %825 = vmatpush1.msra.mxu0 0.0
    %826 = vmatprep.subr.mxu0 0.0
    %827 = vmatpush1.msra.mxu0 0.0
    %828 = vmatprep.subr.mxu0 0.0
    %829 = vmatpush1.msra.mxu0 0.0
    %830 = vmatprep.subr.mxu0 0.0
    %831 = vmatpush1.msra.mxu0 0.0
    %832 = vmatprep.subr.mxu0 0.0
    %833 = vmatpush1.msra.mxu0 0.0
    %834 = vmatprep.subr.mxu0 0.0
    %835 = vmatpush1.msra.mxu0 0.0
    %836 = vmatprep.subr.mxu0 0.0
    %837 = vmatpush1.msra.mxu0 0.0
    %838 = vmatprep.subr.mxu0 0.0
    %839 = vmatpush1.msra.mxu0 0.0
    %840 = vmatprep.subr.mxu0 0.0
    %841 = vmatpush1.msra.mxu0 0.0
    %842 = vmatprep.subr.mxu0 0.0
    %843 = vmatpush1.msra.mxu0 0.0
    %844 = vmatprep.subr.mxu0 0.0
    %845 = vmatpush1.msra.mxu0 0.0
    %846 = vmatprep.subr.mxu0 0.0
    %847 = vmatpush1.msra.mxu0 0.0
    %848 = vmatprep.subr.mxu0 0.0
    %849 = vmatpush1.msra.mxu0 0.0
    %850 = vmatprep.subr.mxu0 0.0
    %851 = vmatpush1.msra.mxu0 0.0
    %852 = vmatprep.subr.mxu0 0.0
    %853 = vmatpush1.msra.mxu0 0.0
    %854 = vmatprep.subr.mxu0 0.0
    %855 = vmatpush1.msra.mxu0 0.0
    %856 = vmatprep.subr.mxu0 0.0
    %857 = vmatpush1.msra.mxu0 0.0
    %858 = vmatprep.mubr.f32.mxu0 0.0
    %859 = vmatmul.mubr.f32.gmra.mrb[0].mxu0 %v713
    %v860 = vpop.f32.mrb[0].mxu0
    %v861 = vadd.f32 %v685, %v860
    %v862 = vpop.f32.mrb[0].mxu0
    %v863 = vadd.f32 %v689, %v862
    %864 = vdwg.mxu0
    %v865 = vxor.u32 %v861, 2147483648
    %v866 = vmul.f32 %v865, 1.442695
    %v867 = vpow.pop %v866
    %v868 = vadd.f32 %v867, 1.0
    %v869 = vrcp.pop %v868
    %v870 = vmul.f32 1.0, %v869
    %v871 = vmul.f32 %v790, %v870
    %v872 = vxor.u32 %v863, 2147483648
    %v873 = vmul.f32 %v872, 1.442695
    %v874 = vpow.pop %v873
    %v875 = vadd.f32 %v874, 1.0
    %v876 = vrcp.pop %v875
    %v877 = vmul.f32 1.0, %v876
    %v878 = vmul.f32 %v792, %v877
    %v879 = vmax.f32 %v871, 0.0
    %v880 = vadd.f32 %v549, %v879
    %s881 = scalar_lea.vmem %s3, 256
    %v882 = vld [vmem:[%s881] sm:$0xff]
    %v883 = vld [vmem:[%s881 + $0x8] sm:$0xff]
    %v884 = vld [vmem:[%s881 + $0x10] sm:$0xff]
    %v885 = vld [vmem:[%s881 + $0x18] sm:$0xff]
    %v886 = vld [vmem:[%s881 + $0x20] sm:$0xff]
    %v887 = vld [vmem:[%s881 + $0x28] sm:$0xff]
    %v888 = vld [vmem:[%s881 + $0x30] sm:$0xff]
    %v889 = vld [vmem:[%s881 + $0x38] sm:$0xff]
    %v890 = vld [vmem:[%s881 + $0x40] sm:$0xff]
    %v891 = vld [vmem:[%s881 + $0x48] sm:$0xff]
    %v892 = vld [vmem:[%s881 + $0x50] sm:$0xff]
    %v893 = vld [vmem:[%s881 + $0x58] sm:$0xff]
    %v894 = vld [vmem:[%s881 + $0x60] sm:$0xff]
    %v895 = vld [vmem:[%s881 + $0x68] sm:$0xff]
    %v896 = vld [vmem:[%s881 + $0x70] sm:$0xff]
    %v897 = vld [vmem:[%s881 + $0x78] sm:$0xff]
    %s898 = scalar_lea.vmem %s4, 2
    %v899 = vld [vmem:[%s898] sm:$0x1]
    %v901 = vlaneseq
    %v902 = vshrl.u32 %v901, 7
    %v903 = vsub.s32 0, %v902
    %v904 = vrot.slane %v899, %v903
    %906 = vmatprep.subr.mxu0 0.0
    %907 = vmatpush1.msra.mxu0 %v882
    %908 = vmatprep.subr.mxu0 0.0
    %909 = vmatpush1.msra.mxu0 %v883
    %910 = vmatprep.subr.mxu0 0.0
    %911 = vmatpush1.msra.mxu0 %v884
    %912 = vmatprep.subr.mxu0 0.0
    %913 = vmatpush1.msra.mxu0 %v885
    %914 = vmatprep.subr.mxu0 0.0
    %915 = vmatpush1.msra.mxu0 %v886
    %916 = vmatprep.subr.mxu0 0.0
    %917 = vmatpush1.msra.mxu0 %v887
    %918 = vmatprep.subr.mxu0 0.0
    %919 = vmatpush1.msra.mxu0 %v888
    %920 = vmatprep.subr.mxu0 0.0
    %921 = vmatpush1.msra.mxu0 %v889
    %922 = vmatprep.subr.mxu0 0.0
    %923 = vmatpush1.msra.mxu0 %v890
    %924 = vmatprep.subr.mxu0 0.0
    %925 = vmatpush1.msra.mxu0 %v891
    %926 = vmatprep.subr.mxu0 0.0
    %927 = vmatpush1.msra.mxu0 %v892
    %928 = vmatprep.subr.mxu0 0.0
    %929 = vmatpush1.msra.mxu0 %v893
    %930 = vmatprep.subr.mxu0 0.0
    %931 = vmatpush1.msra.mxu0 %v894
    %932 = vmatprep.subr.mxu0 0.0
    %933 = vmatpush1.msra.mxu0 %v895
    %934 = vmatprep.subr.mxu0 0.0
    %935 = vmatpush1.msra.mxu0 %v896
    %936 = vmatprep.subr.mxu0 0.0
    %937 = vmatpush1.msra.mxu0 %v897
    %938 = vmatprep.subr.mxu0 0.0
    %939 = vmatpush1.msra.mxu0 0.0
    %940 = vmatprep.subr.mxu0 0.0
    %941 = vmatpush1.msra.mxu0 0.0
    %942 = vmatprep.subr.mxu0 0.0
    %943 = vmatpush1.msra.mxu0 0.0
    %944 = vmatprep.subr.mxu0 0.0
    %945 = vmatpush1.msra.mxu0 0.0
    %946 = vmatprep.subr.mxu0 0.0
    %947 = vmatpush1.msra.mxu0 0.0
    %948 = vmatprep.subr.mxu0 0.0
    %949 = vmatpush1.msra.mxu0 0.0
    %950 = vmatprep.subr.mxu0 0.0
    %951 = vmatpush1.msra.mxu0 0.0
    %952 = vmatprep.subr.mxu0 0.0
    %953 = vmatpush1.msra.mxu0 0.0
    %954 = vmatprep.subr.mxu0 0.0
    %955 = vmatpush1.msra.mxu0 0.0
    %956 = vmatprep.subr.mxu0 0.0
    %957 = vmatpush1.msra.mxu0 0.0
    %958 = vmatprep.subr.mxu0 0.0
    %959 = vmatpush1.msra.mxu0 0.0
    %960 = vmatprep.subr.mxu0 0.0
    %961 = vmatpush1.msra.mxu0 0.0
    %962 = vmatprep.subr.mxu0 0.0
    %963 = vmatpush1.msra.mxu0 0.0
    %964 = vmatprep.subr.mxu0 0.0
    %965 = vmatpush1.msra.mxu0 0.0
    %966 = vmatprep.subr.mxu0 0.0
    %967 = vmatpush1.msra.mxu0 0.0
    %968 = vmatprep.subr.mxu0 0.0
    %969 = vmatpush1.msra.mxu0 0.0
    %970 = vmatprep.mubr.f32.mxu0 0.0
    %971 = vmatmul.mubr.f32.gmra.mrb[0].mxu0 %v878
    %v972 = vpop.f32.mrb[0].mxu0
    %v973 = vadd.f32 %v904, %v972
    %v974 = vpop.f32.mrb[0].mxu0
    %975 = vdwg.mxu0
    %v976 = vmul.f32 %v973, %v667
    %v977 = vsel %vm315, %v976, -inf
    %978 = vmax.xlane.f32.xlu0 %v977
    %v979 = vpop.xlane.xlu0 %978
    %v980 = vsub.f32 %v976, %v979
    %v981 = vmul.f32 %v980, 1.442695
    %v982 = vpow.pop %v981
    %v983 = vsel %vm315, %v982, 0.0
    %984 = vadd.xlane.f32.xlu0 %v983
    %v985 = vpop.xlane.xlu0 %984
    %v986 = vrcp.pop %v985
    %v987 = vmul.f32 %v982, %v986
    %v988 = vsub.f32 0.0, %v987
    %v989 = vadd.f32 %v987, 1e-15
    %v990 = vlog2.pop %v989
    %v991 = vmul.f32 %v990, 0.6931472
    %v992 = vmul.f32 %v988, %v991
    %v993 = vsel %vm315, %v992, 0.0
    %994 = vadd.xlane.f32.xlu0 %v993
    %v995 = vpop.xlane.xlu0 %994
    %v996 = vadd.f32 %v665, %v995
    %v997 = vmul.f32 %v30, %v987
    %s998 = scalar_lea.vmem %s1, 24
    %v999 = vld [vmem:[%s998] sm:$0xff]
    %s1000 = scalar_lea.vmem %s2, 12
    %v1001 = vld [vmem:[%s1000] sm:$0xf]
    %v1003 = vlaneseq
    %v1004 = vshrl.u32 %v1003, 7
    %v1005 = vsub.s32 0, %v1004
    %v1006 = vrot.slane %v1001, %v1005
    %v1007 = vlaneseq
    %v1008 = vshrl.u32 %v1007, 7
    %v1009 = vsub.s32 2, %v1008
    %v1010 = vrot.slane %v1001, %v1009
    %v1014 = vcombine.high %v999, %v999
    %v1016 = vunpack.c.l.s4 1983009808
    %v1017 = vunpack.c.0.s8 %v1016
    %v1018 = vlaneseq
    %v1019 = vshrl.u32 %v1018, 7
    %v1020 = vsub.s32 %v1017, %v1019
    %v1021 = vrot.slane %v999, %v1020
    %v1023 = vunpack.c.l.s4 1983009808
    %v1024 = vunpack.c.0.s8 %v1023
    %v1025 = vlaneseq
    %v1026 = vshrl.u32 %v1025, 7
    %v1027 = vsub.s32 %v1024, %v1026
    %v1028 = vrot.slane %v1014, %v1027
    %v1029 = vcombine.high %v1021, %v1021
    %v1030 = vcombine.high %v1028, %v1028
    %v1032 = vsel %vm62, %v997, 0
    %v1034 = vsel %vm66, %v1021, 0
    %v1036 = vsel %vm66, %v1029, 0
    %v1038 = vsel %vm66, %v1028, 0
    %v1040 = vsel %vm66, %v1030, 0
    %1042 = vmatprep.subr.mxu0 %v1036
    %1043 = vmatpush1.msra.mxu0 %v1034
    %1044 = vmatprep.subr.mxu0 0.0
    %1045 = vmatpush1.msra.mxu0 0.0
    %1046 = vmatprep.subr.mxu0 0.0
    %1047 = vmatpush1.msra.mxu0 0.0
    %1048 = vmatprep.subr.mxu0 0.0
    %1049 = vmatpush1.msra.mxu0 0.0
    %1050 = vmatprep.subr.mxu0 0.0
    %1051 = vmatpush1.msra.mxu0 0.0
    %1052 = vmatprep.subr.mxu0 0.0
    %1053 = vmatpush1.msra.mxu0 0.0
    %1054 = vmatprep.subr.mxu0 0.0
    %1055 = vmatpush1.msra.mxu0 0.0
    %1056 = vmatprep.subr.mxu0 0.0
    %1057 = vmatpush1.msra.mxu0 0.0
    %1058 = vmatprep.subr.mxu0 0.0
    %1059 = vmatpush1.msra.mxu0 0.0
    %1060 = vmatprep.subr.mxu0 0.0
    %1061 = vmatpush1.msra.mxu0 0.0
    %1062 = vmatprep.subr.mxu0 0.0
    %1063 = vmatpush1.msra.mxu0 0.0
    %1064 = vmatprep.subr.mxu0 0.0
    %1065 = vmatpush1.msra.mxu0 0.0
    %1066 = vmatprep.subr.mxu0 0.0
    %1067 = vmatpush1.msra.mxu0 0.0
    %1068 = vmatprep.subr.mxu0 0.0
    %1069 = vmatpush1.msra.mxu0 0.0
    %1070 = vmatprep.subr.mxu0 0.0
    %1071 = vmatpush1.msra.mxu0 0.0
    %1072 = vmatprep.subr.mxu0 0.0
    %1073 = vmatpush1.msra.mxu0 0.0
    %1074 = vmatprep.subr.mxu0 0.0
    %1075 = vmatpush1.msra.mxu0 0.0
    %1076 = vmatprep.subr.mxu0 0.0
    %1077 = vmatpush1.msra.mxu0 0.0
    %1078 = vmatprep.subr.mxu0 0.0
    %1079 = vmatpush1.msra.mxu0 0.0
    %1080 = vmatprep.subr.mxu0 0.0
    %1081 = vmatpush1.msra.mxu0 0.0
    %1082 = vmatprep.subr.mxu0 0.0
    %1083 = vmatpush1.msra.mxu0 0.0
    %1084 = vmatprep.subr.mxu0 0.0
    %1085 = vmatpush1.msra.mxu0 0.0
    %1086 = vmatprep.subr.mxu0 0.0
    %1087 = vmatpush1.msra.mxu0 0.0
    %1088 = vmatprep.subr.mxu0 0.0
    %1089 = vmatpush1.msra.mxu0 0.0
    %1090 = vmatprep.subr.mxu0 0.0
    %1091 = vmatpush1.msra.mxu0 0.0
    %1092 = vmatprep.subr.mxu0 0.0
    %1093 = vmatpush1.msra.mxu0 0.0
    %1094 = vmatprep.subr.mxu0 0.0
    %1095 = vmatpush1.msra.mxu0 0.0
    %1096 = vmatprep.subr.mxu0 0.0
    %1097 = vmatpush1.msra.mxu0 0.0
    %1098 = vmatprep.subr.mxu0 0.0
    %1099 = vmatpush1.msra.mxu0 0.0
    %1100 = vmatprep.subr.mxu0 0.0
    %1101 = vmatpush1.msra.mxu0 0.0
    %1102 = vmatprep.subr.mxu0 0.0
    %1103 = vmatpush1.msra.mxu0 0.0
    %1104 = vmatprep.subr.mxu0 0.0
    %1105 = vmatpush1.msra.mxu0 0.0
    %1106 = vmatprep.mubr.f32.mxu0 0.0
    %1107 = vmatmul.mubr.f32.gmra.mrb[0].mxu0 %v1032
    %v1108 = vpop.f32.mrb[0].mxu0
    %v1109 = vadd.f32 %v1006, %v1108
    %v1110 = vpop.f32.mrb[0].mxu0
    %1111 = vdwg.mxu0
    %1112 = vmatprep.subr.mxu0 %v1040
    %1113 = vmatpush1.msra.mxu0 %v1038
    %1114 = vmatprep.subr.mxu0 0.0
    %1115 = vmatpush1.msra.mxu0 0.0
    %1116 = vmatprep.subr.mxu0 0.0
    %1117 = vmatpush1.msra.mxu0 0.0
    %1118 = vmatprep.subr.mxu0 0.0
    %1119 = vmatpush1.msra.mxu0 0.0
    %1120 = vmatprep.subr.mxu0 0.0
    %1121 = vmatpush1.msra.mxu0 0.0
    %1122 = vmatprep.subr.mxu0 0.0
    %1123 = vmatpush1.msra.mxu0 0.0
    %1124 = vmatprep.subr.mxu0 0.0
    %1125 = vmatpush1.msra.mxu0 0.0
    %1126 = vmatprep.subr.mxu0 0.0
    %1127 = vmatpush1.msra.mxu0 0.0
    %1128 = vmatprep.subr.mxu0 0.0
    %1129 = vmatpush1.msra.mxu0 0.0
    %1130 = vmatprep.subr.mxu0 0.0
    %1131 = vmatpush1.msra.mxu0 0.0
    %1132 = vmatprep.subr.mxu0 0.0
    %1133 = vmatpush1.msra.mxu0 0.0
    %1134 = vmatprep.subr.mxu0 0.0
    %1135 = vmatpush1.msra.mxu0 0.0
    %1136 = vmatprep.subr.mxu0 0.0
    %1137 = vmatpush1.msra.mxu0 0.0
    %1138 = vmatprep.subr.mxu0 0.0
    %1139 = vmatpush1.msra.mxu0 0.0
    %1140 = vmatprep.subr.mxu0 0.0
    %1141 = vmatpush1.msra.mxu0 0.0
    %1142 = vmatprep.subr.mxu0 0.0
    %1143 = vmatpush1.msra.mxu0 0.0
    %1144 = vmatprep.subr.mxu0 0.0
    %1145 = vmatpush1.msra.mxu0 0.0
    %1146 = vmatprep.subr.mxu0 0.0
    %1147 = vmatpush1.msra.mxu0 0.0
    %1148 = vmatprep.subr.mxu0 0.0
    %1149 = vmatpush1.msra.mxu0 0.0
    %1150 = vmatprep.subr.mxu0 0.0
    %1151 = vmatpush1.msra.mxu0 0.0
    %1152 = vmatprep.subr.mxu0 0.0
    %1153 = vmatpush1.msra.mxu0 0.0
    %1154 = vmatprep.subr.mxu0 0.0
    %1155 = vmatpush1.msra.mxu0 0.0
    %1156 = vmatprep.subr.mxu0 0.0
    %1157 = vmatpush1.msra.mxu0 0.0
    %1158 = vmatprep.subr.mxu0 0.0
    %1159 = vmatpush1.msra.mxu0 0.0
    %1160 = vmatprep.subr.mxu0 0.0
    %1161 = vmatpush1.msra.mxu0 0.0
    %1162 = vmatprep.subr.mxu0 0.0
    %1163 = vmatpush1.msra.mxu0 0.0
    %1164 = vmatprep.subr.mxu0 0.0
    %1165 = vmatpush1.msra.mxu0 0.0
    %1166 = vmatprep.subr.mxu0 0.0
    %1167 = vmatpush1.msra.mxu0 0.0
    %1168 = vmatprep.subr.mxu0 0.0
    %1169 = vmatpush1.msra.mxu0 0.0
    %1170 = vmatprep.subr.mxu0 0.0
    %1171 = vmatpush1.msra.mxu0 0.0
    %1172 = vmatprep.subr.mxu0 0.0
    %1173 = vmatpush1.msra.mxu0 0.0
    %1174 = vmatprep.subr.mxu0 0.0
    %1175 = vmatpush1.msra.mxu0 0.0
    %1176 = vmatprep.mubr.f32.mxu0 0.0
    %1177 = vmatmul.mubr.f32.gmra.mrb[0].mxu0 %v1032
    %v1178 = vpop.f32.mrb[0].mxu0
    %v1179 = vadd.f32 %v1010, %v1178
    %v1180 = vpop.f32.mrb[0].mxu0
    %1181 = vdwg.mxu0
    %v1182 = vxor.u32 %v1179, 2147483648
    %v1183 = vmul.f32 %v1182, 1.442695
    %v1184 = vpow.pop %v1183
    %v1185 = vadd.f32 %v1184, 1.0
    %v1186 = vrcp.pop %v1185
    %v1187 = vmul.f32 1.0, %v1186
    %v1188 = vmul.f32 %v1109, %v1187
    %v1189 = vmax.f32 %v1188, 0.0
    %v1190 = vadd.f32 %v880, %v1189
    %v1191 = vld [vmem:[%s5] sm:$0xff]
    %v1192 = vld [vmem:[%s5 + $0x8] sm:$0xff]
    %v1193 = vld [vmem:[%s5 + $0x10] sm:$0xff]
    %v1194 = vld [vmem:[%s5 + $0x18] sm:$0xff]
    %v1195 = vld [vmem:[%s5 + $0x20] sm:$0xff]
    %v1196 = vld [vmem:[%s5 + $0x28] sm:$0xff]
    %v1197 = vld [vmem:[%s5 + $0x30] sm:$0xff]
    %v1198 = vld [vmem:[%s5 + $0x38] sm:$0xff]
    %v1199 = vld [vmem:[%s5 + $0x40] sm:$0xff]
    %v1200 = vld [vmem:[%s5 + $0x48] sm:$0xff]
    %v1201 = vld [vmem:[%s5 + $0x50] sm:$0xff]
    %v1202 = vld [vmem:[%s5 + $0x58] sm:$0xff]
    %v1203 = vld [vmem:[%s5 + $0x60] sm:$0xff]
    %v1204 = vld [vmem:[%s5 + $0x68] sm:$0xff]
    %v1205 = vld [vmem:[%s5 + $0x70] sm:$0xff]
    %v1206 = vld [vmem:[%s5 + $0x78] sm:$0xff]
    %v1207 = vld [vmem:[%s6] sm:$0x1]
    %v1209 = vlaneseq
    %v1210 = vshrl.u32 %v1209, 7
    %v1211 = vsub.s32 0, %v1210
    %v1212 = vrot.slane %v1207, %v1211
    %1214 = vmatprep.subr.mxu0 0.0
    %1215 = vmatpush1.msra.mxu0 %v1191
    %1216 = vmatprep.subr.mxu0 0.0
    %1217 = vmatpush1.msra.mxu0 %v1192
    %1218 = vmatprep.subr.mxu0 0.0
    %1219 = vmatpush1.msra.mxu0 %v1193
    %1220 = vmatprep.subr.mxu0 0.0
    %1221 = vmatpush1.msra.mxu0 %v1194
    %1222 = vmatprep.subr.mxu0 0.0
    %1223 = vmatpush1.msra.mxu0 %v1195
    %1224 = vmatprep.subr.mxu0 0.0
    %1225 = vmatpush1.msra.mxu0 %v1196
    %1226 = vmatprep.subr.mxu0 0.0
    %1227 = vmatpush1.msra.mxu0 %v1197
    %1228 = vmatprep.subr.mxu0 0.0
    %1229 = vmatpush1.msra.mxu0 %v1198
    %1230 = vmatprep.subr.mxu0 0.0
    %1231 = vmatpush1.msra.mxu0 %v1199
    %1232 = vmatprep.subr.mxu0 0.0
    %1233 = vmatpush1.msra.mxu0 %v1200
    %1234 = vmatprep.subr.mxu0 0.0
    %1235 = vmatpush1.msra.mxu0 %v1201
    %1236 = vmatprep.subr.mxu0 0.0
    %1237 = vmatpush1.msra.mxu0 %v1202
    %1238 = vmatprep.subr.mxu0 0.0
    %1239 = vmatpush1.msra.mxu0 %v1203
    %1240 = vmatprep.subr.mxu0 0.0
    %1241 = vmatpush1.msra.mxu0 %v1204
    %1242 = vmatprep.subr.mxu0 0.0
    %1243 = vmatpush1.msra.mxu0 %v1205
    %1244 = vmatprep.subr.mxu0 0.0
    %1245 = vmatpush1.msra.mxu0 %v1206
    %1246 = vmatprep.subr.mxu0 0.0
    %1247 = vmatpush1.msra.mxu0 0.0
    %1248 = vmatprep.subr.mxu0 0.0
    %1249 = vmatpush1.msra.mxu0 0.0
    %1250 = vmatprep.subr.mxu0 0.0
    %1251 = vmatpush1.msra.mxu0 0.0
    %1252 = vmatprep.subr.mxu0 0.0
    %1253 = vmatpush1.msra.mxu0 0.0
    %1254 = vmatprep.subr.mxu0 0.0
    %1255 = vmatpush1.msra.mxu0 0.0
    %1256 = vmatprep.subr.mxu0 0.0
    %1257 = vmatpush1.msra.mxu0 0.0
    %1258 = vmatprep.subr.mxu0 0.0
    %1259 = vmatpush1.msra.mxu0 0.0
    %1260 = vmatprep.subr.mxu0 0.0
    %1261 = vmatpush1.msra.mxu0 0.0
    %1262 = vmatprep.subr.mxu0 0.0
    %1263 = vmatpush1.msra.mxu0 0.0
    %1264 = vmatprep.subr.mxu0 0.0
    %1265 = vmatpush1.msra.mxu0 0.0
    %1266 = vmatprep.subr.mxu0 0.0
    %1267 = vmatpush1.msra.mxu0 0.0
    %1268 = vmatprep.subr.mxu0 0.0
    %1269 = vmatpush1.msra.mxu0 0.0
    %1270 = vmatprep.subr.mxu0 0.0
    %1271 = vmatpush1.msra.mxu0 0.0
    %1272 = vmatprep.subr.mxu0 0.0
    %1273 = vmatpush1.msra.mxu0 0.0
    %1274 = vmatprep.subr.mxu0 0.0
    %1275 = vmatpush1.msra.mxu0 0.0
    %1276 = vmatprep.subr.mxu0 0.0
    %1277 = vmatpush1.msra.mxu0 0.0
    %1278 = vmatprep.mubr.f32.mxu0 0.0
    %1279 = vmatmul.mubr.f32.gmra.mrb[0].mxu0 %v1190
    %v1280 = vpop.f32.mrb[0].mxu0
    %v1281 = vadd.f32 %v1212, %v1280
    %v1282 = vpop.f32.mrb[0].mxu0
    %1283 = vdwg.mxu0
    %1284 = vst [vmem:[%s7] sm:$0xf] %v1281
    %vm1285 = vcmask 3072
    %1286 = vst.msk [vmem:[%s8] sm:$0xf] %vm1285, %v996
    %1287 = vst [vmem:[#allocation2] sm:$0xf] %v1190
    // Predicated region
    $region30: #{_lambda_.5} parent=1 // pred_check
      _
    $region31: #{_lambda_.5} parent=1 // pred_check_branch
      %1289 = sbr.rel (0) target = $region33
    $region32: #{_lambda_.5} parent=1 // pred_region
      _
    $region33: #{_lambda_.5} parent=1 // pred_fallthru
      _
    // Predicated region
    $region34: #{_lambda_.5} parent=1 // pred_check
      _
    $region35: #{_lambda_.5} parent=1 // pred_check_branch
      %1291 = sbr.rel (0) target = $region37
    $region36: #{_lambda_.5} parent=1 // pred_region
      _
    $region37: #{_lambda_.5} parent=1 // pred_fallthru
      _
    // Predicated region
    $region38: #{_lambda_.5} parent=1 // pred_check
      _
    $region39: #{_lambda_.5} parent=1 // pred_check_branch
      %1293 = sbr.rel (0) target = $region41
    $region40: #{_lambda_.5} parent=1 // pred_region
      %s1295 = ssub.s32 64, 64
      %1296 = vsyncadd [#allocation3], %s1295
      %s1298 = sshll.u32 [#allocation2], 4
      %s1299 = int_to_ptr.vmem [resolvable:$true] %s1298
      %1301 = dma.vmem_to_hbm [thread:$0]  %s1299, 64, %s9, [#allocation3]
    $region41: #{_lambda_.5} parent=1 // pred_fallthru
      _
    // Predicated region
    $region42: #{_lambda_.5} parent=1 // pred_check
      _
    $region43: #{_lambda_.5} parent=1 // pred_check_branch
      %1303 = sbr.rel (0) target = $region45
    $region44: #{_lambda_.5} parent=1 // pred_region
      _
    $region45: #{_lambda_.5} parent=1 // pred_fallthru
      _
    // Predicated region
    $region46: #{_lambda_.5} parent=1 // pred_check
      _
    $region47: #{_lambda_.5} parent=1 // pred_check_branch
      %1305 = sbr.rel (0) target = $region49
    $region48: #{_lambda_.5} parent=1 // pred_region
      _
    $region49: #{_lambda_.5} parent=1 // pred_fallthru
      _
    // Predicated region
    $region50: #{_lambda_.5} parent=1 // pred_check
      _
    $region51: #{_lambda_.5} parent=1 // pred_check_branch
      %1307 = sbr.rel (0) target = $region53
    $region52: #{_lambda_.5} parent=1 // pred_region
      %1308 = dma.done [#allocation3], 64
    $region53: #{_lambda_.5} parent=1 // pred_fallthru
      _
    %1309 = vsyncpa [#allocation3], 1

</llo_original>
